<compile_context>
chip_gen: v7x
topology: tpu7x:2x2x1
jax: 0.10.0
libtpu: 0.0.40
codegen_flags: <defaults>
</compile_context>

<pallas_src>
import math
import numpy as np
import jax
import jax.numpy as jnp
from jax import lax
from jax.experimental import pallas as pl
from jax.experimental.pallas import tpu as pltpu

# Conv-transpose hyper-parameters from the module.
K = 31
STRIDE = 3
PADDING = 19
DILATION = 2
GROUPS = 2
NEG_SLOPE = -0.010884604
SCALE = 0.36386494


def _interp_matrix(in_size, out_size, scale_factor):
    """Row-interpolation matrix matching torch bilinear, align_corners=False,
    with the user-supplied scale_factor (PyTorch uses 1/scale_factor)."""
    scale = 1.0 / scale_factor
    j = np.arange(out_size, dtype=np.float64)
    src = scale * (j + 0.5) - 0.5
    src = np.maximum(src, 0.0)
    i0 = np.floor(src).astype(np.int64)
    i0 = np.minimum(i0, in_size - 1)
    i1 = np.minimum(i0 + 1, in_size - 1)
    lam = src - i0
    R = np.zeros((out_size, in_size), dtype=np.float64)
    rows = np.arange(out_size)
    R[rows, i0] += 1.0 - lam
    R[rows, i1] += lam
    return R.astype(np.float32)


def _width_scatter(w_in, ow):
    """Sw[iw, kw, ow] = 1 iff ow == STRIDE*iw - PADDING + DILATION*kw."""
    Sw = np.zeros((w_in, K, ow), np.float32)
    for iw in range(w_in):
        for kw in range(K):
            o = STRIDE * iw - PADDING + DILATION * kw
            if 0 <= o < ow:
                Sw[iw, kw, o] = 1.0
    return Sw


def _height_scatter_big(h_in, oh, n, nh):
    """A_big[n*OH+oh, kh*(N*H) + n*H + ih] = 1 iff oh == STRIDE*ih - PADDING + DILATION*kh
    (block-diagonal over the batch, kh outermost on the contraction axis)."""
    A = np.zeros((n * oh, K * nh), np.float32)
    for kh in range(K):
        for ih in range(h_in):
            o = STRIDE * ih - PADDING + DILATION * kh
            if 0 <= o < oh:
                for b in range(n):
                    A[b * oh + o, kh * nh + b * h_in + ih] = 1.0
    return A


def _make_kernel(nh, padw):
    def kernel(x_ref, w1_ref, a_ref, rh_ref, rwt_ref, o_ref, ubig_ref, u_ref):
        # x_ref   : (N*H, Cin_g*W)           bf16  folded-batch input rows (this group)
        # w1_ref  : (Cin_g*W, K*PADW)        bf16  width-expansion weights, kh in lanes
        # a_ref   : (N*OH, K*N*H)            bf16  0/1 height-scatter (block-diag over N)
        # rh_ref  : (N*OH2, N*OH)            bf16  height-resize (block-diag over N)
        # rwt_ref : (PADW, Cout_g*OW2)       bf16  block-diag width-resize (padded rows = 0)
        # o_ref   : (N*OH2, Cout_g*OW2)      f32   output slab
        # ubig_ref: (N*H, K*PADW)            bf16  scratch, stage-1 result (kh on lanes)
        # u_ref   : (K*N*H, PADW)            bf16  scratch, kh re-stacked onto sublanes

        # Stage 1: width expansion + channel contraction — one wide bf16 MXU matmul.
        ubig_ref[...] = jnp.dot(
            x_ref[...], w1_ref[...],
            preferred_element_type=jnp.float32).astype(jnp.bfloat16)

        # Move each kh block from the lane dim to the sublane dim.
        # Static, tile-aligned (32,256) bf16 copies — cheap ld/st filler.
        for kh in range(K):
            u_ref[pl.ds(kh * nh, nh), :] = ubig_ref[:, pl.ds(kh * padw, padw)]

        # Stage 2: height scatter — single deep matmul with an exact 0/1 matrix.
        m1 = jnp.dot(a_ref[...], u_ref[...], preferred_element_type=jnp.float32)

        # m2/m3/m4 : where(m1 > 0, m1, m1 * -0.010884604)   (f32)
        m4 = jnp.where(m1 > 0, m1, m1 * jnp.float32(NEG_SLOPE))

        # Bilinear resize: height first (rows 136 -> 48), then width (lanes 256 -> 48).
        tmp = jnp.dot(rh_ref[...], m4.astype(jnp.bfloat16),
                      preferred_element_type=jnp.float32)
        o_ref[...] = jnp.dot(tmp.astype(jnp.bfloat16), rwt_ref[...],
                             preferred_element_type=jnp.float32)

    return kernel


def model_forward(x, w_t):
    """x: (N, Cin, H, W) f32;  w_t: (Cin, Cout//groups, K, K) f32 (PyTorch layout)."""
    N, C_IN, H, W = x.shape
    C_IN_G = C_IN // GROUPS
    C_OUT_G = w_t.shape[1]
    C_OUT = GROUPS * C_OUT_G

    OH = (H - 1) * STRIDE - 2 * PADDING + DILATION * (K - 1) + 1
    OW = (W - 1) * STRIDE - 2 * PADDING + DILATION * (K - 1) + 1
    OH2 = int(math.floor(OH * SCALE))
    OW2 = int(math.floor(OW * SCALE))

    CIW = C_IN_G * W              # stage-1 contraction width
    CW = C_OUT_G * OW             # un-padded stage-1 output width per kh
    CW2 = C_OUT_G * OW2           # final output lane width
    NH = N * H                    # folded-batch row count
    N_OH = N * OH
    N_OH2 = N * OH2
    PADW = ((CW + 127) // 128) * 128   # per-kh lane block, vreg aligned (136 -> 256)

    # ---- constant / weight layout preprocessing (tiny, runs once per call) ----
    Sw = jnp.asarray(_width_scatter(W, OW))                      # (W, K, OW) 0/1
    A_big = jnp.asarray(_height_scatter_big(H, OH, N, NH),
                        dtype=jnp.bfloat16)                      # (N*OH, K*N*H) 0/1 exact
    Rh = _interp_matrix(OH, OH2, SCALE)                          # (OH2, OH)
    Rh_big = jnp.asarray(np.kron(np.eye(N, dtype=np.float32), Rh),
                         dtype=jnp.bfloat16)                     # (N*OH2, N*OH)
    Rw = _interp_matrix(OW, OW2, SCALE)                          # (OW2, OW)
    rwt = np.zeros((PADW, CW2), np.float32)                      # padded rows stay zero
    for co in range(C_OUT_G):
        rwt[co * OW:(co + 1) * OW, co * OW2:(co + 1) * OW2] = Rw.T
    rwt = jnp.asarray(rwt, dtype=jnp.bfloat16)

    # W1[g, ci*W+iw, kh*PADW + co*OW+ow] = sum_kw w_t[g*Cig+ci, co, kh, kw] * Sw[iw, kw, ow]
    wg = w_t.reshape(GROUPS, C_IN_G, C_OUT_G, K, K)
    W1 = jnp.einsum("gcohw,iwj->ghcioj", wg, Sw)                 # (g, kh, ci, iw, co, ow)
    W1 = W1.reshape(GROUPS, K, CIW, CW)
    W1 = jnp.pad(W1, ((0, 0), (0, 0), (0, 0), (0, PADW - CW)))   # pad lanes 136 -> 256
    W1 = jnp.transpose(W1, (0, 2, 1, 3)).reshape(GROUPS, CIW, K * PADW)
    W1 = W1.astype(jnp.bfloat16)

    # xg[g, n*H+ih, ci*W+iw] = x[n, g*Cig+ci, ih, iw]  (batch folded into rows)
    xg = x.reshape(N, GROUPS, C_IN_G, H, W).transpose(1, 0, 3, 2, 4)
    xg = xg.reshape(GROUPS, NH, CIW).astype(jnp.bfloat16)

    kernel = _make_kernel(NH, PADW)

    flops = 2 * GROUPS * (NH * CIW * K * PADW + N_OH * (K * NH) * PADW
                          + N_OH2 * N_OH * PADW + N_OH2 * PADW * CW2)
    bytes_accessed = (xg.size * 2 + W1.size * 2 + A_big.size * 2 + Rh_big.size * 2
                      + rwt.size * 2 + GROUPS * N_OH2 * CW2 * 4)

    grid_spec = pltpu.PrefetchScalarGridSpec(
        num_scalar_prefetch=0,
        grid=(GROUPS,),   # one step per group; "parallel" so v7x uses both TensorCores
        in_specs=[
            pl.BlockSpec((None, NH, CIW), lambda g: (g, 0, 0)),          # xg
            pl.BlockSpec((None, CIW, K * PADW), lambda g: (g, 0, 0)),    # W1 (per group)
            pl.BlockSpec((N_OH, K * NH), lambda g: (0, 0)),              # A_big
            pl.BlockSpec((N_OH2, N_OH), lambda g: (0, 0)),               # Rh_big
            pl.BlockSpec((PADW, CW2), lambda g: (0, 0)),                 # rwt (padded)
        ],
        out_specs=pl.BlockSpec((None, N_OH2, CW2), lambda g: (g, 0, 0)),
        scratch_shapes=[pltpu.VMEM((NH, K * PADW), jnp.bfloat16),
                        pltpu.VMEM((K * NH, PADW), jnp.bfloat16)],
    )

    raw = pl.pallas_call(
        kernel,
        out_shape=jax.ShapeDtypeStruct((GROUPS, N_OH2, CW2), jnp.float32),
        grid_spec=grid_spec,
        compiler_params=pltpu.CompilerParams(
            dimension_semantics=("parallel",)),
        cost_estimate=pl.CostEstimate(flops=int(flops), transcendentals=0,
                                      bytes_accessed=int(bytes_accessed)),
    )(xg, W1, A_big, Rh_big, rwt)

    # (G, N*OH2, Cout_g*OW2) -> (N, C_OUT, OH2, OW2); channel order co = g*Cout_g + co'.
    out = raw.reshape(GROUPS, N, OH2, C_OUT_G, OW2).transpose(1, 0, 3, 2, 4)
    return out.reshape(N, C_OUT, OH2, OW2)


# ---------------------------- pure-JAX reference ----------------------------

def _flip_group_weight(w_t, c_in):
    """ConvTranspose weight (Cin, Cout_g, K, K) -> forward-conv weight
    (Cout, Cin_g, K, K), spatially flipped, group-ordered."""
    c_in_g = c_in // GROUPS
    c_out_g = w_t.shape[1]
    wt = w_t.reshape(GROUPS, c_in_g, c_out_g, K, K)
    wt = jnp.flip(wt, axis=(3, 4))
    return jnp.transpose(wt, (0, 2, 1, 3, 4)).reshape(GROUPS * c_out_g, c_in_g, K, K)


def reference_forward(x, w_t):
    """Independent reference: conv_transpose as dilated correlation + resize matrices."""
    N, C_IN, H, W = x.shape
    pad = DILATION * (K - 1) - PADDING
    w_conv = _flip_group_weight(w_t, C_IN)
    m1 = lax.conv_general_dilated(
        x, w_conv, window_strides=(1, 1),
        padding=[(pad, pad), (pad, pad)],
        lhs_dilation=(STRIDE, STRIDE), rhs_dilation=(DILATION, DILATION),
        dimension_numbers=("NCHW", "OIHW", "NCHW"),
        feature_group_count=GROUPS,
        precision=lax.Precision.HIGHEST)
    m4 = jnp.where(m1 > 0, m1, m1 * NEG_SLOPE)
    OH, OW = m1.shape[2], m1.shape[3]
    OH2 = int(math.floor(OH * SCALE))
    OW2 = int(math.floor(OW * SCALE))
    Rh = jnp.asarray(_interp_matrix(OH, OH2, SCALE))
    Rw = jnp.asarray(_interp_matrix(OW, OW2, SCALE))
    return jnp.einsum("ph,nchw,qw->ncpq", Rh, m4, Rw,
                      precision=lax.Precision.HIGHEST)


if __name__ == "__main__":
    key = jax.random.PRNGKey(0)
    kx, kw = jax.random.split(key)

    # Small shapes consistent with the module (channels must divide groups=2).
    N, C, H, W = 2, 4, 16, 16
    x = jax.random.normal(kx, (N, C, H, W), dtype=jnp.float32)
    # ConvTranspose2d weight layout: (in_channels, out_channels // groups, K, K)
    w_t = jax.random.normal(kw, (C, C // GROUPS, K, K), dtype=jnp.float32) * 0.05

    out = jax.block_until_ready(jax.jit(model_forward)(x, w_t))
    ref = jax.block_until_ready(reference_forward(x, w_t))
    np.testing.assert_allclose(np.asarray(out), np.asarray(ref), rtol=2e-2, atol=2e-2)

    print("KERNEL_OK")
</pallas_src>

<mosaic_0001>
module attributes {stable_mosaic.version = 11 : i64} {
  func.func @kernel(%arg0: i32, %arg1: memref<1x32x32xbf16, #tpu.memory_space<vmem>>, %arg2: memref<1x32x7936xbf16, #tpu.memory_space<vmem>>, %arg3: memref<136x992xbf16, #tpu.memory_space<vmem>>, %arg4: memref<48x136xbf16, #tpu.memory_space<vmem>>, %arg5: memref<256x48xbf16, #tpu.memory_space<vmem>>, %arg6: memref<1x48x48xf32, #tpu.memory_space<vmem>>, %arg7: memref<32x7936xbf16, #tpu.memory_space<vmem>>, %arg8: memref<992x256xbf16, #tpu.memory_space<vmem>>) attributes {dimension_semantics = [#tpu.dimension_semantics<parallel>], iteration_bounds = array<i64: 2>, scalar_prefetch = 0 : i64, scratch_operands = 2 : i64, tpu.core_type = #tpu.core_type<tc>, window_params = [{transform_indices = @transform_0, window_bounds = array<i64: 1, 32, 32>}, {transform_indices = @transform_1, window_bounds = array<i64: 1, 32, 7936>}, {pipeline_mode = #tpu.pipeline_mode<synchronous>, transform_indices = @transform_2, window_bounds = array<i64: 136, 992>}, {pipeline_mode = #tpu.pipeline_mode<synchronous>, transform_indices = @transform_3, window_bounds = array<i64: 48, 136>}, {pipeline_mode = #tpu.pipeline_mode<synchronous>, transform_indices = @transform_4, window_bounds = array<i64: 256, 48>}, {transform_indices = @transform_5, window_bounds = array<i64: 1, 48, 48>}]} {
    %c0 = arith.constant 0 : index
    %c0_0 = arith.constant 0 : index
    %c0_1 = arith.constant 0 : index
    %0 = vector.load %arg1[%c0, %c0_0, %c0_1] : memref<1x32x32xbf16, #tpu.memory_space<vmem>>, vector<1x32x32xbf16>
    %1 = vector.shape_cast %0 : vector<1x32x32xbf16> to vector<32x32xbf16>
    %c0_2 = arith.constant 0 : index
    %c0_3 = arith.constant 0 : index
    %c0_4 = arith.constant 0 : index
    %2 = vector.load %arg2[%c0_2, %c0_3, %c0_4] : memref<1x32x7936xbf16, #tpu.memory_space<vmem>>, vector<1x32x7936xbf16>
    %3 = vector.shape_cast %2 : vector<1x32x7936xbf16> to vector<32x7936xbf16>
    %cst = arith.constant dense<0.000000e+00> : vector<32x7936xf32>
    %4 = tpu.matmul %1, %3, %cst {dimension_numbers = #tpu.dot_dimension_numbers<[1], [0], [0], [1], [0, 0, 1, 1], [], []>} : vector<32x32xbf16>, vector<32x7936xbf16>, vector<32x7936xf32> -> vector<32x7936xf32>
    %5 = arith.truncf %4 : vector<32x7936xf32> to vector<32x7936xbf16>
    %c0_5 = arith.constant 0 : index
    %c0_6 = arith.constant 0 : index
    %6 = vector.load %arg7[%c0_5, %c0_6] : memref<32x7936xbf16, #tpu.memory_space<vmem>>, vector<32x7936xbf16>
    tpu.vector_store %arg7[%c0_5, %c0_6], %5 {strides = array<i32>} : memref<32x7936xbf16, #tpu.memory_space<vmem>>, vector<32x7936xbf16>,
    %c0_7 = arith.constant 0 : index
    %c0_8 = arith.constant 0 : index
    %7 = vector.load %arg7[%c0_7, %c0_8] : memref<32x7936xbf16, #tpu.memory_space<vmem>>, vector<32x256xbf16>
    %c0_9 = arith.constant 0 : index
    %c0_10 = arith.constant 0 : index
    %8 = vector.load %arg8[%c0_9, %c0_10] : memref<992x256xbf16, #tpu.memory_space<vmem>>, vector<32x256xbf16>
    tpu.vector_store %arg8[%c0_9, %c0_10], %7 {strides = array<i32>} : memref<992x256xbf16, #tpu.memory_space<vmem>>, vector<32x256xbf16>,
    %c0_11 = arith.constant 0 : index
    %c256 = arith.constant 256 : index
    %9 = vector.load %arg7[%c0_11, %c256] : memref<32x7936xbf16, #tpu.memory_space<vmem>>, vector<32x256xbf16>
    %c32 = arith.constant 32 : index
    %c0_12 = arith.constant 0 : index
    %10 = vector.load %arg8[%c32, %c0_12] : memref<992x256xbf16, #tpu.memory_space<vmem>>, vector<32x256xbf16>
    tpu.vector_store %arg8[%c32, %c0_12], %9 {strides = array<i32>} : memref<992x256xbf16, #tpu.memory_space<vmem>>, vector<32x256xbf16>,
    %c0_13 = arith.constant 0 : index
    %c512 = arith.constant 512 : index
    %11 = vector.load %arg7[%c0_13, %c512] : memref<32x7936xbf16, #tpu.memory_space<vmem>>, vector<32x256xbf16>
    %c64 = arith.constant 64 : index
    %c0_14 = arith.constant 0 : index
    %12 = vector.load %arg8[%c64, %c0_14] : memref<992x256xbf16, #tpu.memory_space<vmem>>, vector<32x256xbf16>
    tpu.vector_store %arg8[%c64, %c0_14], %11 {strides = array<i32>} : memref<992x256xbf16, #tpu.memory_space<vmem>>, vector<32x256xbf16>,
    %c0_15 = arith.constant 0 : index
    %c768 = arith.constant 768 : index
    %13 = vector.load %arg7[%c0_15, %c768] : memref<32x7936xbf16, #tpu.memory_space<vmem>>, vector<32x256xbf16>
    %c96 = arith.constant 96 : index
    %c0_16 = arith.constant 0 : index
    %14 = vector.load %arg8[%c96, %c0_16] : memref<992x256xbf16, #tpu.memory_space<vmem>>, vector<32x256xbf16>
    tpu.vector_store %arg8[%c96, %c0_16], %13 {strides = array<i32>} : memref<992x256xbf16, #tpu.memory_space<vmem>>, vector<32x256xbf16>,
    %c0_17 = arith.constant 0 : index
    %c1024 = arith.constant 1024 : index
    %15 = vector.load %arg7[%c0_17, %c1024] : memref<32x7936xbf16, #tpu.memory_space<vmem>>, vector<32x256xbf16>
    %c128 = arith.constant 128 : index
    %c0_18 = arith.constant 0 : index
    %16 = vector.load %arg8[%c128, %c0_18] : memref<992x256xbf16, #tpu.memory_space<vmem>>, vector<32x256xbf16>
    tpu.vector_store %arg8[%c128, %c0_18], %15 {strides = array<i32>} : memref<992x256xbf16, #tpu.memory_space<vmem>>, vector<32x256xbf16>,
    %c0_19 = arith.constant 0 : index
    %c1280 = arith.constant 1280 : index
    %17 = vector.load %arg7[%c0_19, %c1280] : memref<32x7936xbf16, #tpu.memory_space<vmem>>, vector<32x256xbf16>
    %c160 = arith.constant 160 : index
    %c0_20 = arith.constant 0 : index
    %18 = vector.load %arg8[%c160, %c0_20] : memref<992x256xbf16, #tpu.memory_space<vmem>>, vector<32x256xbf16>
    tpu.vector_store %arg8[%c160, %c0_20], %17 {strides = array<i32>} : memref<992x256xbf16, #tpu.memory_space<vmem>>, vector<32x256xbf16>,
    %c0_21 = arith.constant 0 : index
    %c1536 = arith.constant 1536 : index
    %19 = vector.load %arg7[%c0_21, %c1536] : memref<32x7936xbf16, #tpu.memory_space<vmem>>, vector<32x256xbf16>
    %c192 = arith.constant 192 : index
    %c0_22 = arith.constant 0 : index
    %20 = vector.load %arg8[%c192, %c0_22] : memref<992x256xbf16, #tpu.memory_space<vmem>>, vector<32x256xbf16>
    tpu.vector_store %arg8[%c192, %c0_22], %19 {strides = array<i32>} : memref<992x256xbf16, #tpu.memory_space<vmem>>, vector<32x256xbf16>,
    %c0_23 = arith.constant 0 : index
    %c1792 = arith.constant 1792 : index
    %21 = vector.load %arg7[%c0_23, %c1792] : memref<32x7936xbf16, #tpu.memory_space<vmem>>, vector<32x256xbf16>
    %c224 = arith.constant 224 : index
    %c0_24 = arith.constant 0 : index
    %22 = vector.load %arg8[%c224, %c0_24] : memref<992x256xbf16, #tpu.memory_space<vmem>>, vector<32x256xbf16>
    tpu.vector_store %arg8[%c224, %c0_24], %21 {strides = array<i32>} : memref<992x256xbf16, #tpu.memory_space<vmem>>, vector<32x256xbf16>,
    %c0_25 = arith.constant 0 : index
    %c2048 = arith.constant 2048 : index
    %23 = vector.load %arg7[%c0_25, %c2048] : memref<32x7936xbf16, #tpu.memory_space<vmem>>, vector<32x256xbf16>
    %c256_26 = arith.constant 256 : index
    %c0_27 = arith.constant 0 : index
    %24 = vector.load %arg8[%c256_26, %c0_27] : memref<992x256xbf16, #tpu.memory_space<vmem>>, vector<32x256xbf16>
    tpu.vector_store %arg8[%c256_26, %c0_27], %23 {strides = array<i32>} : memref<992x256xbf16, #tpu.memory_space<vmem>>, vector<32x256xbf16>,
    %c0_28 = arith.constant 0 : index
    %c2304 = arith.constant 2304 : index
    %25 = vector.load %arg7[%c0_28, %c2304] : memref<32x7936xbf16, #tpu.memory_space<vmem>>, vector<32x256xbf16>
    %c288 = arith.constant 288 : index
    %c0_29 = arith.constant 0 : index
    %26 = vector.load %arg8[%c288, %c0_29] : memref<992x256xbf16, #tpu.memory_space<vmem>>, vector<32x256xbf16>
    tpu.vector_store %arg8[%c288, %c0_29], %25 {strides = array<i32>} : memref<992x256xbf16, #tpu.memory_space<vmem>>, vector<32x256xbf16>,
    %c0_30 = arith.constant 0 : index
    %c2560 = arith.constant 2560 : index
    %27 = vector.load %arg7[%c0_30, %c2560] : memref<32x7936xbf16, #tpu.memory_space<vmem>>, vector<32x256xbf16>
    %c320 = arith.constant 320 : index
    %c0_31 = arith.constant 0 : index
    %28 = vector.load %arg8[%c320, %c0_31] : memref<992x256xbf16, #tpu.memory_space<vmem>>, vector<32x256xbf16>
    tpu.vector_store %arg8[%c320, %c0_31], %27 {strides = array<i32>} : memref<992x256xbf16, #tpu.memory_space<vmem>>, vector<32x256xbf16>,
    %c0_32 = arith.constant 0 : index
    %c2816 = arith.constant 2816 : index
    %29 = vector.load %arg7[%c0_32, %c2816] : memref<32x7936xbf16, #tpu.memory_space<vmem>>, vector<32x256xbf16>
    %c352 = arith.constant 352 : index
    %c0_33 = arith.constant 0 : index
    %30 = vector.load %arg8[%c352, %c0_33] : memref<992x256xbf16, #tpu.memory_space<vmem>>, vector<32x256xbf16>
    tpu.vector_store %arg8[%c352, %c0_33], %29 {strides = array<i32>} : memref<992x256xbf16, #tpu.memory_space<vmem>>, vector<32x256xbf16>,
    %c0_34 = arith.constant 0 : index
    %c3072 = arith.constant 3072 : index
    %31 = vector.load %arg7[%c0_34, %c3072] : memref<32x7936xbf16, #tpu.memory_space<vmem>>, vector<32x256xbf16>
    %c384 = arith.constant 384 : index
    %c0_35 = arith.constant 0 : index
    %32 = vector.load %arg8[%c384, %c0_35] : memref<992x256xbf16, #tpu.memory_space<vmem>>, vector<32x256xbf16>
    tpu.vector_store %arg8[%c384, %c0_35], %31 {strides = array<i32>} : memref<992x256xbf16, #tpu.memory_space<vmem>>, vector<32x256xbf16>,
    %c0_36 = arith.constant 0 : index
    %c3328 = arith.constant 3328 : index
    %33 = vector.load %arg7[%c0_36, %c3328] : memref<32x7936xbf16, #tpu.memory_space<vmem>>, vector<32x256xbf16>
    %c416 = arith.constant 416 : index
    %c0_37 = arith.constant 0 : index
    %34 = vector.load %arg8[%c416, %c0_37] : memref<992x256xbf16, #tpu.memory_space<vmem>>, vector<32x256xbf16>
    tpu.vector_store %arg8[%c416, %c0_37], %33 {strides = array<i32>} : memref<992x256xbf16, #tpu.memory_space<vmem>>, vector<32x256xbf16>,
    %c0_38 = arith.constant 0 : index
    %c3584 = arith.constant 3584 : index
    %35 = vector.load %arg7[%c0_38, %c3584] : memref<32x7936xbf16, #tpu.memory_space<vmem>>, vector<32x256xbf16>
    %c448 = arith.constant 448 : index
    %c0_39 = arith.constant 0 : index
    %36 = vector.load %arg8[%c448, %c0_39] : memref<992x256xbf16, #tpu.memory_space<vmem>>, vector<32x256xbf16>
    tpu.vector_store %arg8[%c448, %c0_39], %35 {strides = array<i32>} : memref<992x256xbf16, #tpu.memory_space<vmem>>, vector<32x256xbf16>,
    %c0_40 = arith.constant 0 : index
    %c3840 = arith.constant 3840 : index
    %37 = vector.load %arg7[%c0_40, %c3840] : memref<32x7936xbf16, #tpu.memory_space<vmem>>, vector<32x256xbf16>
    %c480 = arith.constant 480 : index
    %c0_41 = arith.constant 0 : index
    %38 = vector.load %arg8[%c480, %c0_41] : memref<992x256xbf16, #tpu.memory_space<vmem>>, vector<32x256xbf16>
    tpu.vector_store %arg8[%c480, %c0_41], %37 {strides = array<i32>} : memref<992x256xbf16, #tpu.memory_space<vmem>>, vector<32x256xbf16>,
    %c0_42 = arith.constant 0 : index
    %c4096 = arith.constant 4096 : index
    %39 = vector.load %arg7[%c0_42, %c4096] : memref<32x7936xbf16, #tpu.memory_space<vmem>>, vector<32x256xbf16>
    %c512_43 = arith.constant 512 : index
    %c0_44 = arith.constant 0 : index
    %40 = vector.load %arg8[%c512_43, %c0_44] : memref<992x256xbf16, #tpu.memory_space<vmem>>, vector<32x256xbf16>
    tpu.vector_store %arg8[%c512_43, %c0_44], %39 {strides = array<i32>} : memref<992x256xbf16, #tpu.memory_space<vmem>>, vector<32x256xbf16>,
    %c0_45 = arith.constant 0 : index
    %c4352 = arith.constant 4352 : index
    %41 = vector.load %arg7[%c0_45, %c4352] : memref<32x7936xbf16, #tpu.memory_space<vmem>>, vector<32x256xbf16>
    %c544 = arith.constant 544 : index
    %c0_46 = arith.constant 0 : index
    %42 = vector.load %arg8[%c544, %c0_46] : memref<992x256xbf16, #tpu.memory_space<vmem>>, vector<32x256xbf16>
    tpu.vector_store %arg8[%c544, %c0_46], %41 {strides = array<i32>} : memref<992x256xbf16, #tpu.memory_space<vmem>>, vector<32x256xbf16>,
    %c0_47 = arith.constant 0 : index
    %c4608 = arith.constant 4608 : index
    %43 = vector.load %arg7[%c0_47, %c4608] : memref<32x7936xbf16, #tpu.memory_space<vmem>>, vector<32x256xbf16>
    %c576 = arith.constant 576 : index
    %c0_48 = arith.constant 0 : index
    %44 = vector.load %arg8[%c576, %c0_48] : memref<992x256xbf16, #tpu.memory_space<vmem>>, vector<32x256xbf16>
    tpu.vector_store %arg8[%c576, %c0_48], %43 {strides = array<i32>} : memref<992x256xbf16, #tpu.memory_space<vmem>>, vector<32x256xbf16>,
    %c0_49 = arith.constant 0 : index
    %c4864 = arith.constant 4864 : index
    %45 = vector.load %arg7[%c0_49, %c4864] : memref<32x7936xbf16, #tpu.memory_space<vmem>>, vector<32x256xbf16>
    %c608 = arith.constant 608 : index
    %c0_50 = arith.constant 0 : index
    %46 = vector.load %arg8[%c608, %c0_50] : memref<992x256xbf16, #tpu.memory_space<vmem>>, vector<32x256xbf16>
    tpu.vector_store %arg8[%c608, %c0_50], %45 {strides = array<i32>} : memref<992x256xbf16, #tpu.memory_space<vmem>>, vector<32x256xbf16>,
    %c0_51 = arith.constant 0 : index
    %c5120 = arith.constant 5120 : index
    %47 = vector.load %arg7[%c0_51, %c5120] : memref<32x7936xbf16, #tpu.memory_space<vmem>>, vector<32x256xbf16>
    %c640 = arith.constant 640 : index
    %c0_52 = arith.constant 0 : index
    %48 = vector.load %arg8[%c640, %c0_52] : memref<992x256xbf16, #tpu.memory_space<vmem>>, vector<32x256xbf16>
    tpu.vector_store %arg8[%c640, %c0_52], %47 {strides = array<i32>} : memref<992x256xbf16, #tpu.memory_space<vmem>>, vector<32x256xbf16>,
    %c0_53 = arith.constant 0 : index
    %c5376 = arith.constant 5376 : index
    %49 = vector.load %arg7[%c0_53, %c5376] : memref<32x7936xbf16, #tpu.memory_space<vmem>>, vector<32x256xbf16>
    %c672 = arith.constant 672 : index
    %c0_54 = arith.constant 0 : index
    %50 = vector.load %arg8[%c672, %c0_54] : memref<992x256xbf16, #tpu.memory_space<vmem>>, vector<32x256xbf16>
    tpu.vector_store %arg8[%c672, %c0_54], %49 {strides = array<i32>} : memref<992x256xbf16, #tpu.memory_space<vmem>>, vector<32x256xbf16>,
    %c0_55 = arith.constant 0 : index
    %c5632 = arith.constant 5632 : index
    %51 = vector.load %arg7[%c0_55, %c5632] : memref<32x7936xbf16, #tpu.memory_space<vmem>>, vector<32x256xbf16>
    %c704 = arith.constant 704 : index
    %c0_56 = arith.constant 0 : index
    %52 = vector.load %arg8[%c704, %c0_56] : memref<992x256xbf16, #tpu.memory_space<vmem>>, vector<32x256xbf16>
    tpu.vector_store %arg8[%c704, %c0_56], %51 {strides = array<i32>} : memref<992x256xbf16, #tpu.memory_space<vmem>>, vector<32x256xbf16>,
    %c0_57 = arith.constant 0 : index
    %c5888 = arith.constant 5888 : index
    %53 = vector.load %arg7[%c0_57, %c5888] : memref<32x7936xbf16, #tpu.memory_space<vmem>>, vector<32x256xbf16>
    %c736 = arith.constant 736 : index
    %c0_58 = arith.constant 0 : index
    %54 = vector.load %arg8[%c736, %c0_58] : memref<992x256xbf16, #tpu.memory_space<vmem>>, vector<32x256xbf16>
    tpu.vector_store %arg8[%c736, %c0_58], %53 {strides = array<i32>} : memref<992x256xbf16, #tpu.memory_space<vmem>>, vector<32x256xbf16>,
    %c0_59 = arith.constant 0 : index
    %c6144 = arith.constant 6144 : index
    %55 = vector.load %arg7[%c0_59, %c6144] : memref<32x7936xbf16, #tpu.memory_space<vmem>>, vector<32x256xbf16>
    %c768_60 = arith.constant 768 : index
    %c0_61 = arith.constant 0 : index
    %56 = vector.load %arg8[%c768_60, %c0_61] : memref<992x256xbf16, #tpu.memory_space<vmem>>, vector<32x256xbf16>
    tpu.vector_store %arg8[%c768_60, %c0_61], %55 {strides = array<i32>} : memref<992x256xbf16, #tpu.memory_space<vmem>>, vector<32x256xbf16>,
    %c0_62 = arith.constant 0 : index
    %c6400 = arith.constant 6400 : index
    %57 = vector.load %arg7[%c0_62, %c6400] : memref<32x7936xbf16, #tpu.memory_space<vmem>>, vector<32x256xbf16>
    %c800 = arith.constant 800 : index
    %c0_63 = arith.constant 0 : index
    %58 = vector.load %arg8[%c800, %c0_63] : memref<992x256xbf16, #tpu.memory_space<vmem>>, vector<32x256xbf16>
    tpu.vector_store %arg8[%c800, %c0_63], %57 {strides = array<i32>} : memref<992x256xbf16, #tpu.memory_space<vmem>>, vector<32x256xbf16>,
    %c0_64 = arith.constant 0 : index
    %c6656 = arith.constant 6656 : index
    %59 = vector.load %arg7[%c0_64, %c6656] : memref<32x7936xbf16, #tpu.memory_space<vmem>>, vector<32x256xbf16>
    %c832 = arith.constant 832 : index
    %c0_65 = arith.constant 0 : index
    %60 = vector.load %arg8[%c832, %c0_65] : memref<992x256xbf16, #tpu.memory_space<vmem>>, vector<32x256xbf16>
    tpu.vector_store %arg8[%c832, %c0_65], %59 {strides = array<i32>} : memref<992x256xbf16, #tpu.memory_space<vmem>>, vector<32x256xbf16>,
    %c0_66 = arith.constant 0 : index
    %c6912 = arith.constant 6912 : index
    %61 = vector.load %arg7[%c0_66, %c6912] : memref<32x7936xbf16, #tpu.memory_space<vmem>>, vector<32x256xbf16>
    %c864 = arith.constant 864 : index
    %c0_67 = arith.constant 0 : index
    %62 = vector.load %arg8[%c864, %c0_67] : memref<992x256xbf16, #tpu.memory_space<vmem>>, vector<32x256xbf16>
    tpu.vector_store %arg8[%c864, %c0_67], %61 {strides = array<i32>} : memref<992x256xbf16, #tpu.memory_space<vmem>>, vector<32x256xbf16>,
    %c0_68 = arith.constant 0 : index
    %c7168 = arith.constant 7168 : index
    %63 = vector.load %arg7[%c0_68, %c7168] : memref<32x7936xbf16, #tpu.memory_space<vmem>>, vector<32x256xbf16>
    %c896 = arith.constant 896 : index
    %c0_69 = arith.constant 0 : index
    %64 = vector.load %arg8[%c896, %c0_69] : memref<992x256xbf16, #tpu.memory_space<vmem>>, vector<32x256xbf16>
    tpu.vector_store %arg8[%c896, %c0_69], %63 {strides = array<i32>} : memref<992x256xbf16, #tpu.memory_space<vmem>>, vector<32x256xbf16>,
    %c0_70 = arith.constant 0 : index
    %c7424 = arith.constant 7424 : index
    %65 = vector.load %arg7[%c0_70, %c7424] : memref<32x7936xbf16, #tpu.memory_space<vmem>>, vector<32x256xbf16>
    %c928 = arith.constant 928 : index
    %c0_71 = arith.constant 0 : index
    %66 = vector.load %arg8[%c928, %c0_71] : memref<992x256xbf16, #tpu.memory_space<vmem>>, vector<32x256xbf16>
    tpu.vector_store %arg8[%c928, %c0_71], %65 {strides = array<i32>} : memref<992x256xbf16, #tpu.memory_space<vmem>>, vector<32x256xbf16>,
    %c0_72 = arith.constant 0 : index
    %c7680 = arith.constant 7680 : index
    %67 = vector.load %arg7[%c0_72, %c7680] : memref<32x7936xbf16, #tpu.memory_space<vmem>>, vector<32x256xbf16>
    %c960 = arith.constant 960 : index
    %c0_73 = arith.constant 0 : index
    %68 = vector.load %arg8[%c960, %c0_73] : memref<992x256xbf16, #tpu.memory_space<vmem>>, vector<32x256xbf16>
    tpu.vector_store %arg8[%c960, %c0_73], %67 {strides = array<i32>} : memref<992x256xbf16, #tpu.memory_space<vmem>>, vector<32x256xbf16>,
    %c0_74 = arith.constant 0 : index
    %c0_75 = arith.constant 0 : index
    %69 = vector.load %arg3[%c0_74, %c0_75] : memref<136x992xbf16, #tpu.memory_space<vmem>>, vector<136x992xbf16>
    %c0_76 = arith.constant 0 : index
    %c0_77 = arith.constant 0 : index
    %70 = vector.load %arg8[%c0_76, %c0_77] : memref<992x256xbf16, #tpu.memory_space<vmem>>, vector<992x256xbf16>
    %cst_78 = arith.constant dense<0.000000e+00> : vector<136x256xf32>
    %71 = tpu.matmul %69, %70, %cst_78 {dimension_numbers = #tpu.dot_dimension_numbers<[1], [0], [0], [1], [0, 0, 1, 1], [], []>} : vector<136x992xbf16>, vector<992x256xbf16>, vector<136x256xf32> -> vector<136x256xf32>
    %cst_79 = arith.constant 0.000000e+00 : f32
    %72 = vector.broadcast %cst_79 : f32 to vector<136x256xf32>
    %73 = arith.cmpf ogt, %71, %72 : vector<136x256xf32>
    %cst_80 = arith.constant -0.0108846044 : f32
    %74 = vector.broadcast %cst_80 : f32 to vector<136x256xf32>
    %75 = arith.mulf %71, %74 : vector<136x256xf32>
    %76 = arith.select %73, %71, %75 : vector<136x256xi1>, vector<136x256xf32>
    %c0_81 = arith.constant 0 : index
    %c0_82 = arith.constant 0 : index
    %77 = vector.load %arg4[%c0_81, %c0_82] : memref<48x136xbf16, #tpu.memory_space<vmem>>, vector<48x136xbf16>
    %78 = arith.truncf %76 : vector<136x256xf32> to vector<136x256xbf16>
    %cst_83 = arith.constant dense<0.000000e+00> : vector<48x256xf32>
    %79 = tpu.matmul %77, %78, %cst_83 {dimension_numbers = #tpu.dot_dimension_numbers<[1], [0], [0], [1], [0, 0, 1, 1], [], []>} : vector<48x136xbf16>, vector<136x256xbf16>, vector<48x256xf32> -> vector<48x256xf32>
    %80 = arith.truncf %79 : vector<48x256xf32> to vector<48x256xbf16>
    %c0_84 = arith.constant 0 : index
    %c0_85 = arith.constant 0 : index
    %81 = vector.load %arg5[%c0_84, %c0_85] : memref<256x48xbf16, #tpu.memory_space<vmem>>, vector<256x48xbf16>
    %cst_86 = arith.constant dense<0.000000e+00> : vector<48x48xf32>
    %82 = tpu.matmul %80, %81, %cst_86 {dimension_numbers = #tpu.dot_dimension_numbers<[1], [0], [0], [1], [0, 0, 1, 1], [], []>} : vector<48x256xbf16>, vector<256x48xbf16>, vector<48x48xf32> -> vector<48x48xf32>
    %c0_87 = arith.constant 0 : index
    %c0_88 = arith.constant 0 : index
    %c0_89 = arith.constant 0 : index
    %83 = vector.load %arg6[%c0_87, %c0_88, %c0_89] : memref<1x48x48xf32, #tpu.memory_space<vmem>>, vector<1x48x48xf32>
    %84 = vector.shape_cast %83 : vector<1x48x48xf32> to vector<48x48xf32>
    %85 = vector.shape_cast %82 : vector<48x48xf32> to vector<1x48x48xf32>
    tpu.vector_store %arg6[%c0_87, %c0_88, %c0_89], %85 {strides = array<i32>} : memref<1x48x48xf32, #tpu.memory_space<vmem>>, vector<1x48x48xf32>,
    return
  }
  func.func @transform_0(%arg0: i32) -> (i32, i32, i32) {
    %c0_i32 = arith.constant 0 : i32
    %c0_i32_0 = arith.constant 0 : i32
    %c0_i32_1 = arith.constant 0 : i32
    return %arg0, %c0_i32, %c0_i32_0 : i32, i32, i32
  }
  func.func @transform_1(%arg0: i32) -> (i32, i32, i32) {
    %c0_i32 = arith.constant 0 : i32
    %c0_i32_0 = arith.constant 0 : i32
    %c0_i32_1 = arith.constant 0 : i32
    return %arg0, %c0_i32, %c0_i32_0 : i32, i32, i32
  }
  func.func @transform_2(%arg0: i32) -> (i32, i32) {
    %c0_i32 = arith.constant 0 : i32
    %c0_i32_0 = arith.constant 0 : i32
    %c0_i32_1 = arith.constant 0 : i32
    return %c0_i32, %c0_i32_0 : i32, i32
  }
  func.func @transform_3(%arg0: i32) -> (i32, i32) {
    %c0_i32 = arith.constant 0 : i32
    %c0_i32_0 = arith.constant 0 : i32
    %c0_i32_1 = arith.constant 0 : i32
    return %c0_i32, %c0_i32_0 : i32, i32
  }
  func.func @transform_4(%arg0: i32) -> (i32, i32) {
    %c0_i32 = arith.constant 0 : i32
    %c0_i32_0 = arith.constant 0 : i32
    %c0_i32_1 = arith.constant 0 : i32
    return %c0_i32, %c0_i32_0 : i32, i32
  }
  func.func @transform_5(%arg0: i32) -> (i32, i32, i32) {
    %c0_i32 = arith.constant 0 : i32
    %c0_i32_0 = arith.constant 0 : i32
    %c0_i32_1 = arith.constant 0 : i32
    return %arg0, %c0_i32, %c0_i32_0 : i32, i32, i32
  }
}

</mosaic_0001>

<llo_original>
// kernel: model_forward.1
$region0: #{model_forward.1}
  #allocation0 [shape = 'u32[]', space=smem, size = 0x4, offset = 0x4, fixed_abs, tag = 'smem constant byte address 0x4 - core index']
  #allocation1 [shape = 'u32[144,128]{1,0:T(1,128)}', space=vmem, size = 0x12000, scoped, tag = 'internal scratch']
  #allocation2 [shape = 'bf16[32,7936]{1,0:T(16,128)(2,1)}', space=vmem, size = 0x7c000, scoped, tag = 'scratch operand']
  #allocation3 [shape = 'bf16[992,256]{1,0:T(16,128)(2,1)}', space=vmem, size = 0x7c000, scoped, tag = 'scratch operand']
  %s0 = inlined_call_operand.vmem [shape: bf16[2,32,32], index: 0, kind: input, shape index: {}]
  %s1 = inlined_call_operand.vmem [shape: bf16[2,32,7936], index: 1, kind: input, shape index: {}]
  %s2 = inlined_call_operand.vmem [shape: bf16[136,992], index: 2, kind: input, shape index: {}]
  %s3 = inlined_call_operand.vmem [shape: bf16[48,136], index: 3, kind: input, shape index: {}]
  %s4 = inlined_call_operand.vmem [shape: bf16[256,48], index: 4, kind: input, shape index: {}]
  %s5 = inlined_call_operand.vmem [shape: f32[2,48,48], index: 5, kind: output, shape index: {}]
  %s6 = sld [smem:[#allocation0]]
  $region53: #{model_forward.1} parent=0
    _
  %s8 = ssub.s32 1, %s6
  %s9 = scalar_select 0, %s8, %s6
  loop: start=0, step=1, limit=4
  $region2: #{model_forward.1} parent=0 // loop_pre_header
    _
  $region3: #{model_forward.1} parent=0 // loop_header
    %s11 = sphi 0, %s15
    %p12 = scmp.ge.s32.totalorder %s11, 4
    %s21 = sphi 0, %s23
    %s24 = sphi 0, %s21
    %s25 = sphi 0, %s24
    %s41 = sphi 0, %s25
    %s47 = sphi 0, %s49
    %s50 = sphi 0, %s47
    %s51 = sphi 0, %s50
    %s67 = sphi 0, %s51
    %s71 = sphi 0, %s71
    %s73 = sphi 0, %s71
    %s74 = sphi 0, %s73
    %s88 = sphi 0, %s74
    %s92 = sphi 0, %s92
    %s94 = sphi 0, %s92
    %s95 = sphi 0, %s94
    %s109 = sphi 0, %s95
    %s113 = sphi 0, %s113
    %s115 = sphi 0, %s113
    %s116 = sphi 0, %s115
    %s130 = sphi 0, %s116
    %s136 = sphi 0, %s138
    %s139 = sphi 0, %s136
    %s140 = sphi 0, %s139
    %s156 = sphi 0, %s140
  $region4: #{model_forward.1} parent=0 // loop_header_branch
    %14 = sbr.rel (%p12) target = $region8
  $region5: #{model_forward.1} parent=0 // loop_body
    %s16 = ssub.s32 %s11, 1
    %s17 = ssub.s32 %s11, 2
    %s18 = sadd.s32 %s11, 1
    %s19 = ssub.s32 %s11, %s18
    %p20 = scmp.eq.s32.totalorder %s19, 0
    %s22 = sadd.s32 %s21, 1
    %s23 = scalar_select %p20, %s21, %s22
    %p26 = pneg %p20
    %p27 = scmp.eq.s32.totalorder %s11, 1
    %p28 = por %p26, %p27
    %p29 = scmp.ne.s32.totalorder %s21, %s24
    %p30 = scmp.eq.s32.totalorder %s11, 0
    %p31 = por %p29, %p30
    %p32 = scmp.ne.s32.totalorder %s21, %s24
    %p33 = scmp.eq.s32.totalorder %s16, 1
    %p34 = por %p32, %p33
    %p35 = scmp.ne.s32.totalorder %s24, %s25
    %p36 = scmp.eq.s32.totalorder %s16, 0
    %p37 = por %p35, %p36
    %p38 = scmp.ne.s32.totalorder %s24, %s25
    %p39 = scmp.eq.s32.totalorder %s17, 1
    %p40 = por %p38, %p39
    %p42 = scmp.ne.s32.totalorder %s25, %s41
    %p43 = scmp.eq.s32.totalorder %s17, 0
    %p44 = por %p42, %p43
    %s45 = ssub.s32 %s11, %s18
    %p46 = scmp.eq.s32.totalorder %s45, 0
    %s48 = sadd.s32 %s47, 1
    %s49 = scalar_select %p46, %s47, %s48
    %p52 = pneg %p46
    %p53 = scmp.eq.s32.totalorder %s11, 1
    %p54 = por %p52, %p53
    %p55 = scmp.ne.s32.totalorder %s47, %s50
    %p56 = scmp.eq.s32.totalorder %s11, 0
    %p57 = por %p55, %p56
    %p58 = scmp.ne.s32.totalorder %s47, %s50
    %p59 = scmp.eq.s32.totalorder %s16, 1
    %p60 = por %p58, %p59
    %p61 = scmp.ne.s32.totalorder %s50, %s51
    %p62 = scmp.eq.s32.totalorder %s16, 0
    %p63 = por %p61, %p62
    %p64 = scmp.ne.s32.totalorder %s50, %s51
    %p65 = scmp.eq.s32.totalorder %s17, 1
    %p66 = por %p64, %p65
    %p68 = scmp.ne.s32.totalorder %s51, %s67
    %p69 = scmp.eq.s32.totalorder %s17, 0
    %p70 = por %p68, %p69
    %s72 = sadd.s32 %s71, 1
    %p75 = scmp.eq.s32.totalorder %s11, 1
    %p76 = scmp.ne.s32.totalorder %s71, %s73
    %p77 = scmp.eq.s32.totalorder %s11, 0
    %p78 = por %p76, %p77
    %p79 = scmp.ne.s32.totalorder %s71, %s73
    %p80 = scmp.eq.s32.totalorder %s16, 1
    %p81 = por %p79, %p80
    %p82 = scmp.ne.s32.totalorder %s73, %s74
    %p83 = scmp.eq.s32.totalorder %s16, 0
    %p84 = por %p82, %p83
    %p85 = scmp.ne.s32.totalorder %s73, %s74
    %p86 = scmp.eq.s32.totalorder %s17, 1
    %p87 = por %p85, %p86
    %p89 = scmp.ne.s32.totalorder %s74, %s88
    %p90 = scmp.eq.s32.totalorder %s17, 0
    %p91 = por %p89, %p90
    %s93 = sadd.s32 %s92, 1
    %p96 = scmp.eq.s32.totalorder %s11, 1
    %p97 = scmp.ne.s32.totalorder %s92, %s94
    %p98 = scmp.eq.s32.totalorder %s11, 0
    %p99 = por %p97, %p98
    %p100 = scmp.ne.s32.totalorder %s92, %s94
    %p101 = scmp.eq.s32.totalorder %s16, 1
    %p102 = por %p100, %p101
    %p103 = scmp.ne.s32.totalorder %s94, %s95
    %p104 = scmp.eq.s32.totalorder %s16, 0
    %p105 = por %p103, %p104
    %p106 = scmp.ne.s32.totalorder %s94, %s95
    %p107 = scmp.eq.s32.totalorder %s17, 1
    %p108 = por %p106, %p107
    %p110 = scmp.ne.s32.totalorder %s95, %s109
    %p111 = scmp.eq.s32.totalorder %s17, 0
    %p112 = por %p110, %p111
    %s114 = sadd.s32 %s113, 1
    %p117 = scmp.eq.s32.totalorder %s11, 1
    %p118 = scmp.ne.s32.totalorder %s113, %s115
    %p119 = scmp.eq.s32.totalorder %s11, 0
    %p120 = por %p118, %p119
    %p121 = scmp.ne.s32.totalorder %s113, %s115
    %p122 = scmp.eq.s32.totalorder %s16, 1
    %p123 = por %p121, %p122
    %p124 = scmp.ne.s32.totalorder %s115, %s116
    %p125 = scmp.eq.s32.totalorder %s16, 0
    %p126 = por %p124, %p125
    %p127 = scmp.ne.s32.totalorder %s115, %s116
    %p128 = scmp.eq.s32.totalorder %s17, 1
    %p129 = por %p127, %p128
    %p131 = scmp.ne.s32.totalorder %s116, %s130
    %p132 = scmp.eq.s32.totalorder %s17, 0
    %p133 = por %p131, %p132
    %s134 = ssub.s32 %s11, %s18
    %p135 = scmp.eq.s32.totalorder %s134, 0
    %s137 = sadd.s32 %s136, 1
    %s138 = scalar_select %p135, %s136, %s137
    %p141 = pneg %p135
    %p142 = scmp.eq.s32.totalorder %s11, 1
    %p143 = por %p141, %p142
    %p144 = scmp.ne.s32.totalorder %s136, %s139
    %p145 = scmp.eq.s32.totalorder %s11, 0
    %p146 = por %p144, %p145
    %p147 = scmp.ne.s32.totalorder %s136, %s139
    %p148 = scmp.eq.s32.totalorder %s16, 1
    %p149 = por %p147, %p148
    %p150 = scmp.ne.s32.totalorder %s139, %s140
    %p151 = scmp.eq.s32.totalorder %s16, 0
    %p152 = por %p150, %p151
    %p153 = scmp.ne.s32.totalorder %s139, %s140
    %p154 = scmp.eq.s32.totalorder %s17, 1
    %p155 = por %p153, %p154
    %p157 = scmp.ne.s32.totalorder %s140, %s156
    %p158 = scmp.eq.s32.totalorder %s17, 0
    %p159 = por %p157, %p158
    %p160 = scmp.le.s32.totalorder 1, %s11
    %p161 = scmp.lt.s32.totalorder %s11, 3
    %p162 = pnand %p160, %p161
    %p163 = pneg %p162
    // Predicated region
    $region9: #{model_forward.1} parent=5 // pred_check
      _
    $region10: #{model_forward.1} parent=5 // pred_check_branch
      %165 = sbr.rel (%p162) target = $region12
    $region11: #{model_forward.1} parent=5 // pred_region
      %s166 = ssub.s32 %s11, 1
      // Predicated region
      $region13: #{model_forward.1} parent=11 // pred_check
        %p167 = pneg %p84
      $region14: #{model_forward.1} parent=11 // pred_check_branch
        %169 = sbr.rel (%p167) target = $region16
      $region15: #{model_forward.1} parent=11 // pred_region
        _
      $region16: #{model_forward.1} parent=11 // pred_fallthru
        _
      // Predicated region
      $region17: #{model_forward.1} parent=11 // pred_check
        %p170 = pneg %p105
      $region18: #{model_forward.1} parent=11 // pred_check_branch
        %172 = sbr.rel (%p170) target = $region20
      $region19: #{model_forward.1} parent=11 // pred_region
        _
      $region20: #{model_forward.1} parent=11 // pred_fallthru
        _
      // Predicated region
      $region21: #{model_forward.1} parent=11 // pred_check
        %p173 = pneg %p126
      $region22: #{model_forward.1} parent=11 // pred_check_branch
        %175 = sbr.rel (%p173) target = $region24
      $region23: #{model_forward.1} parent=11 // pred_region
        _
      $region24: #{model_forward.1} parent=11 // pred_fallthru
        _
    $region12: #{model_forward.1} parent=5 // pred_fallthru
      _
    %p176 = scmp.lt.s32.totalorder %s11, 2
    // Predicated region
    $region25: #{model_forward.1} parent=5 // pred_check
      %p177 = pneg %p176
    $region26: #{model_forward.1} parent=5 // pred_check_branch
      %179 = sbr.rel (%p177) target = $region28
    $region27: #{model_forward.1} parent=5 // pred_region
      // Predicated region
      $region29: #{model_forward.1} parent=27 // pred_check
        %p180 = pneg %p31
      $region30: #{model_forward.1} parent=27 // pred_check_branch
        %182 = sbr.rel (%p180) target = $region32
      $region31: #{model_forward.1} parent=27 // pred_region
        %p183 = scmp.lt.s32.totalorder %s11, 1
        %s184 = scalar_select %p183, %s11, 1
        %s185 = smul.addr %s184, 4
        %s186 = smul.addr %s185, 4
        %s187 = scalar_lea.vmem %s0, %s186
      $region32: #{model_forward.1} parent=27 // pred_fallthru
        _
      // Predicated region
      $region33: #{model_forward.1} parent=27 // pred_check
        %p188 = pneg %p57
      $region34: #{model_forward.1} parent=27 // pred_check_branch
        %190 = sbr.rel (%p188) target = $region36
      $region35: #{model_forward.1} parent=27 // pred_region
        %p191 = scmp.lt.s32.totalorder %s11, 1
        %s192 = scalar_select %p191, %s11, 1
        %s193 = smul.addr %s192, 248
        %s194 = smul.addr %s193, 4
        %s195 = scalar_lea.vmem %s1, %s194
      $region36: #{model_forward.1} parent=27 // pred_fallthru
        _
    $region28: #{model_forward.1} parent=5 // pred_fallthru
      _
    %p196 = scmp.le.s32.totalorder 1, %s11
    %p197 = scmp.lt.s32.totalorder %s11, 3
    %p198 = pnand %p196, %p197
    %p199 = pneg %p198
    // Predicated region
    $region37: #{model_forward.1} parent=5 // pred_check
      _
    $region38: #{model_forward.1} parent=5 // pred_check_branch
      %201 = sbr.rel (%p198) target = $region40
    $region39: #{model_forward.1} parent=5 // pred_region
      %s202 = ssub.s32 %s11, 1
      %p203 = scmp.lt.s32.totalorder %s16, 1
      %s204 = scalar_select %p203, %s16, 1
      %s205 = smul.addr %s204, 4
      %s206 = smul.addr %s205, 4
      %s207 = scalar_lea.vmem %s0, %s206
      %p208 = pneg %p37
      %p209 = pneg %p34
      %p210 = scmp.lt.s32.totalorder %s16, 1
      %s211 = scalar_select %p210, %s16, 1
      %s212 = smul.addr %s211, 248
      %s213 = smul.addr %s212, 4
      %s214 = scalar_lea.vmem %s1, %s213
      %p215 = pneg %p63
      %p216 = pneg %p60
      %p217 = pneg %p84
      %p218 = pneg %p81
      %p219 = pneg %p105
      %p220 = pneg %p102
      %p221 = pneg %p126
      %p222 = pneg %p123
      %p223 = pneg %p152
      %p224 = pneg %p149
      %p225 = scmp.lt.s32.totalorder %s16, 1
      %s226 = scalar_select %p225, %s16, 1
      %s227 = smul.addr %s226, 6
      %s228 = smul.addr %s227, 8
      %s229 = scalar_lea.vmem %s5, %s228
      %p230 = scmp.lt.s32.totalorder %s16, 1
      %s231 = scalar_select %p230, %s16, 1
      %s232 = smul.addr %s231, 4
      %s233 = smul.addr %s232, 4
      %s234 = scalar_lea.vmem %s0, %s233
      %p235 = scmp.lt.s32.totalorder %s16, 1
      %s236 = scalar_select %p235, %s16, 1
      %s237 = smul.addr %s236, 248
      %s238 = smul.addr %s237, 4
      %s239 = scalar_lea.vmem %s1, %s238
      %p240 = scmp.lt.s32.totalorder %s16, 1
      %s241 = scalar_select %p240, %s16, 1
      %s242 = smul.addr %s241, 6
      %s243 = smul.addr %s242, 8
      %s244 = scalar_lea.vmem %s5, %s243
      %v246 = vld [vmem:[%s234] sm:$0xf]
      %v247 = vld [vmem:[%s234 + $0x4] sm:$0xf]
      %v248 = vld [vmem:[%s234 + $0x8] sm:$0xf]
      %v249 = vld [vmem:[%s234 + $0xc] sm:$0xf]
      %v250 = vld [vmem:[%s239] sm:$0xff]
      %v251 = vld [vmem:[%s239 + $0x8] sm:$0xff]
      %v252 = vld [vmem:[%s239 + $0x10] sm:$0xff]
      %v253 = vld [vmem:[%s239 + $0x18] sm:$0xff]
      %v254 = vld [vmem:[%s239 + $0x20] sm:$0xff]
      %v255 = vld [vmem:[%s239 + $0x28] sm:$0xff]
      %v256 = vld [vmem:[%s239 + $0x30] sm:$0xff]
      %v257 = vld [vmem:[%s239 + $0x38] sm:$0xff]
      %v258 = vld [vmem:[%s239 + $0x40] sm:$0xff]
      %v259 = vld [vmem:[%s239 + $0x48] sm:$0xff]
      %v260 = vld [vmem:[%s239 + $0x50] sm:$0xff]
      %v261 = vld [vmem:[%s239 + $0x58] sm:$0xff]
      %v262 = vld [vmem:[%s239 + $0x60] sm:$0xff]
      %v263 = vld [vmem:[%s239 + $0x68] sm:$0xff]
      %v264 = vld [vmem:[%s239 + $0x70] sm:$0xff]
      %v265 = vld [vmem:[%s239 + $0x78] sm:$0xff]
      %v266 = vld [vmem:[%s239 + $0x80] sm:$0xff]
      %v267 = vld [vmem:[%s239 + $0x88] sm:$0xff]
      %v268 = vld [vmem:[%s239 + $0x90] sm:$0xff]
      %v269 = vld [vmem:[%s239 + $0x98] sm:$0xff]
      %v270 = vld [vmem:[%s239 + $0xa0] sm:$0xff]
      %v271 = vld [vmem:[%s239 + $0xa8] sm:$0xff]
      %v272 = vld [vmem:[%s239 + $0xb0] sm:$0xff]
      %v273 = vld [vmem:[%s239 + $0xb8] sm:$0xff]
      %v274 = vld [vmem:[%s239 + $0xc0] sm:$0xff]
      %v275 = vld [vmem:[%s239 + $0xc8] sm:$0xff]
      %v276 = vld [vmem:[%s239 + $0xd0] sm:$0xff]
      %v277 = vld [vmem:[%s239 + $0xd8] sm:$0xff]
      %v278 = vld [vmem:[%s239 + $0xe0] sm:$0xff]
      %v279 = vld [vmem:[%s239 + $0xe8] sm:$0xff]
      %v280 = vld [vmem:[%s239 + $0xf0] sm:$0xff]
      %v281 = vld [vmem:[%s239 + $0xf8] sm:$0xff]
      %v282 = vld [vmem:[%s239 + $0x100] sm:$0xff]
      %v283 = vld [vmem:[%s239 + $0x108] sm:$0xff]
      %v284 = vld [vmem:[%s239 + $0x110] sm:$0xff]
      %v285 = vld [vmem:[%s239 + $0x118] sm:$0xff]
      %v286 = vld [vmem:[%s239 + $0x120] sm:$0xff]
      %v287 = vld [vmem:[%s239 + $0x128] sm:$0xff]
      %v288 = vld [vmem:[%s239 + $0x130] sm:$0xff]
      %v289 = vld [vmem:[%s239 + $0x138] sm:$0xff]
      %v290 = vld [vmem:[%s239 + $0x140] sm:$0xff]
      %v291 = vld [vmem:[%s239 + $0x148] sm:$0xff]
      %v292 = vld [vmem:[%s239 + $0x150] sm:$0xff]
      %v293 = vld [vmem:[%s239 + $0x158] sm:$0xff]
      %v294 = vld [vmem:[%s239 + $0x160] sm:$0xff]
      %v295 = vld [vmem:[%s239 + $0x168] sm:$0xff]
      %v296 = vld [vmem:[%s239 + $0x170] sm:$0xff]
      %v297 = vld [vmem:[%s239 + $0x178] sm:$0xff]
      %v298 = vld [vmem:[%s239 + $0x180] sm:$0xff]
      %v299 = vld [vmem:[%s239 + $0x188] sm:$0xff]
      %v300 = vld [vmem:[%s239 + $0x190] sm:$0xff]
      %v301 = vld [vmem:[%s239 + $0x198] sm:$0xff]
      %v302 = vld [vmem:[%s239 + $0x1a0] sm:$0xff]
      %v303 = vld [vmem:[%s239 + $0x1a8] sm:$0xff]
      %v304 = vld [vmem:[%s239 + $0x1b0] sm:$0xff]
      %v305 = vld [vmem:[%s239 + $0x1b8] sm:$0xff]
      %v306 = vld [vmem:[%s239 + $0x1c0] sm:$0xff]
      %v307 = vld [vmem:[%s239 + $0x1c8] sm:$0xff]
      %v308 = vld [vmem:[%s239 + $0x1d0] sm:$0xff]
      %v309 = vld [vmem:[%s239 + $0x1d8] sm:$0xff]
      %v310 = vld [vmem:[%s239 + $0x1e0] sm:$0xff]
      %v311 = vld [vmem:[%s239 + $0x1e8] sm:$0xff]
      %v312 = vld [vmem:[%s239 + $0x1f0] sm:$0xff]
      %v313 = vld [vmem:[%s239 + $0x1f8] sm:$0xff]
      %v314 = vld [vmem:[%s239 + $0x200] sm:$0xff]
      %v315 = vld [vmem:[%s239 + $0x208] sm:$0xff]
      %v316 = vld [vmem:[%s239 + $0x210] sm:$0xff]
      %v317 = vld [vmem:[%s239 + $0x218] sm:$0xff]
      %v318 = vld [vmem:[%s239 + $0x220] sm:$0xff]
      %v319 = vld [vmem:[%s239 + $0x228] sm:$0xff]
      %v320 = vld [vmem:[%s239 + $0x230] sm:$0xff]
      %v321 = vld [vmem:[%s239 + $0x238] sm:$0xff]
      %v322 = vld [vmem:[%s239 + $0x240] sm:$0xff]
      %v323 = vld [vmem:[%s239 + $0x248] sm:$0xff]
      %v324 = vld [vmem:[%s239 + $0x250] sm:$0xff]
      %v325 = vld [vmem:[%s239 + $0x258] sm:$0xff]
      %v326 = vld [vmem:[%s239 + $0x260] sm:$0xff]
      %v327 = vld [vmem:[%s239 + $0x268] sm:$0xff]
      %v328 = vld [vmem:[%s239 + $0x270] sm:$0xff]
      %v329 = vld [vmem:[%s239 + $0x278] sm:$0xff]
      %v330 = vld [vmem:[%s239 + $0x280] sm:$0xff]
      %v331 = vld [vmem:[%s239 + $0x288] sm:$0xff]
      %v332 = vld [vmem:[%s239 + $0x290] sm:$0xff]
      %v333 = vld [vmem:[%s239 + $0x298] sm:$0xff]
      %v334 = vld [vmem:[%s239 + $0x2a0] sm:$0xff]
      %v335 = vld [vmem:[%s239 + $0x2a8] sm:$0xff]
      %v336 = vld [vmem:[%s239 + $0x2b0] sm:$0xff]
      %v337 = vld [vmem:[%s239 + $0x2b8] sm:$0xff]
      %v338 = vld [vmem:[%s239 + $0x2c0] sm:$0xff]
      %v339 = vld [vmem:[%s239 + $0x2c8] sm:$0xff]
      %v340 = vld [vmem:[%s239 + $0x2d0] sm:$0xff]
      %v341 = vld [vmem:[%s239 + $0x2d8] sm:$0xff]
      %v342 = vld [vmem:[%s239 + $0x2e0] sm:$0xff]
      %v343 = vld [vmem:[%s239 + $0x2e8] sm:$0xff]
      %v344 = vld [vmem:[%s239 + $0x2f0] sm:$0xff]
      %v345 = vld [vmem:[%s239 + $0x2f8] sm:$0xff]
      %v346 = vld [vmem:[%s239 + $0x300] sm:$0xff]
      %v347 = vld [vmem:[%s239 + $0x308] sm:$0xff]
      %v348 = vld [vmem:[%s239 + $0x310] sm:$0xff]
      %v349 = vld [vmem:[%s239 + $0x318] sm:$0xff]
      %v350 = vld [vmem:[%s239 + $0x320] sm:$0xff]
      %v351 = vld [vmem:[%s239 + $0x328] sm:$0xff]
      %v352 = vld [vmem:[%s239 + $0x330] sm:$0xff]
      %v353 = vld [vmem:[%s239 + $0x338] sm:$0xff]
      %v354 = vld [vmem:[%s239 + $0x340] sm:$0xff]
      %v355 = vld [vmem:[%s239 + $0x348] sm:$0xff]
      %v356 = vld [vmem:[%s239 + $0x350] sm:$0xff]
      %v357 = vld [vmem:[%s239 + $0x358] sm:$0xff]
      %v358 = vld [vmem:[%s239 + $0x360] sm:$0xff]
      %v359 = vld [vmem:[%s239 + $0x368] sm:$0xff]
      %v360 = vld [vmem:[%s239 + $0x370] sm:$0xff]
      %v361 = vld [vmem:[%s239 + $0x378] sm:$0xff]
      %v362 = vld [vmem:[%s239 + $0x380] sm:$0xff]
      %v363 = vld [vmem:[%s239 + $0x388] sm:$0xff]
      %v364 = vld [vmem:[%s239 + $0x390] sm:$0xff]
      %v365 = vld [vmem:[%s239 + $0x398] sm:$0xff]
      %v366 = vld [vmem:[%s239 + $0x3a0] sm:$0xff]
      %v367 = vld [vmem:[%s239 + $0x3a8] sm:$0xff]
      %v368 = vld [vmem:[%s239 + $0x3b0] sm:$0xff]
      %v369 = vld [vmem:[%s239 + $0x3b8] sm:$0xff]
      %v370 = vld [vmem:[%s239 + $0x3c0] sm:$0xff]
      %v371 = vld [vmem:[%s239 + $0x3c8] sm:$0xff]
      %v372 = vld [vmem:[%s239 + $0x3d0] sm:$0xff]
      %v373 = vld [vmem:[%s239 + $0x3d8] sm:$0xff]
      %v378 = vunpack.c.l.b16 %v246
      %v379 = vunpack.c.l.b16 %v247
      %v380 = vunpack.c.l.b16 %v248
      %v381 = vunpack.c.l.b16 %v249
      %v382 = vpack.c.b16 %v379, %v378
      %v383 = vpack.c.b16 %v381, %v380
      %v508 = vunpack.c.l.b16 %v250
      %v509 = vunpack.c.h.b16 %v250
      %v510 = vunpack.c.l.b16 %v251
      %v511 = vunpack.c.h.b16 %v251
      %v512 = vunpack.c.l.b16 %v252
      %v513 = vunpack.c.h.b16 %v252
      %v514 = vunpack.c.l.b16 %v253
      %v515 = vunpack.c.h.b16 %v253
      %v516 = vunpack.c.l.b16 %v254
      %v517 = vunpack.c.h.b16 %v254
      %v518 = vunpack.c.l.b16 %v255
      %v519 = vunpack.c.h.b16 %v255
      %v520 = vunpack.c.l.b16 %v256
      %v521 = vunpack.c.h.b16 %v256
      %v522 = vunpack.c.l.b16 %v257
      %v523 = vunpack.c.h.b16 %v257
      %v524 = vunpack.c.l.b16 %v258
      %v525 = vunpack.c.h.b16 %v258
      %v526 = vunpack.c.l.b16 %v259
      %v527 = vunpack.c.h.b16 %v259
      %v528 = vunpack.c.l.b16 %v260
      %v529 = vunpack.c.h.b16 %v260
      %v530 = vunpack.c.l.b16 %v261
      %v531 = vunpack.c.h.b16 %v261
      %v532 = vunpack.c.l.b16 %v262
      %v533 = vunpack.c.h.b16 %v262
      %v534 = vunpack.c.l.b16 %v263
      %v535 = vunpack.c.h.b16 %v263
      %v536 = vunpack.c.l.b16 %v264
      %v537 = vunpack.c.h.b16 %v264
      %v538 = vunpack.c.l.b16 %v265
      %v539 = vunpack.c.h.b16 %v265
      %v540 = vunpack.c.l.b16 %v266
      %v541 = vunpack.c.h.b16 %v266
      %v542 = vunpack.c.l.b16 %v267
      %v543 = vunpack.c.h.b16 %v267
      %v544 = vunpack.c.l.b16 %v268
      %v545 = vunpack.c.h.b16 %v268
      %v546 = vunpack.c.l.b16 %v269
      %v547 = vunpack.c.h.b16 %v269
      %v548 = vunpack.c.l.b16 %v270
      %v549 = vunpack.c.h.b16 %v270
      %v550 = vunpack.c.l.b16 %v271
      %v551 = vunpack.c.h.b16 %v271
      %v552 = vunpack.c.l.b16 %v272
      %v553 = vunpack.c.h.b16 %v272
      %v554 = vunpack.c.l.b16 %v273
      %v555 = vunpack.c.h.b16 %v273
      %v556 = vunpack.c.l.b16 %v274
      %v557 = vunpack.c.h.b16 %v274
      %v558 = vunpack.c.l.b16 %v275
      %v559 = vunpack.c.h.b16 %v275
      %v560 = vunpack.c.l.b16 %v276
      %v561 = vunpack.c.h.b16 %v276
      %v562 = vunpack.c.l.b16 %v277
      %v563 = vunpack.c.h.b16 %v277
      %v564 = vunpack.c.l.b16 %v278
      %v565 = vunpack.c.h.b16 %v278
      %v566 = vunpack.c.l.b16 %v279
      %v567 = vunpack.c.h.b16 %v279
      %v568 = vunpack.c.l.b16 %v280
      %v569 = vunpack.c.h.b16 %v280
      %v570 = vunpack.c.l.b16 %v281
      %v571 = vunpack.c.h.b16 %v281
      %v572 = vunpack.c.l.b16 %v282
      %v573 = vunpack.c.h.b16 %v282
      %v574 = vunpack.c.l.b16 %v283
      %v575 = vunpack.c.h.b16 %v283
      %v576 = vunpack.c.l.b16 %v284
      %v577 = vunpack.c.h.b16 %v284
      %v578 = vunpack.c.l.b16 %v285
      %v579 = vunpack.c.h.b16 %v285
      %v580 = vunpack.c.l.b16 %v286
      %v581 = vunpack.c.h.b16 %v286
      %v582 = vunpack.c.l.b16 %v287
      %v583 = vunpack.c.h.b16 %v287
      %v584 = vunpack.c.l.b16 %v288
      %v585 = vunpack.c.h.b16 %v288
      %v586 = vunpack.c.l.b16 %v289
      %v587 = vunpack.c.h.b16 %v289
      %v588 = vunpack.c.l.b16 %v290
      %v589 = vunpack.c.h.b16 %v290
      %v590 = vunpack.c.l.b16 %v291
      %v591 = vunpack.c.h.b16 %v291
      %v592 = vunpack.c.l.b16 %v292
      %v593 = vunpack.c.h.b16 %v292
      %v594 = vunpack.c.l.b16 %v293
      %v595 = vunpack.c.h.b16 %v293
      %v596 = vunpack.c.l.b16 %v294
      %v597 = vunpack.c.h.b16 %v294
      %v598 = vunpack.c.l.b16 %v295
      %v599 = vunpack.c.h.b16 %v295
      %v600 = vunpack.c.l.b16 %v296
      %v601 = vunpack.c.h.b16 %v296
      %v602 = vunpack.c.l.b16 %v297
      %v603 = vunpack.c.h.b16 %v297
      %v604 = vunpack.c.l.b16 %v298
      %v605 = vunpack.c.h.b16 %v298
      %v606 = vunpack.c.l.b16 %v299
      %v607 = vunpack.c.h.b16 %v299
      %v608 = vunpack.c.l.b16 %v300
      %v609 = vunpack.c.h.b16 %v300
      %v610 = vunpack.c.l.b16 %v301
      %v611 = vunpack.c.h.b16 %v301
      %v612 = vunpack.c.l.b16 %v302
      %v613 = vunpack.c.h.b16 %v302
      %v614 = vunpack.c.l.b16 %v303
      %v615 = vunpack.c.h.b16 %v303
      %v616 = vunpack.c.l.b16 %v304
      %v617 = vunpack.c.h.b16 %v304
      %v618 = vunpack.c.l.b16 %v305
      %v619 = vunpack.c.h.b16 %v305
      %v620 = vunpack.c.l.b16 %v306
      %v621 = vunpack.c.h.b16 %v306
      %v622 = vunpack.c.l.b16 %v307
      %v623 = vunpack.c.h.b16 %v307
      %v624 = vunpack.c.l.b16 %v308
      %v625 = vunpack.c.h.b16 %v308
      %v626 = vunpack.c.l.b16 %v309
      %v627 = vunpack.c.h.b16 %v309
      %v628 = vunpack.c.l.b16 %v310
      %v629 = vunpack.c.h.b16 %v310
      %v630 = vunpack.c.l.b16 %v311
      %v631 = vunpack.c.h.b16 %v311
      %v632 = vunpack.c.l.b16 %v312
      %v633 = vunpack.c.h.b16 %v312
      %v634 = vunpack.c.l.b16 %v313
      %v635 = vunpack.c.h.b16 %v313
      %v636 = vunpack.c.l.b16 %v314
      %v637 = vunpack.c.h.b16 %v314
      %v638 = vunpack.c.l.b16 %v315
      %v639 = vunpack.c.h.b16 %v315
      %v640 = vunpack.c.l.b16 %v316
      %v641 = vunpack.c.h.b16 %v316
      %v642 = vunpack.c.l.b16 %v317
      %v643 = vunpack.c.h.b16 %v317
      %v644 = vunpack.c.l.b16 %v318
      %v645 = vunpack.c.h.b16 %v318
      %v646 = vunpack.c.l.b16 %v319
      %v647 = vunpack.c.h.b16 %v319
      %v648 = vunpack.c.l.b16 %v320
      %v649 = vunpack.c.h.b16 %v320
      %v650 = vunpack.c.l.b16 %v321
      %v651 = vunpack.c.h.b16 %v321
      %v652 = vunpack.c.l.b16 %v322
      %v653 = vunpack.c.h.b16 %v322
      %v654 = vunpack.c.l.b16 %v323
      %v655 = vunpack.c.h.b16 %v323
      %v656 = vunpack.c.l.b16 %v324
      %v657 = vunpack.c.h.b16 %v324
      %v658 = vunpack.c.l.b16 %v325
      %v659 = vunpack.c.h.b16 %v325
      %v660 = vunpack.c.l.b16 %v326
      %v661 = vunpack.c.h.b16 %v326
      %v662 = vunpack.c.l.b16 %v327
      %v663 = vunpack.c.h.b16 %v327
      %v664 = vunpack.c.l.b16 %v328
      %v665 = vunpack.c.h.b16 %v328
      %v666 = vunpack.c.l.b16 %v329
      %v667 = vunpack.c.h.b16 %v329
      %v668 = vunpack.c.l.b16 %v330
      %v669 = vunpack.c.h.b16 %v330
      %v670 = vunpack.c.l.b16 %v331
      %v671 = vunpack.c.h.b16 %v331
      %v672 = vunpack.c.l.b16 %v332
      %v673 = vunpack.c.h.b16 %v332
      %v674 = vunpack.c.l.b16 %v333
      %v675 = vunpack.c.h.b16 %v333
      %v676 = vunpack.c.l.b16 %v334
      %v677 = vunpack.c.h.b16 %v334
      %v678 = vunpack.c.l.b16 %v335
      %v679 = vunpack.c.h.b16 %v335
      %v680 = vunpack.c.l.b16 %v336
      %v681 = vunpack.c.h.b16 %v336
      %v682 = vunpack.c.l.b16 %v337
      %v683 = vunpack.c.h.b16 %v337
      %v684 = vunpack.c.l.b16 %v338
      %v685 = vunpack.c.h.b16 %v338
      %v686 = vunpack.c.l.b16 %v339
      %v687 = vunpack.c.h.b16 %v339
      %v688 = vunpack.c.l.b16 %v340
      %v689 = vunpack.c.h.b16 %v340
      %v690 = vunpack.c.l.b16 %v341
      %v691 = vunpack.c.h.b16 %v341
      %v692 = vunpack.c.l.b16 %v342
      %v693 = vunpack.c.h.b16 %v342
      %v694 = vunpack.c.l.b16 %v343
      %v695 = vunpack.c.h.b16 %v343
      %v696 = vunpack.c.l.b16 %v344
      %v697 = vunpack.c.h.b16 %v344
      %v698 = vunpack.c.l.b16 %v345
      %v699 = vunpack.c.h.b16 %v345
      %v700 = vunpack.c.l.b16 %v346
      %v701 = vunpack.c.h.b16 %v346
      %v702 = vunpack.c.l.b16 %v347
      %v703 = vunpack.c.h.b16 %v347
      %v704 = vunpack.c.l.b16 %v348
      %v705 = vunpack.c.h.b16 %v348
      %v706 = vunpack.c.l.b16 %v349
      %v707 = vunpack.c.h.b16 %v349
      %v708 = vunpack.c.l.b16 %v350
      %v709 = vunpack.c.h.b16 %v350
      %v710 = vunpack.c.l.b16 %v351
      %v711 = vunpack.c.h.b16 %v351
      %v712 = vunpack.c.l.b16 %v352
      %v713 = vunpack.c.h.b16 %v352
      %v714 = vunpack.c.l.b16 %v353
      %v715 = vunpack.c.h.b16 %v353
      %v716 = vunpack.c.l.b16 %v354
      %v717 = vunpack.c.h.b16 %v354
      %v718 = vunpack.c.l.b16 %v355
      %v719 = vunpack.c.h.b16 %v355
      %v720 = vunpack.c.l.b16 %v356
      %v721 = vunpack.c.h.b16 %v356
      %v722 = vunpack.c.l.b16 %v357
      %v723 = vunpack.c.h.b16 %v357
      %v724 = vunpack.c.l.b16 %v358
      %v725 = vunpack.c.h.b16 %v358
      %v726 = vunpack.c.l.b16 %v359
      %v727 = vunpack.c.h.b16 %v359
      %v728 = vunpack.c.l.b16 %v360
      %v729 = vunpack.c.h.b16 %v360
      %v730 = vunpack.c.l.b16 %v361
      %v731 = vunpack.c.h.b16 %v361
      %v732 = vunpack.c.l.b16 %v362
      %v733 = vunpack.c.h.b16 %v362
      %v734 = vunpack.c.l.b16 %v363
      %v735 = vunpack.c.h.b16 %v363
      %v736 = vunpack.c.l.b16 %v364
      %v737 = vunpack.c.h.b16 %v364
      %v738 = vunpack.c.l.b16 %v365
      %v739 = vunpack.c.h.b16 %v365
      %v740 = vunpack.c.l.b16 %v366
      %v741 = vunpack.c.h.b16 %v366
      %v742 = vunpack.c.l.b16 %v367
      %v743 = vunpack.c.h.b16 %v367
      %v744 = vunpack.c.l.b16 %v368
      %v745 = vunpack.c.h.b16 %v368
      %v746 = vunpack.c.l.b16 %v369
      %v747 = vunpack.c.h.b16 %v369
      %v748 = vunpack.c.l.b16 %v370
      %v749 = vunpack.c.h.b16 %v370
      %v750 = vunpack.c.l.b16 %v371
      %v751 = vunpack.c.h.b16 %v371
      %v752 = vunpack.c.l.b16 %v372
      %v753 = vunpack.c.h.b16 %v372
      %v754 = vunpack.c.l.b16 %v373
      %v755 = vunpack.c.h.b16 %v373
      %v756 = vpack.c.b16 %v570, %v508
      %v757 = vpack.c.b16 %v571, %v509
      %v758 = vpack.c.b16 %v572, %v510
      %v759 = vpack.c.b16 %v573, %v511
      %v760 = vpack.c.b16 %v574, %v512
      %v761 = vpack.c.b16 %v575, %v513
      %v762 = vpack.c.b16 %v576, %v514
      %v763 = vpack.c.b16 %v577, %v515
      %v764 = vpack.c.b16 %v578, %v516
      %v765 = vpack.c.b16 %v579, %v517
      %v766 = vpack.c.b16 %v580, %v518
      %v767 = vpack.c.b16 %v581, %v519
      %v768 = vpack.c.b16 %v582, %v520
      %v769 = vpack.c.b16 %v583, %v521
      %v770 = vpack.c.b16 %v584, %v522
      %v771 = vpack.c.b16 %v585, %v523
      %v772 = vpack.c.b16 %v586, %v524
      %v773 = vpack.c.b16 %v587, %v525
      %v774 = vpack.c.b16 %v588, %v526
      %v775 = vpack.c.b16 %v589, %v527
      %v776 = vpack.c.b16 %v590, %v528
      %v777 = vpack.c.b16 %v591, %v529
      %v778 = vpack.c.b16 %v592, %v530
      %v779 = vpack.c.b16 %v593, %v531
      %v780 = vpack.c.b16 %v594, %v532
      %v781 = vpack.c.b16 %v595, %v533
      %v782 = vpack.c.b16 %v596, %v534
      %v783 = vpack.c.b16 %v597, %v535
      %v784 = vpack.c.b16 %v598, %v536
      %v785 = vpack.c.b16 %v599, %v537
      %v786 = vpack.c.b16 %v600, %v538
      %v787 = vpack.c.b16 %v601, %v539
      %v788 = vpack.c.b16 %v602, %v540
      %v789 = vpack.c.b16 %v603, %v541
      %v790 = vpack.c.b16 %v604, %v542
      %v791 = vpack.c.b16 %v605, %v543
      %v792 = vpack.c.b16 %v606, %v544
      %v793 = vpack.c.b16 %v607, %v545
      %v794 = vpack.c.b16 %v608, %v546
      %v795 = vpack.c.b16 %v609, %v547
      %v796 = vpack.c.b16 %v610, %v548
      %v797 = vpack.c.b16 %v611, %v549
      %v798 = vpack.c.b16 %v612, %v550
      %v799 = vpack.c.b16 %v613, %v551
      %v800 = vpack.c.b16 %v614, %v552
      %v801 = vpack.c.b16 %v615, %v553
      %v802 = vpack.c.b16 %v616, %v554
      %v803 = vpack.c.b16 %v617, %v555
      %v804 = vpack.c.b16 %v618, %v556
      %v805 = vpack.c.b16 %v619, %v557
      %v806 = vpack.c.b16 %v620, %v558
      %v807 = vpack.c.b16 %v621, %v559
      %v808 = vpack.c.b16 %v622, %v560
      %v809 = vpack.c.b16 %v623, %v561
      %v810 = vpack.c.b16 %v624, %v562
      %v811 = vpack.c.b16 %v625, %v563
      %v812 = vpack.c.b16 %v626, %v564
      %v813 = vpack.c.b16 %v627, %v565
      %v814 = vpack.c.b16 %v628, %v566
      %v815 = vpack.c.b16 %v629, %v567
      %v816 = vpack.c.b16 %v630, %v568
      %v817 = vpack.c.b16 %v631, %v569
      %v818 = vpack.c.b16 %v694, %v632
      %v819 = vpack.c.b16 %v695, %v633
      %v820 = vpack.c.b16 %v696, %v634
      %v821 = vpack.c.b16 %v697, %v635
      %v822 = vpack.c.b16 %v698, %v636
      %v823 = vpack.c.b16 %v699, %v637
      %v824 = vpack.c.b16 %v700, %v638
      %v825 = vpack.c.b16 %v701, %v639
      %v826 = vpack.c.b16 %v702, %v640
      %v827 = vpack.c.b16 %v703, %v641
      %v828 = vpack.c.b16 %v704, %v642
      %v829 = vpack.c.b16 %v705, %v643
      %v830 = vpack.c.b16 %v706, %v644
      %v831 = vpack.c.b16 %v707, %v645
      %v832 = vpack.c.b16 %v708, %v646
      %v833 = vpack.c.b16 %v709, %v647
      %v834 = vpack.c.b16 %v710, %v648
      %v835 = vpack.c.b16 %v711, %v649
      %v836 = vpack.c.b16 %v712, %v650
      %v837 = vpack.c.b16 %v713, %v651
      %v838 = vpack.c.b16 %v714, %v652
      %v839 = vpack.c.b16 %v715, %v653
      %v840 = vpack.c.b16 %v716, %v654
      %v841 = vpack.c.b16 %v717, %v655
      %v842 = vpack.c.b16 %v718, %v656
      %v843 = vpack.c.b16 %v719, %v657
      %v844 = vpack.c.b16 %v720, %v658
      %v845 = vpack.c.b16 %v721, %v659
      %v846 = vpack.c.b16 %v722, %v660
      %v847 = vpack.c.b16 %v723, %v661
      %v848 = vpack.c.b16 %v724, %v662
      %v849 = vpack.c.b16 %v725, %v663
      %v850 = vpack.c.b16 %v726, %v664
      %v851 = vpack.c.b16 %v727, %v665
      %v852 = vpack.c.b16 %v728, %v666
      %v853 = vpack.c.b16 %v729, %v667
      %v854 = vpack.c.b16 %v730, %v668
      %v855 = vpack.c.b16 %v731, %v669
      %v856 = vpack.c.b16 %v732, %v670
      %v857 = vpack.c.b16 %v733, %v671
      %v858 = vpack.c.b16 %v734, %v672
      %v859 = vpack.c.b16 %v735, %v673
      %v860 = vpack.c.b16 %v736, %v674
      %v861 = vpack.c.b16 %v737, %v675
      %v862 = vpack.c.b16 %v738, %v676
      %v863 = vpack.c.b16 %v739, %v677
      %v864 = vpack.c.b16 %v740, %v678
      %v865 = vpack.c.b16 %v741, %v679
      %v866 = vpack.c.b16 %v742, %v680
      %v867 = vpack.c.b16 %v743, %v681
      %v868 = vpack.c.b16 %v744, %v682
      %v869 = vpack.c.b16 %v745, %v683
      %v870 = vpack.c.b16 %v746, %v684
      %v871 = vpack.c.b16 %v747, %v685
      %v872 = vpack.c.b16 %v748, %v686
      %v873 = vpack.c.b16 %v749, %v687
      %v874 = vpack.c.b16 %v750, %v688
      %v875 = vpack.c.b16 %v751, %v689
      %v876 = vpack.c.b16 %v752, %v690
      %v877 = vpack.c.b16 %v753, %v691
      %v878 = vpack.c.b16 %v754, %v692
      %v879 = vpack.c.b16 %v755, %v693
      %vm1004 = vcmask 261120
      %v1006 = vsel %vm1004, %v382, 0
      %v1009 = vsel %vm1004, %v383, 0
      %1011 = vmatprep.subr.bf16.mxu0 %v757
      %1012 = vmatpush1.bf16.msra.mxu0 %v756
      %1013 = vmatprep.subr.bf16.mxu0 %v819
      %1014 = vmatpush1.bf16.msra.mxu0 %v818
      %1015 = vmatprep.subr.bf16.mxu0 0
      %1016 = vmatpush1.bf16.msra.mxu0 0
      %1017 = vmatprep.subr.bf16.mxu0 0
      %1018 = vmatpush1.bf16.msra.mxu0 0
      %1019 = vmatprep.subr.bf16.mxu0 0
      %1020 = vmatpush1.bf16.msra.mxu0 0
      %1021 = vmatprep.subr.bf16.mxu0 0
      %1022 = vmatpush1.bf16.msra.mxu0 0
      %1023 = vmatprep.subr.bf16.mxu0 0
      %1024 = vmatpush1.bf16.msra.mxu0 0
      %1025 = vmatprep.subr.bf16.mxu0 0
      %1026 = vmatpush1.bf16.msra.mxu0 0
      %1027 = vmatprep.subr.bf16.mxu0 0
      %1028 = vmatpush1.bf16.msra.mxu0 0
      %1029 = vmatprep.subr.bf16.mxu0 0
      %1030 = vmatpush1.bf16.msra.mxu0 0
      %1031 = vmatprep.subr.bf16.mxu0 0
      %1032 = vmatpush1.bf16.msra.mxu0 0
      %1033 = vmatprep.subr.bf16.mxu0 0
      %1034 = vmatpush1.bf16.msra.mxu0 0
      %1035 = vmatprep.subr.bf16.mxu0 0
      %1036 = vmatpush1.bf16.msra.mxu0 0
      %1037 = vmatprep.subr.bf16.mxu0 0
      %1038 = vmatpush1.bf16.msra.mxu0 0
      %1039 = vmatprep.subr.bf16.mxu0 0
      %1040 = vmatpush1.bf16.msra.mxu0 0
      %1041 = vmatprep.subr.bf16.mxu0 0
      %1042 = vmatpush1.bf16.msra.mxu0 0
      %1043 = vmatprep.mubr.bf16.mxu0 0
      %1044 = vmatmul.mubr.bf16.gmra.mrb[0].mxu0 %v1006
      %v1045 = vpop.f32.mrb[0].mxu0
      %v1046 = vadd.f32 0.0, %v1045
      %v1047 = vpop.f32.mrb[0].mxu0
      %v1048 = vadd.f32 0.0, %v1047
      %v1049 = vpop.f32.mrb[0].mxu0
      %v1050 = vadd.f32 0.0, %v1049
      %v1051 = vpop.f32.mrb[0].mxu0
      %v1052 = vadd.f32 0.0, %v1051
      %1053 = vmatprep.mubr.bf16.mxu0 0
      %1054 = vmatmul.mubr.bf16.gmra.mrb[0].mxu0 %v1009
      %v1055 = vpop.f32.mrb[0].mxu0
      %v1056 = vadd.f32 0.0, %v1055
      %v1057 = vpop.f32.mrb[0].mxu0
      %v1058 = vadd.f32 0.0, %v1057
      %v1059 = vpop.f32.mrb[0].mxu0
      %v1060 = vadd.f32 0.0, %v1059
      %v1061 = vpop.f32.mrb[0].mxu0
      %v1062 = vadd.f32 0.0, %v1061
      %1063 = vdwg.mxu0
      %1064 = vmatprep.subr.bf16.mxu0 %v759
      %1065 = vmatpush1.bf16.msra.mxu0 %v758
      %1066 = vmatprep.subr.bf16.mxu0 %v821
      %1067 = vmatpush1.bf16.msra.mxu0 %v820
      %1068 = vmatprep.subr.bf16.mxu0 0
      %1069 = vmatpush1.bf16.msra.mxu0 0
      %1070 = vmatprep.subr.bf16.mxu0 0
      %1071 = vmatpush1.bf16.msra.mxu0 0
      %1072 = vmatprep.subr.bf16.mxu0 0
      %1073 = vmatpush1.bf16.msra.mxu0 0
      %1074 = vmatprep.subr.bf16.mxu0 0
      %1075 = vmatpush1.bf16.msra.mxu0 0
      %1076 = vmatprep.subr.bf16.mxu0 0
      %1077 = vmatpush1.bf16.msra.mxu0 0
      %1078 = vmatprep.subr.bf16.mxu0 0
      %1079 = vmatpush1.bf16.msra.mxu0 0
      %1080 = vmatprep.subr.bf16.mxu0 0
      %1081 = vmatpush1.bf16.msra.mxu0 0
      %1082 = vmatprep.subr.bf16.mxu0 0
      %1083 = vmatpush1.bf16.msra.mxu0 0
      %1084 = vmatprep.subr.bf16.mxu0 0
      %1085 = vmatpush1.bf16.msra.mxu0 0
      %1086 = vmatprep.subr.bf16.mxu0 0
      %1087 = vmatpush1.bf16.msra.mxu0 0
      %1088 = vmatprep.subr.bf16.mxu0 0
      %1089 = vmatpush1.bf16.msra.mxu0 0
      %1090 = vmatprep.subr.bf16.mxu0 0
      %1091 = vmatpush1.bf16.msra.mxu0 0
      %1092 = vmatprep.subr.bf16.mxu0 0
      %1093 = vmatpush1.bf16.msra.mxu0 0
      %1094 = vmatprep.subr.bf16.mxu0 0
      %1095 = vmatpush1.bf16.msra.mxu0 0
      %1096 = vmatprep.mubr.bf16.mxu0 0
      %1097 = vmatmul.mubr.bf16.gmra.mrb[0].mxu0 %v1006
      %v1098 = vpop.f32.mrb[0].mxu0
      %v1099 = vadd.f32 0.0, %v1098
      %v1100 = vpop.f32.mrb[0].mxu0
      %v1101 = vadd.f32 0.0, %v1100
      %v1102 = vpop.f32.mrb[0].mxu0
      %v1103 = vadd.f32 0.0, %v1102
      %v1104 = vpop.f32.mrb[0].mxu0
      %v1105 = vadd.f32 0.0, %v1104
      %1106 = vmatprep.mubr.bf16.mxu0 0
      %1107 = vmatmul.mubr.bf16.gmra.mrb[0].mxu0 %v1009
      %v1108 = vpop.f32.mrb[0].mxu0
      %v1109 = vadd.f32 0.0, %v1108
      %v1110 = vpop.f32.mrb[0].mxu0
      %v1111 = vadd.f32 0.0, %v1110
      %v1112 = vpop.f32.mrb[0].mxu0
      %v1113 = vadd.f32 0.0, %v1112
      %v1114 = vpop.f32.mrb[0].mxu0
      %v1115 = vadd.f32 0.0, %v1114
      %1116 = vdwg.mxu0
      %1117 = vmatprep.subr.bf16.mxu0 %v761
      %1118 = vmatpush1.bf16.msra.mxu0 %v760
      %1119 = vmatprep.subr.bf16.mxu0 %v823
      %1120 = vmatpush1.bf16.msra.mxu0 %v822
      %1121 = vmatprep.subr.bf16.mxu0 0
      %1122 = vmatpush1.bf16.msra.mxu0 0
      %1123 = vmatprep.subr.bf16.mxu0 0
      %1124 = vmatpush1.bf16.msra.mxu0 0
      %1125 = vmatprep.subr.bf16.mxu0 0
      %1126 = vmatpush1.bf16.msra.mxu0 0
      %1127 = vmatprep.subr.bf16.mxu0 0
      %1128 = vmatpush1.bf16.msra.mxu0 0
      %1129 = vmatprep.subr.bf16.mxu0 0
      %1130 = vmatpush1.bf16.msra.mxu0 0
      %1131 = vmatprep.subr.bf16.mxu0 0
      %1132 = vmatpush1.bf16.msra.mxu0 0
      %1133 = vmatprep.subr.bf16.mxu0 0
      %1134 = vmatpush1.bf16.msra.mxu0 0
      %1135 = vmatprep.subr.bf16.mxu0 0
      %1136 = vmatpush1.bf16.msra.mxu0 0
      %1137 = vmatprep.subr.bf16.mxu0 0
      %1138 = vmatpush1.bf16.msra.mxu0 0
      %1139 = vmatprep.subr.bf16.mxu0 0
      %1140 = vmatpush1.bf16.msra.mxu0 0
      %1141 = vmatprep.subr.bf16.mxu0 0
      %1142 = vmatpush1.bf16.msra.mxu0 0
      %1143 = vmatprep.subr.bf16.mxu0 0
      %1144 = vmatpush1.bf16.msra.mxu0 0
      %1145 = vmatprep.subr.bf16.mxu0 0
      %1146 = vmatpush1.bf16.msra.mxu0 0
      %1147 = vmatprep.subr.bf16.mxu0 0
      %1148 = vmatpush1.bf16.msra.mxu0 0
      %1149 = vmatprep.mubr.bf16.mxu0 0
      %1150 = vmatmul.mubr.bf16.gmra.mrb[0].mxu0 %v1006
      %v1151 = vpop.f32.mrb[0].mxu0
      %v1152 = vadd.f32 0.0, %v1151
      %v1153 = vpop.f32.mrb[0].mxu0
      %v1154 = vadd.f32 0.0, %v1153
      %v1155 = vpop.f32.mrb[0].mxu0
      %v1156 = vadd.f32 0.0, %v1155
      %v1157 = vpop.f32.mrb[0].mxu0
      %v1158 = vadd.f32 0.0, %v1157
      %1159 = vmatprep.mubr.bf16.mxu0 0
      %1160 = vmatmul.mubr.bf16.gmra.mrb[0].mxu0 %v1009
      %v1161 = vpop.f32.mrb[0].mxu0
      %v1162 = vadd.f32 0.0, %v1161
      %v1163 = vpop.f32.mrb[0].mxu0
      %v1164 = vadd.f32 0.0, %v1163
      %v1165 = vpop.f32.mrb[0].mxu0
      %v1166 = vadd.f32 0.0, %v1165
      %v1167 = vpop.f32.mrb[0].mxu0
      %v1168 = vadd.f32 0.0, %v1167
      %1169 = vdwg.mxu0
      %1170 = vmatprep.subr.bf16.mxu0 %v763
      %1171 = vmatpush1.bf16.msra.mxu0 %v762
      %1172 = vmatprep.subr.bf16.mxu0 %v825
      %1173 = vmatpush1.bf16.msra.mxu0 %v824
      %1174 = vmatprep.subr.bf16.mxu0 0
      %1175 = vmatpush1.bf16.msra.mxu0 0
      %1176 = vmatprep.subr.bf16.mxu0 0
      %1177 = vmatpush1.bf16.msra.mxu0 0
      %1178 = vmatprep.subr.bf16.mxu0 0
      %1179 = vmatpush1.bf16.msra.mxu0 0
      %1180 = vmatprep.subr.bf16.mxu0 0
      %1181 = vmatpush1.bf16.msra.mxu0 0
      %1182 = vmatprep.subr.bf16.mxu0 0
      %1183 = vmatpush1.bf16.msra.mxu0 0
      %1184 = vmatprep.subr.bf16.mxu0 0
      %1185 = vmatpush1.bf16.msra.mxu0 0
      %1186 = vmatprep.subr.bf16.mxu0 0
      %1187 = vmatpush1.bf16.msra.mxu0 0
      %1188 = vmatprep.subr.bf16.mxu0 0
      %1189 = vmatpush1.bf16.msra.mxu0 0
      %1190 = vmatprep.subr.bf16.mxu0 0
      %1191 = vmatpush1.bf16.msra.mxu0 0
      %1192 = vmatprep.subr.bf16.mxu0 0
      %1193 = vmatpush1.bf16.msra.mxu0 0
      %1194 = vmatprep.subr.bf16.mxu0 0
      %1195 = vmatpush1.bf16.msra.mxu0 0
      %1196 = vmatprep.subr.bf16.mxu0 0
      %1197 = vmatpush1.bf16.msra.mxu0 0
      %1198 = vmatprep.subr.bf16.mxu0 0
      %1199 = vmatpush1.bf16.msra.mxu0 0
      %1200 = vmatprep.subr.bf16.mxu0 0
      %1201 = vmatpush1.bf16.msra.mxu0 0
      %1202 = vmatprep.mubr.bf16.mxu0 0
      %1203 = vmatmul.mubr.bf16.gmra.mrb[0].mxu0 %v1006
      %v1204 = vpop.f32.mrb[0].mxu0
      %v1205 = vadd.f32 0.0, %v1204
      %v1206 = vpop.f32.mrb[0].mxu0
      %v1207 = vadd.f32 0.0, %v1206
      %v1208 = vpop.f32.mrb[0].mxu0
      %v1209 = vadd.f32 0.0, %v1208
      %v1210 = vpop.f32.mrb[0].mxu0
      %v1211 = vadd.f32 0.0, %v1210
      %1212 = vmatprep.mubr.bf16.mxu0 0
      %1213 = vmatmul.mubr.bf16.gmra.mrb[0].mxu0 %v1009
      %v1214 = vpop.f32.mrb[0].mxu0
      %v1215 = vadd.f32 0.0, %v1214
      %v1216 = vpop.f32.mrb[0].mxu0
      %v1217 = vadd.f32 0.0, %v1216
      %v1218 = vpop.f32.mrb[0].mxu0
      %v1219 = vadd.f32 0.0, %v1218
      %v1220 = vpop.f32.mrb[0].mxu0
      %v1221 = vadd.f32 0.0, %v1220
      %1222 = vdwg.mxu0
      %1223 = vmatprep.subr.bf16.mxu0 %v765
      %1224 = vmatpush1.bf16.msra.mxu0 %v764
      %1225 = vmatprep.subr.bf16.mxu0 %v827
      %1226 = vmatpush1.bf16.msra.mxu0 %v826
      %1227 = vmatprep.subr.bf16.mxu0 0
      %1228 = vmatpush1.bf16.msra.mxu0 0
      %1229 = vmatprep.subr.bf16.mxu0 0
      %1230 = vmatpush1.bf16.msra.mxu0 0
      %1231 = vmatprep.subr.bf16.mxu0 0
      %1232 = vmatpush1.bf16.msra.mxu0 0
      %1233 = vmatprep.subr.bf16.mxu0 0
      %1234 = vmatpush1.bf16.msra.mxu0 0
      %1235 = vmatprep.subr.bf16.mxu0 0
      %1236 = vmatpush1.bf16.msra.mxu0 0
      %1237 = vmatprep.subr.bf16.mxu0 0
      %1238 = vmatpush1.bf16.msra.mxu0 0
      %1239 = vmatprep.subr.bf16.mxu0 0
      %1240 = vmatpush1.bf16.msra.mxu0 0
      %1241 = vmatprep.subr.bf16.mxu0 0
      %1242 = vmatpush1.bf16.msra.mxu0 0
      %1243 = vmatprep.subr.bf16.mxu0 0
      %1244 = vmatpush1.bf16.msra.mxu0 0
      %1245 = vmatprep.subr.bf16.mxu0 0
      %1246 = vmatpush1.bf16.msra.mxu0 0
      %1247 = vmatprep.subr.bf16.mxu0 0
      %1248 = vmatpush1.bf16.msra.mxu0 0
      %1249 = vmatprep.subr.bf16.mxu0 0
      %1250 = vmatpush1.bf16.msra.mxu0 0
      %1251 = vmatprep.subr.bf16.mxu0 0
      %1252 = vmatpush1.bf16.msra.mxu0 0
      %1253 = vmatprep.subr.bf16.mxu0 0
      %1254 = vmatpush1.bf16.msra.mxu0 0
      %1255 = vmatprep.mubr.bf16.mxu0 0
      %1256 = vmatmul.mubr.bf16.gmra.mrb[0].mxu0 %v1006
      %v1257 = vpop.f32.mrb[0].mxu0
      %v1258 = vadd.f32 0.0, %v1257
      %v1259 = vpop.f32.mrb[0].mxu0
      %v1260 = vadd.f32 0.0, %v1259
      %v1261 = vpop.f32.mrb[0].mxu0
      %v1262 = vadd.f32 0.0, %v1261
      %v1263 = vpop.f32.mrb[0].mxu0
      %v1264 = vadd.f32 0.0, %v1263
      %1265 = vmatprep.mubr.bf16.mxu0 0
      %1266 = vmatmul.mubr.bf16.gmra.mrb[0].mxu0 %v1009
      %v1267 = vpop.f32.mrb[0].mxu0
      %v1268 = vadd.f32 0.0, %v1267
      %v1269 = vpop.f32.mrb[0].mxu0
      %v1270 = vadd.f32 0.0, %v1269
      %v1271 = vpop.f32.mrb[0].mxu0
      %v1272 = vadd.f32 0.0, %v1271
      %v1273 = vpop.f32.mrb[0].mxu0
      %v1274 = vadd.f32 0.0, %v1273
      %1275 = vdwg.mxu0
      %1276 = vmatprep.subr.bf16.mxu0 %v767
      %1277 = vmatpush1.bf16.msra.mxu0 %v766
      %1278 = vmatprep.subr.bf16.mxu0 %v829
      %1279 = vmatpush1.bf16.msra.mxu0 %v828
      %1280 = vmatprep.subr.bf16.mxu0 0
      %1281 = vmatpush1.bf16.msra.mxu0 0
      %1282 = vmatprep.subr.bf16.mxu0 0
      %1283 = vmatpush1.bf16.msra.mxu0 0
      %1284 = vmatprep.subr.bf16.mxu0 0
      %1285 = vmatpush1.bf16.msra.mxu0 0
      %1286 = vmatprep.subr.bf16.mxu0 0
      %1287 = vmatpush1.bf16.msra.mxu0 0
      %1288 = vmatprep.subr.bf16.mxu0 0
      %1289 = vmatpush1.bf16.msra.mxu0 0
      %1290 = vmatprep.subr.bf16.mxu0 0
      %1291 = vmatpush1.bf16.msra.mxu0 0
      %1292 = vmatprep.subr.bf16.mxu0 0
      %1293 = vmatpush1.bf16.msra.mxu0 0
      %1294 = vmatprep.subr.bf16.mxu0 0
      %1295 = vmatpush1.bf16.msra.mxu0 0
      %1296 = vmatprep.subr.bf16.mxu0 0
      %1297 = vmatpush1.bf16.msra.mxu0 0
      %1298 = vmatprep.subr.bf16.mxu0 0
      %1299 = vmatpush1.bf16.msra.mxu0 0
      %1300 = vmatprep.subr.bf16.mxu0 0
      %1301 = vmatpush1.bf16.msra.mxu0 0
      %1302 = vmatprep.subr.bf16.mxu0 0
      %1303 = vmatpush1.bf16.msra.mxu0 0
      %1304 = vmatprep.subr.bf16.mxu0 0
      %1305 = vmatpush1.bf16.msra.mxu0 0
      %1306 = vmatprep.subr.bf16.mxu0 0
      %1307 = vmatpush1.bf16.msra.mxu0 0
      %1308 = vmatprep.mubr.bf16.mxu0 0
      %1309 = vmatmul.mubr.bf16.gmra.mrb[0].mxu0 %v1006
      %v1310 = vpop.f32.mrb[0].mxu0
      %v1311 = vadd.f32 0.0, %v1310
      %v1312 = vpop.f32.mrb[0].mxu0
      %v1313 = vadd.f32 0.0, %v1312
      %v1314 = vpop.f32.mrb[0].mxu0
      %v1315 = vadd.f32 0.0, %v1314
      %v1316 = vpop.f32.mrb[0].mxu0
      %v1317 = vadd.f32 0.0, %v1316
      %1318 = vmatprep.mubr.bf16.mxu0 0
      %1319 = vmatmul.mubr.bf16.gmra.mrb[0].mxu0 %v1009
      %v1320 = vpop.f32.mrb[0].mxu0
      %v1321 = vadd.f32 0.0, %v1320
      %v1322 = vpop.f32.mrb[0].mxu0
      %v1323 = vadd.f32 0.0, %v1322
      %v1324 = vpop.f32.mrb[0].mxu0
      %v1325 = vadd.f32 0.0, %v1324
      %v1326 = vpop.f32.mrb[0].mxu0
      %v1327 = vadd.f32 0.0, %v1326
      %1328 = vdwg.mxu0
      %1329 = vmatprep.subr.bf16.mxu0 %v769
      %1330 = vmatpush1.bf16.msra.mxu0 %v768
      %1331 = vmatprep.subr.bf16.mxu0 %v831
      %1332 = vmatpush1.bf16.msra.mxu0 %v830
      %1333 = vmatprep.subr.bf16.mxu0 0
      %1334 = vmatpush1.bf16.msra.mxu0 0
      %1335 = vmatprep.subr.bf16.mxu0 0
      %1336 = vmatpush1.bf16.msra.mxu0 0
      %1337 = vmatprep.subr.bf16.mxu0 0
      %1338 = vmatpush1.bf16.msra.mxu0 0
      %1339 = vmatprep.subr.bf16.mxu0 0
      %1340 = vmatpush1.bf16.msra.mxu0 0
      %1341 = vmatprep.subr.bf16.mxu0 0
      %1342 = vmatpush1.bf16.msra.mxu0 0
      %1343 = vmatprep.subr.bf16.mxu0 0
      %1344 = vmatpush1.bf16.msra.mxu0 0
      %1345 = vmatprep.subr.bf16.mxu0 0
      %1346 = vmatpush1.bf16.msra.mxu0 0
      %1347 = vmatprep.subr.bf16.mxu0 0
      %1348 = vmatpush1.bf16.msra.mxu0 0
      %1349 = vmatprep.subr.bf16.mxu0 0
      %1350 = vmatpush1.bf16.msra.mxu0 0
      %1351 = vmatprep.subr.bf16.mxu0 0
      %1352 = vmatpush1.bf16.msra.mxu0 0
      %1353 = vmatprep.subr.bf16.mxu0 0
      %1354 = vmatpush1.bf16.msra.mxu0 0
      %1355 = vmatprep.subr.bf16.mxu0 0
      %1356 = vmatpush1.bf16.msra.mxu0 0
      %1357 = vmatprep.subr.bf16.mxu0 0
      %1358 = vmatpush1.bf16.msra.mxu0 0
      %1359 = vmatprep.subr.bf16.mxu0 0
      %1360 = vmatpush1.bf16.msra.mxu0 0
      %1361 = vmatprep.mubr.bf16.mxu0 0
      %1362 = vmatmul.mubr.bf16.gmra.mrb[0].mxu0 %v1006
      %v1363 = vpop.f32.mrb[0].mxu0
      %v1364 = vadd.f32 0.0, %v1363
      %v1365 = vpop.f32.mrb[0].mxu0
      %v1366 = vadd.f32 0.0, %v1365
      %v1367 = vpop.f32.mrb[0].mxu0
      %v1368 = vadd.f32 0.0, %v1367
      %v1369 = vpop.f32.mrb[0].mxu0
      %v1370 = vadd.f32 0.0, %v1369
      %1371 = vmatprep.mubr.bf16.mxu0 0
      %1372 = vmatmul.mubr.bf16.gmra.mrb[0].mxu0 %v1009
      %v1373 = vpop.f32.mrb[0].mxu0
      %v1374 = vadd.f32 0.0, %v1373
      %v1375 = vpop.f32.mrb[0].mxu0
      %v1376 = vadd.f32 0.0, %v1375
      %v1377 = vpop.f32.mrb[0].mxu0
      %v1378 = vadd.f32 0.0, %v1377
      %v1379 = vpop.f32.mrb[0].mxu0
      %v1380 = vadd.f32 0.0, %v1379
      %1381 = vdwg.mxu0
      %1382 = vmatprep.subr.bf16.mxu0 %v771
      %1383 = vmatpush1.bf16.msra.mxu0 %v770
      %1384 = vmatprep.subr.bf16.mxu0 %v833
      %1385 = vmatpush1.bf16.msra.mxu0 %v832
      %1386 = vmatprep.subr.bf16.mxu0 0
      %1387 = vmatpush1.bf16.msra.mxu0 0
      %1388 = vmatprep.subr.bf16.mxu0 0
      %1389 = vmatpush1.bf16.msra.mxu0 0
      %1390 = vmatprep.subr.bf16.mxu0 0
      %1391 = vmatpush1.bf16.msra.mxu0 0
      %1392 = vmatprep.subr.bf16.mxu0 0
      %1393 = vmatpush1.bf16.msra.mxu0 0
      %1394 = vmatprep.subr.bf16.mxu0 0
      %1395 = vmatpush1.bf16.msra.mxu0 0
      %1396 = vmatprep.subr.bf16.mxu0 0
      %1397 = vmatpush1.bf16.msra.mxu0 0
      %1398 = vmatprep.subr.bf16.mxu0 0
      %1399 = vmatpush1.bf16.msra.mxu0 0
      %1400 = vmatprep.subr.bf16.mxu0 0
      %1401 = vmatpush1.bf16.msra.mxu0 0
      %1402 = vmatprep.subr.bf16.mxu0 0
      %1403 = vmatpush1.bf16.msra.mxu0 0
      %1404 = vmatprep.subr.bf16.mxu0 0
      %1405 = vmatpush1.bf16.msra.mxu0 0
      %1406 = vmatprep.subr.bf16.mxu0 0
      %1407 = vmatpush1.bf16.msra.mxu0 0
      %1408 = vmatprep.subr.bf16.mxu0 0
      %1409 = vmatpush1.bf16.msra.mxu0 0
      %1410 = vmatprep.subr.bf16.mxu0 0
      %1411 = vmatpush1.bf16.msra.mxu0 0
      %1412 = vmatprep.subr.bf16.mxu0 0
      %1413 = vmatpush1.bf16.msra.mxu0 0
      %1414 = vmatprep.mubr.bf16.mxu0 0
      %1415 = vmatmul.mubr.bf16.gmra.mrb[0].mxu0 %v1006
      %v1416 = vpop.f32.mrb[0].mxu0
      %v1417 = vadd.f32 0.0, %v1416
      %v1418 = vpop.f32.mrb[0].mxu0
      %v1419 = vadd.f32 0.0, %v1418
      %v1420 = vpop.f32.mrb[0].mxu0
      %v1421 = vadd.f32 0.0, %v1420
      %v1422 = vpop.f32.mrb[0].mxu0
      %v1423 = vadd.f32 0.0, %v1422
      %1424 = vmatprep.mubr.bf16.mxu0 0
      %1425 = vmatmul.mubr.bf16.gmra.mrb[0].mxu0 %v1009
      %v1426 = vpop.f32.mrb[0].mxu0
      %v1427 = vadd.f32 0.0, %v1426
      %v1428 = vpop.f32.mrb[0].mxu0
      %v1429 = vadd.f32 0.0, %v1428
      %v1430 = vpop.f32.mrb[0].mxu0
      %v1431 = vadd.f32 0.0, %v1430
      %v1432 = vpop.f32.mrb[0].mxu0
      %v1433 = vadd.f32 0.0, %v1432
      %1434 = vdwg.mxu0
      %1435 = vmatprep.subr.bf16.mxu0 %v773
      %1436 = vmatpush1.bf16.msra.mxu0 %v772
      %1437 = vmatprep.subr.bf16.mxu0 %v835
      %1438 = vmatpush1.bf16.msra.mxu0 %v834
      %1439 = vmatprep.subr.bf16.mxu0 0
      %1440 = vmatpush1.bf16.msra.mxu0 0
      %1441 = vmatprep.subr.bf16.mxu0 0
      %1442 = vmatpush1.bf16.msra.mxu0 0
      %1443 = vmatprep.subr.bf16.mxu0 0
      %1444 = vmatpush1.bf16.msra.mxu0 0
      %1445 = vmatprep.subr.bf16.mxu0 0
      %1446 = vmatpush1.bf16.msra.mxu0 0
      %1447 = vmatprep.subr.bf16.mxu0 0
      %1448 = vmatpush1.bf16.msra.mxu0 0
      %1449 = vmatprep.subr.bf16.mxu0 0
      %1450 = vmatpush1.bf16.msra.mxu0 0
      %1451 = vmatprep.subr.bf16.mxu0 0
      %1452 = vmatpush1.bf16.msra.mxu0 0
      %1453 = vmatprep.subr.bf16.mxu0 0
      %1454 = vmatpush1.bf16.msra.mxu0 0
      %1455 = vmatprep.subr.bf16.mxu0 0
      %1456 = vmatpush1.bf16.msra.mxu0 0
      %1457 = vmatprep.subr.bf16.mxu0 0
      %1458 = vmatpush1.bf16.msra.mxu0 0
      %1459 = vmatprep.subr.bf16.mxu0 0
      %1460 = vmatpush1.bf16.msra.mxu0 0
      %1461 = vmatprep.subr.bf16.mxu0 0
      %1462 = vmatpush1.bf16.msra.mxu0 0
      %1463 = vmatprep.subr.bf16.mxu0 0
      %1464 = vmatpush1.bf16.msra.mxu0 0
      %1465 = vmatprep.subr.bf16.mxu0 0
      %1466 = vmatpush1.bf16.msra.mxu0 0
      %1467 = vmatprep.mubr.bf16.mxu0 0
      %1468 = vmatmul.mubr.bf16.gmra.mrb[0].mxu0 %v1006
      %v1469 = vpop.f32.mrb[0].mxu0
      %v1470 = vadd.f32 0.0, %v1469
      %v1471 = vpop.f32.mrb[0].mxu0
      %v1472 = vadd.f32 0.0, %v1471
      %v1473 = vpop.f32.mrb[0].mxu0
      %v1474 = vadd.f32 0.0, %v1473
      %v1475 = vpop.f32.mrb[0].mxu0
      %v1476 = vadd.f32 0.0, %v1475
      %1477 = vmatprep.mubr.bf16.mxu0 0
      %1478 = vmatmul.mubr.bf16.gmra.mrb[0].mxu0 %v1009
      %v1479 = vpop.f32.mrb[0].mxu0
      %v1480 = vadd.f32 0.0, %v1479
      %v1481 = vpop.f32.mrb[0].mxu0
      %v1482 = vadd.f32 0.0, %v1481
      %v1483 = vpop.f32.mrb[0].mxu0
      %v1484 = vadd.f32 0.0, %v1483
      %v1485 = vpop.f32.mrb[0].mxu0
      %v1486 = vadd.f32 0.0, %v1485
      %1487 = vdwg.mxu0
      %1488 = vmatprep.subr.bf16.mxu0 %v775
      %1489 = vmatpush1.bf16.msra.mxu0 %v774
      %1490 = vmatprep.subr.bf16.mxu0 %v837
      %1491 = vmatpush1.bf16.msra.mxu0 %v836
      %1492 = vmatprep.subr.bf16.mxu0 0
      %1493 = vmatpush1.bf16.msra.mxu0 0
      %1494 = vmatprep.subr.bf16.mxu0 0
      %1495 = vmatpush1.bf16.msra.mxu0 0
      %1496 = vmatprep.subr.bf16.mxu0 0
      %1497 = vmatpush1.bf16.msra.mxu0 0
      %1498 = vmatprep.subr.bf16.mxu0 0
      %1499 = vmatpush1.bf16.msra.mxu0 0
      %1500 = vmatprep.subr.bf16.mxu0 0
      %1501 = vmatpush1.bf16.msra.mxu0 0
      %1502 = vmatprep.subr.bf16.mxu0 0
      %1503 = vmatpush1.bf16.msra.mxu0 0
      %1504 = vmatprep.subr.bf16.mxu0 0
      %1505 = vmatpush1.bf16.msra.mxu0 0
      %1506 = vmatprep.subr.bf16.mxu0 0
      %1507 = vmatpush1.bf16.msra.mxu0 0
      %1508 = vmatprep.subr.bf16.mxu0 0
      %1509 = vmatpush1.bf16.msra.mxu0 0
      %1510 = vmatprep.subr.bf16.mxu0 0
      %1511 = vmatpush1.bf16.msra.mxu0 0
      %1512 = vmatprep.subr.bf16.mxu0 0
      %1513 = vmatpush1.bf16.msra.mxu0 0
      %1514 = vmatprep.subr.bf16.mxu0 0
      %1515 = vmatpush1.bf16.msra.mxu0 0
      %1516 = vmatprep.subr.bf16.mxu0 0
      %1517 = vmatpush1.bf16.msra.mxu0 0
      %1518 = vmatprep.subr.bf16.mxu0 0
      %1519 = vmatpush1.bf16.msra.mxu0 0
      %1520 = vmatprep.mubr.bf16.mxu0 0
      %1521 = vmatmul.mubr.bf16.gmra.mrb[0].mxu0 %v1006
      %v1522 = vpop.f32.mrb[0].mxu0
      %v1523 = vadd.f32 0.0, %v1522
      %v1524 = vpop.f32.mrb[0].mxu0
      %v1525 = vadd.f32 0.0, %v1524
      %v1526 = vpop.f32.mrb[0].mxu0
      %v1527 = vadd.f32 0.0, %v1526
      %v1528 = vpop.f32.mrb[0].mxu0
      %v1529 = vadd.f32 0.0, %v1528
      %1530 = vmatprep.mubr.bf16.mxu0 0
      %1531 = vmatmul.mubr.bf16.gmra.mrb[0].mxu0 %v1009
      %v1532 = vpop.f32.mrb[0].mxu0
      %v1533 = vadd.f32 0.0, %v1532
      %v1534 = vpop.f32.mrb[0].mxu0
      %v1535 = vadd.f32 0.0, %v1534
      %v1536 = vpop.f32.mrb[0].mxu0
      %v1537 = vadd.f32 0.0, %v1536
      %v1538 = vpop.f32.mrb[0].mxu0
      %v1539 = vadd.f32 0.0, %v1538
      %1540 = vdwg.mxu0
      %1541 = vmatprep.subr.bf16.mxu0 %v777
      %1542 = vmatpush1.bf16.msra.mxu0 %v776
      %1543 = vmatprep.subr.bf16.mxu0 %v839
      %1544 = vmatpush1.bf16.msra.mxu0 %v838
      %1545 = vmatprep.subr.bf16.mxu0 0
      %1546 = vmatpush1.bf16.msra.mxu0 0
      %1547 = vmatprep.subr.bf16.mxu0 0
      %1548 = vmatpush1.bf16.msra.mxu0 0
      %1549 = vmatprep.subr.bf16.mxu0 0
      %1550 = vmatpush1.bf16.msra.mxu0 0
      %1551 = vmatprep.subr.bf16.mxu0 0
      %1552 = vmatpush1.bf16.msra.mxu0 0
      %1553 = vmatprep.subr.bf16.mxu0 0
      %1554 = vmatpush1.bf16.msra.mxu0 0
      %1555 = vmatprep.subr.bf16.mxu0 0
      %1556 = vmatpush1.bf16.msra.mxu0 0
      %1557 = vmatprep.subr.bf16.mxu0 0
      %1558 = vmatpush1.bf16.msra.mxu0 0
      %1559 = vmatprep.subr.bf16.mxu0 0
      %1560 = vmatpush1.bf16.msra.mxu0 0
      %1561 = vmatprep.subr.bf16.mxu0 0
      %1562 = vmatpush1.bf16.msra.mxu0 0
      %1563 = vmatprep.subr.bf16.mxu0 0
      %1564 = vmatpush1.bf16.msra.mxu0 0
      %1565 = vmatprep.subr.bf16.mxu0 0
      %1566 = vmatpush1.bf16.msra.mxu0 0
      %1567 = vmatprep.subr.bf16.mxu0 0
      %1568 = vmatpush1.bf16.msra.mxu0 0
      %1569 = vmatprep.subr.bf16.mxu0 0
      %1570 = vmatpush1.bf16.msra.mxu0 0
      %1571 = vmatprep.subr.bf16.mxu0 0
      %1572 = vmatpush1.bf16.msra.mxu0 0
      %1573 = vmatprep.mubr.bf16.mxu0 0
      %1574 = vmatmul.mubr.bf16.gmra.mrb[0].mxu0 %v1006
      %v1575 = vpop.f32.mrb[0].mxu0
      %v1576 = vadd.f32 0.0, %v1575
      %v1577 = vpop.f32.mrb[0].mxu0
      %v1578 = vadd.f32 0.0, %v1577
      %v1579 = vpop.f32.mrb[0].mxu0
      %v1580 = vadd.f32 0.0, %v1579
      %v1581 = vpop.f32.mrb[0].mxu0
      %v1582 = vadd.f32 0.0, %v1581
      %1583 = vmatprep.mubr.bf16.mxu0 0
      %1584 = vmatmul.mubr.bf16.gmra.mrb[0].mxu0 %v1009
      %v1585 = vpop.f32.mrb[0].mxu0
      %v1586 = vadd.f32 0.0, %v1585
      %v1587 = vpop.f32.mrb[0].mxu0
      %v1588 = vadd.f32 0.0, %v1587
      %v1589 = vpop.f32.mrb[0].mxu0
      %v1590 = vadd.f32 0.0, %v1589
      %v1591 = vpop.f32.mrb[0].mxu0
      %v1592 = vadd.f32 0.0, %v1591
      %1593 = vdwg.mxu0
      %1594 = vmatprep.subr.bf16.mxu0 %v779
      %1595 = vmatpush1.bf16.msra.mxu0 %v778
      %1596 = vmatprep.subr.bf16.mxu0 %v841
      %1597 = vmatpush1.bf16.msra.mxu0 %v840
      %1598 = vmatprep.subr.bf16.mxu0 0
      %1599 = vmatpush1.bf16.msra.mxu0 0
      %1600 = vmatprep.subr.bf16.mxu0 0
      %1601 = vmatpush1.bf16.msra.mxu0 0
      %1602 = vmatprep.subr.bf16.mxu0 0
      %1603 = vmatpush1.bf16.msra.mxu0 0
      %1604 = vmatprep.subr.bf16.mxu0 0
      %1605 = vmatpush1.bf16.msra.mxu0 0
      %1606 = vmatprep.subr.bf16.mxu0 0
      %1607 = vmatpush1.bf16.msra.mxu0 0
      %1608 = vmatprep.subr.bf16.mxu0 0
      %1609 = vmatpush1.bf16.msra.mxu0 0
      %1610 = vmatprep.subr.bf16.mxu0 0
      %1611 = vmatpush1.bf16.msra.mxu0 0
      %1612 = vmatprep.subr.bf16.mxu0 0
      %1613 = vmatpush1.bf16.msra.mxu0 0
      %1614 = vmatprep.subr.bf16.mxu0 0
      %1615 = vmatpush1.bf16.msra.mxu0 0
      %1616 = vmatprep.subr.bf16.mxu0 0
      %1617 = vmatpush1.bf16.msra.mxu0 0
      %1618 = vmatprep.subr.bf16.mxu0 0
      %1619 = vmatpush1.bf16.msra.mxu0 0
      %1620 = vmatprep.subr.bf16.mxu0 0
      %1621 = vmatpush1.bf16.msra.mxu0 0
      %1622 = vmatprep.subr.bf16.mxu0 0
      %1623 = vmatpush1.bf16.msra.mxu0 0
      %1624 = vmatprep.subr.bf16.mxu0 0
      %1625 = vmatpush1.bf16.msra.mxu0 0
      %1626 = vmatprep.mubr.bf16.mxu0 0
      %1627 = vmatmul.mubr.bf16.gmra.mrb[0].mxu0 %v1006
      %v1628 = vpop.f32.mrb[0].mxu0
      %v1629 = vadd.f32 0.0, %v1628
      %v1630 = vpop.f32.mrb[0].mxu0
      %v1631 = vadd.f32 0.0, %v1630
      %v1632 = vpop.f32.mrb[0].mxu0
      %v1633 = vadd.f32 0.0, %v1632
      %v1634 = vpop.f32.mrb[0].mxu0
      %v1635 = vadd.f32 0.0, %v1634
      %1636 = vmatprep.mubr.bf16.mxu0 0
      %1637 = vmatmul.mubr.bf16.gmra.mrb[0].mxu0 %v1009
      %v1638 = vpop.f32.mrb[0].mxu0
      %v1639 = vadd.f32 0.0, %v1638
      %v1640 = vpop.f32.mrb[0].mxu0
      %v1641 = vadd.f32 0.0, %v1640
      %v1642 = vpop.f32.mrb[0].mxu0
      %v1643 = vadd.f32 0.0, %v1642
      %v1644 = vpop.f32.mrb[0].mxu0
      %v1645 = vadd.f32 0.0, %v1644
      %1646 = vdwg.mxu0
      %1647 = vmatprep.subr.bf16.mxu0 %v781
      %1648 = vmatpush1.bf16.msra.mxu0 %v780
      %1649 = vmatprep.subr.bf16.mxu0 %v843
      %1650 = vmatpush1.bf16.msra.mxu0 %v842
      %1651 = vmatprep.subr.bf16.mxu0 0
      %1652 = vmatpush1.bf16.msra.mxu0 0
      %1653 = vmatprep.subr.bf16.mxu0 0
      %1654 = vmatpush1.bf16.msra.mxu0 0
      %1655 = vmatprep.subr.bf16.mxu0 0
      %1656 = vmatpush1.bf16.msra.mxu0 0
      %1657 = vmatprep.subr.bf16.mxu0 0
      %1658 = vmatpush1.bf16.msra.mxu0 0
      %1659 = vmatprep.subr.bf16.mxu0 0
      %1660 = vmatpush1.bf16.msra.mxu0 0
      %1661 = vmatprep.subr.bf16.mxu0 0
      %1662 = vmatpush1.bf16.msra.mxu0 0
      %1663 = vmatprep.subr.bf16.mxu0 0
      %1664 = vmatpush1.bf16.msra.mxu0 0
      %1665 = vmatprep.subr.bf16.mxu0 0
      %1666 = vmatpush1.bf16.msra.mxu0 0
      %1667 = vmatprep.subr.bf16.mxu0 0
      %1668 = vmatpush1.bf16.msra.mxu0 0
      %1669 = vmatprep.subr.bf16.mxu0 0
      %1670 = vmatpush1.bf16.msra.mxu0 0
      %1671 = vmatprep.subr.bf16.mxu0 0
      %1672 = vmatpush1.bf16.msra.mxu0 0
      %1673 = vmatprep.subr.bf16.mxu0 0
      %1674 = vmatpush1.bf16.msra.mxu0 0
      %1675 = vmatprep.subr.bf16.mxu0 0
      %1676 = vmatpush1.bf16.msra.mxu0 0
      %1677 = vmatprep.subr.bf16.mxu0 0
      %1678 = vmatpush1.bf16.msra.mxu0 0
      %1679 = vmatprep.mubr.bf16.mxu0 0
      %1680 = vmatmul.mubr.bf16.gmra.mrb[0].mxu0 %v1006
      %v1681 = vpop.f32.mrb[0].mxu0
      %v1682 = vadd.f32 0.0, %v1681
      %v1683 = vpop.f32.mrb[0].mxu0
      %v1684 = vadd.f32 0.0, %v1683
      %v1685 = vpop.f32.mrb[0].mxu0
      %v1686 = vadd.f32 0.0, %v1685
      %v1687 = vpop.f32.mrb[0].mxu0
      %v1688 = vadd.f32 0.0, %v1687
      %1689 = vmatprep.mubr.bf16.mxu0 0
      %1690 = vmatmul.mubr.bf16.gmra.mrb[0].mxu0 %v1009
      %v1691 = vpop.f32.mrb[0].mxu0
      %v1692 = vadd.f32 0.0, %v1691
      %v1693 = vpop.f32.mrb[0].mxu0
      %v1694 = vadd.f32 0.0, %v1693
      %v1695 = vpop.f32.mrb[0].mxu0
      %v1696 = vadd.f32 0.0, %v1695
      %v1697 = vpop.f32.mrb[0].mxu0
      %v1698 = vadd.f32 0.0, %v1697
      %1699 = vdwg.mxu0
      %1700 = vmatprep.subr.bf16.mxu0 %v783
      %1701 = vmatpush1.bf16.msra.mxu0 %v782
      %1702 = vmatprep.subr.bf16.mxu0 %v845
      %1703 = vmatpush1.bf16.msra.mxu0 %v844
      %1704 = vmatprep.subr.bf16.mxu0 0
      %1705 = vmatpush1.bf16.msra.mxu0 0
      %1706 = vmatprep.subr.bf16.mxu0 0
      %1707 = vmatpush1.bf16.msra.mxu0 0
      %1708 = vmatprep.subr.bf16.mxu0 0
      %1709 = vmatpush1.bf16.msra.mxu0 0
      %1710 = vmatprep.subr.bf16.mxu0 0
      %1711 = vmatpush1.bf16.msra.mxu0 0
      %1712 = vmatprep.subr.bf16.mxu0 0
      %1713 = vmatpush1.bf16.msra.mxu0 0
      %1714 = vmatprep.subr.bf16.mxu0 0
      %1715 = vmatpush1.bf16.msra.mxu0 0
      %1716 = vmatprep.subr.bf16.mxu0 0
      %1717 = vmatpush1.bf16.msra.mxu0 0
      %1718 = vmatprep.subr.bf16.mxu0 0
      %1719 = vmatpush1.bf16.msra.mxu0 0
      %1720 = vmatprep.subr.bf16.mxu0 0
      %1721 = vmatpush1.bf16.msra.mxu0 0
      %1722 = vmatprep.subr.bf16.mxu0 0
      %1723 = vmatpush1.bf16.msra.mxu0 0
      %1724 = vmatprep.subr.bf16.mxu0 0
      %1725 = vmatpush1.bf16.msra.mxu0 0
      %1726 = vmatprep.subr.bf16.mxu0 0
      %1727 = vmatpush1.bf16.msra.mxu0 0
      %1728 = vmatprep.subr.bf16.mxu0 0
      %1729 = vmatpush1.bf16.msra.mxu0 0
      %1730 = vmatprep.subr.bf16.mxu0 0
      %1731 = vmatpush1.bf16.msra.mxu0 0
      %1732 = vmatprep.mubr.bf16.mxu0 0
      %1733 = vmatmul.mubr.bf16.gmra.mrb[0].mxu0 %v1006
      %v1734 = vpop.f32.mrb[0].mxu0
      %v1735 = vadd.f32 0.0, %v1734
      %v1736 = vpop.f32.mrb[0].mxu0
      %v1737 = vadd.f32 0.0, %v1736
      %v1738 = vpop.f32.mrb[0].mxu0
      %v1739 = vadd.f32 0.0, %v1738
      %v1740 = vpop.f32.mrb[0].mxu0
      %v1741 = vadd.f32 0.0, %v1740
      %1742 = vmatprep.mubr.bf16.mxu0 0
      %1743 = vmatmul.mubr.bf16.gmra.mrb[0].mxu0 %v1009
      %v1744 = vpop.f32.mrb[0].mxu0
      %v1745 = vadd.f32 0.0, %v1744
      %v1746 = vpop.f32.mrb[0].mxu0
      %v1747 = vadd.f32 0.0, %v1746
      %v1748 = vpop.f32.mrb[0].mxu0
      %v1749 = vadd.f32 0.0, %v1748
      %v1750 = vpop.f32.mrb[0].mxu0
      %v1751 = vadd.f32 0.0, %v1750
      %1752 = vdwg.mxu0
      %1753 = vmatprep.subr.bf16.mxu0 %v785
      %1754 = vmatpush1.bf16.msra.mxu0 %v784
      %1755 = vmatprep.subr.bf16.mxu0 %v847
      %1756 = vmatpush1.bf16.msra.mxu0 %v846
      %1757 = vmatprep.subr.bf16.mxu0 0
      %1758 = vmatpush1.bf16.msra.mxu0 0
      %1759 = vmatprep.subr.bf16.mxu0 0
      %1760 = vmatpush1.bf16.msra.mxu0 0
      %1761 = vmatprep.subr.bf16.mxu0 0
      %1762 = vmatpush1.bf16.msra.mxu0 0
      %1763 = vmatprep.subr.bf16.mxu0 0
      %1764 = vmatpush1.bf16.msra.mxu0 0
      %1765 = vmatprep.subr.bf16.mxu0 0
      %1766 = vmatpush1.bf16.msra.mxu0 0
      %1767 = vmatprep.subr.bf16.mxu0 0
      %1768 = vmatpush1.bf16.msra.mxu0 0
      %1769 = vmatprep.subr.bf16.mxu0 0
      %1770 = vmatpush1.bf16.msra.mxu0 0
      %1771 = vmatprep.subr.bf16.mxu0 0
      %1772 = vmatpush1.bf16.msra.mxu0 0
      %1773 = vmatprep.subr.bf16.mxu0 0
      %1774 = vmatpush1.bf16.msra.mxu0 0
      %1775 = vmatprep.subr.bf16.mxu0 0
      %1776 = vmatpush1.bf16.msra.mxu0 0
      %1777 = vmatprep.subr.bf16.mxu0 0
      %1778 = vmatpush1.bf16.msra.mxu0 0
      %1779 = vmatprep.subr.bf16.mxu0 0
      %1780 = vmatpush1.bf16.msra.mxu0 0
      %1781 = vmatprep.subr.bf16.mxu0 0
      %1782 = vmatpush1.bf16.msra.mxu0 0
      %1783 = vmatprep.subr.bf16.mxu0 0
      %1784 = vmatpush1.bf16.msra.mxu0 0
      %1785 = vmatprep.mubr.bf16.mxu0 0
      %1786 = vmatmul.mubr.bf16.gmra.mrb[0].mxu0 %v1006
      %v1787 = vpop.f32.mrb[0].mxu0
      %v1788 = vadd.f32 0.0, %v1787
      %v1789 = vpop.f32.mrb[0].mxu0
      %v1790 = vadd.f32 0.0, %v1789
      %v1791 = vpop.f32.mrb[0].mxu0
      %v1792 = vadd.f32 0.0, %v1791
      %v1793 = vpop.f32.mrb[0].mxu0
      %v1794 = vadd.f32 0.0, %v1793
      %1795 = vmatprep.mubr.bf16.mxu0 0
      %1796 = vmatmul.mubr.bf16.gmra.mrb[0].mxu0 %v1009
      %v1797 = vpop.f32.mrb[0].mxu0
      %v1798 = vadd.f32 0.0, %v1797
      %v1799 = vpop.f32.mrb[0].mxu0
      %v1800 = vadd.f32 0.0, %v1799
      %v1801 = vpop.f32.mrb[0].mxu0
      %v1802 = vadd.f32 0.0, %v1801
      %v1803 = vpop.f32.mrb[0].mxu0
      %v1804 = vadd.f32 0.0, %v1803
      %1805 = vdwg.mxu0
      %1806 = vmatprep.subr.bf16.mxu0 %v787
      %1807 = vmatpush1.bf16.msra.mxu0 %v786
      %1808 = vmatprep.subr.bf16.mxu0 %v849
      %1809 = vmatpush1.bf16.msra.mxu0 %v848
      %1810 = vmatprep.subr.bf16.mxu0 0
      %1811 = vmatpush1.bf16.msra.mxu0 0
      %1812 = vmatprep.subr.bf16.mxu0 0
      %1813 = vmatpush1.bf16.msra.mxu0 0
      %1814 = vmatprep.subr.bf16.mxu0 0
      %1815 = vmatpush1.bf16.msra.mxu0 0
      %1816 = vmatprep.subr.bf16.mxu0 0
      %1817 = vmatpush1.bf16.msra.mxu0 0
      %1818 = vmatprep.subr.bf16.mxu0 0
      %1819 = vmatpush1.bf16.msra.mxu0 0
      %1820 = vmatprep.subr.bf16.mxu0 0
      %1821 = vmatpush1.bf16.msra.mxu0 0
      %1822 = vmatprep.subr.bf16.mxu0 0
      %1823 = vmatpush1.bf16.msra.mxu0 0
      %1824 = vmatprep.subr.bf16.mxu0 0
      %1825 = vmatpush1.bf16.msra.mxu0 0
      %1826 = vmatprep.subr.bf16.mxu0 0
      %1827 = vmatpush1.bf16.msra.mxu0 0
      %1828 = vmatprep.subr.bf16.mxu0 0
      %1829 = vmatpush1.bf16.msra.mxu0 0
      %1830 = vmatprep.subr.bf16.mxu0 0
      %1831 = vmatpush1.bf16.msra.mxu0 0
      %1832 = vmatprep.subr.bf16.mxu0 0
      %1833 = vmatpush1.bf16.msra.mxu0 0
      %1834 = vmatprep.subr.bf16.mxu0 0
      %1835 = vmatpush1.bf16.msra.mxu0 0
      %1836 = vmatprep.subr.bf16.mxu0 0
      %1837 = vmatpush1.bf16.msra.mxu0 0
      %1838 = vmatprep.mubr.bf16.mxu0 0
      %1839 = vmatmul.mubr.bf16.gmra.mrb[0].mxu0 %v1006
      %v1840 = vpop.f32.mrb[0].mxu0
      %v1841 = vadd.f32 0.0, %v1840
      %v1842 = vpop.f32.mrb[0].mxu0
      %v1843 = vadd.f32 0.0, %v1842
      %v1844 = vpop.f32.mrb[0].mxu0
      %v1845 = vadd.f32 0.0, %v1844
      %v1846 = vpop.f32.mrb[0].mxu0
      %v1847 = vadd.f32 0.0, %v1846
      %1848 = vmatprep.mubr.bf16.mxu0 0
      %1849 = vmatmul.mubr.bf16.gmra.mrb[0].mxu0 %v1009
      %v1850 = vpop.f32.mrb[0].mxu0
      %v1851 = vadd.f32 0.0, %v1850
      %v1852 = vpop.f32.mrb[0].mxu0
      %v1853 = vadd.f32 0.0, %v1852
      %v1854 = vpop.f32.mrb[0].mxu0
      %v1855 = vadd.f32 0.0, %v1854
      %v1856 = vpop.f32.mrb[0].mxu0
      %v1857 = vadd.f32 0.0, %v1856
      %1858 = vdwg.mxu0
      %1859 = vmatprep.subr.bf16.mxu0 %v789
      %1860 = vmatpush1.bf16.msra.mxu0 %v788
      %1861 = vmatprep.subr.bf16.mxu0 %v851
      %1862 = vmatpush1.bf16.msra.mxu0 %v850
      %1863 = vmatprep.subr.bf16.mxu0 0
      %1864 = vmatpush1.bf16.msra.mxu0 0
      %1865 = vmatprep.subr.bf16.mxu0 0
      %1866 = vmatpush1.bf16.msra.mxu0 0
      %1867 = vmatprep.subr.bf16.mxu0 0
      %1868 = vmatpush1.bf16.msra.mxu0 0
      %1869 = vmatprep.subr.bf16.mxu0 0
      %1870 = vmatpush1.bf16.msra.mxu0 0
      %1871 = vmatprep.subr.bf16.mxu0 0
      %1872 = vmatpush1.bf16.msra.mxu0 0
      %1873 = vmatprep.subr.bf16.mxu0 0
      %1874 = vmatpush1.bf16.msra.mxu0 0
      %1875 = vmatprep.subr.bf16.mxu0 0
      %1876 = vmatpush1.bf16.msra.mxu0 0
      %1877 = vmatprep.subr.bf16.mxu0 0
      %1878 = vmatpush1.bf16.msra.mxu0 0
      %1879 = vmatprep.subr.bf16.mxu0 0
      %1880 = vmatpush1.bf16.msra.mxu0 0
      %1881 = vmatprep.subr.bf16.mxu0 0
      %1882 = vmatpush1.bf16.msra.mxu0 0
      %1883 = vmatprep.subr.bf16.mxu0 0
      %1884 = vmatpush1.bf16.msra.mxu0 0
      %1885 = vmatprep.subr.bf16.mxu0 0
      %1886 = vmatpush1.bf16.msra.mxu0 0
      %1887 = vmatprep.subr.bf16.mxu0 0
      %1888 = vmatpush1.bf16.msra.mxu0 0
      %1889 = vmatprep.subr.bf16.mxu0 0
      %1890 = vmatpush1.bf16.msra.mxu0 0
      %1891 = vmatprep.mubr.bf16.mxu0 0
      %1892 = vmatmul.mubr.bf16.gmra.mrb[0].mxu0 %v1006
      %v1893 = vpop.f32.mrb[0].mxu0
      %v1894 = vadd.f32 0.0, %v1893
      %v1895 = vpop.f32.mrb[0].mxu0
      %v1896 = vadd.f32 0.0, %v1895
      %v1897 = vpop.f32.mrb[0].mxu0
      %v1898 = vadd.f32 0.0, %v1897
      %v1899 = vpop.f32.mrb[0].mxu0
      %v1900 = vadd.f32 0.0, %v1899
      %1901 = vmatprep.mubr.bf16.mxu0 0
      %1902 = vmatmul.mubr.bf16.gmra.mrb[0].mxu0 %v1009
      %v1903 = vpop.f32.mrb[0].mxu0
      %v1904 = vadd.f32 0.0, %v1903
      %v1905 = vpop.f32.mrb[0].mxu0
      %v1906 = vadd.f32 0.0, %v1905
      %v1907 = vpop.f32.mrb[0].mxu0
      %v1908 = vadd.f32 0.0, %v1907
      %v1909 = vpop.f32.mrb[0].mxu0
      %v1910 = vadd.f32 0.0, %v1909
      %1911 = vdwg.mxu0
      %1912 = vmatprep.subr.bf16.mxu0 %v791
      %1913 = vmatpush1.bf16.msra.mxu0 %v790
      %1914 = vmatprep.subr.bf16.mxu0 %v853
      %1915 = vmatpush1.bf16.msra.mxu0 %v852
      %1916 = vmatprep.subr.bf16.mxu0 0
      %1917 = vmatpush1.bf16.msra.mxu0 0
      %1918 = vmatprep.subr.bf16.mxu0 0
      %1919 = vmatpush1.bf16.msra.mxu0 0
      %1920 = vmatprep.subr.bf16.mxu0 0
      %1921 = vmatpush1.bf16.msra.mxu0 0
      %1922 = vmatprep.subr.bf16.mxu0 0
      %1923 = vmatpush1.bf16.msra.mxu0 0
      %1924 = vmatprep.subr.bf16.mxu0 0
      %1925 = vmatpush1.bf16.msra.mxu0 0
      %1926 = vmatprep.subr.bf16.mxu0 0
      %1927 = vmatpush1.bf16.msra.mxu0 0
      %1928 = vmatprep.subr.bf16.mxu0 0
      %1929 = vmatpush1.bf16.msra.mxu0 0
      %1930 = vmatprep.subr.bf16.mxu0 0
      %1931 = vmatpush1.bf16.msra.mxu0 0
      %1932 = vmatprep.subr.bf16.mxu0 0
      %1933 = vmatpush1.bf16.msra.mxu0 0
      %1934 = vmatprep.subr.bf16.mxu0 0
      %1935 = vmatpush1.bf16.msra.mxu0 0
      %1936 = vmatprep.subr.bf16.mxu0 0
      %1937 = vmatpush1.bf16.msra.mxu0 0
      %1938 = vmatprep.subr.bf16.mxu0 0
      %1939 = vmatpush1.bf16.msra.mxu0 0
      %1940 = vmatprep.subr.bf16.mxu0 0
      %1941 = vmatpush1.bf16.msra.mxu0 0
      %1942 = vmatprep.subr.bf16.mxu0 0
      %1943 = vmatpush1.bf16.msra.mxu0 0
      %1944 = vmatprep.mubr.bf16.mxu0 0
      %1945 = vmatmul.mubr.bf16.gmra.mrb[0].mxu0 %v1006
      %v1946 = vpop.f32.mrb[0].mxu0
      %v1947 = vadd.f32 0.0, %v1946
      %v1948 = vpop.f32.mrb[0].mxu0
      %v1949 = vadd.f32 0.0, %v1948
      %v1950 = vpop.f32.mrb[0].mxu0
      %v1951 = vadd.f32 0.0, %v1950
      %v1952 = vpop.f32.mrb[0].mxu0
      %v1953 = vadd.f32 0.0, %v1952
      %1954 = vmatprep.mubr.bf16.mxu0 0
      %1955 = vmatmul.mubr.bf16.gmra.mrb[0].mxu0 %v1009
      %v1956 = vpop.f32.mrb[0].mxu0
      %v1957 = vadd.f32 0.0, %v1956
      %v1958 = vpop.f32.mrb[0].mxu0
      %v1959 = vadd.f32 0.0, %v1958
      %v1960 = vpop.f32.mrb[0].mxu0
      %v1961 = vadd.f32 0.0, %v1960
      %v1962 = vpop.f32.mrb[0].mxu0
      %v1963 = vadd.f32 0.0, %v1962
      %1964 = vdwg.mxu0
      %1965 = vmatprep.subr.bf16.mxu0 %v793
      %1966 = vmatpush1.bf16.msra.mxu0 %v792
      %1967 = vmatprep.subr.bf16.mxu0 %v855
      %1968 = vmatpush1.bf16.msra.mxu0 %v854
      %1969 = vmatprep.subr.bf16.mxu0 0
      %1970 = vmatpush1.bf16.msra.mxu0 0
      %1971 = vmatprep.subr.bf16.mxu0 0
      %1972 = vmatpush1.bf16.msra.mxu0 0
      %1973 = vmatprep.subr.bf16.mxu0 0
      %1974 = vmatpush1.bf16.msra.mxu0 0
      %1975 = vmatprep.subr.bf16.mxu0 0
      %1976 = vmatpush1.bf16.msra.mxu0 0
      %1977 = vmatprep.subr.bf16.mxu0 0
      %1978 = vmatpush1.bf16.msra.mxu0 0
      %1979 = vmatprep.subr.bf16.mxu0 0
      %1980 = vmatpush1.bf16.msra.mxu0 0
      %1981 = vmatprep.subr.bf16.mxu0 0
      %1982 = vmatpush1.bf16.msra.mxu0 0
      %1983 = vmatprep.subr.bf16.mxu0 0
      %1984 = vmatpush1.bf16.msra.mxu0 0
      %1985 = vmatprep.subr.bf16.mxu0 0
      %1986 = vmatpush1.bf16.msra.mxu0 0
      %1987 = vmatprep.subr.bf16.mxu0 0
      %1988 = vmatpush1.bf16.msra.mxu0 0
      %1989 = vmatprep.subr.bf16.mxu0 0
      %1990 = vmatpush1.bf16.msra.mxu0 0
      %1991 = vmatprep.subr.bf16.mxu0 0
      %1992 = vmatpush1.bf16.msra.mxu0 0
      %1993 = vmatprep.subr.bf16.mxu0 0
      %1994 = vmatpush1.bf16.msra.mxu0 0
      %1995 = vmatprep.subr.bf16.mxu0 0
      %1996 = vmatpush1.bf16.msra.mxu0 0
      %1997 = vmatprep.mubr.bf16.mxu0 0
      %1998 = vmatmul.mubr.bf16.gmra.mrb[0].mxu0 %v1006
      %v1999 = vpop.f32.mrb[0].mxu0
      %v2000 = vadd.f32 0.0, %v1999
      %v2001 = vpop.f32.mrb[0].mxu0
      %v2002 = vadd.f32 0.0, %v2001
      %v2003 = vpop.f32.mrb[0].mxu0
      %v2004 = vadd.f32 0.0, %v2003
      %v2005 = vpop.f32.mrb[0].mxu0
      %v2006 = vadd.f32 0.0, %v2005
      %2007 = vmatprep.mubr.bf16.mxu0 0
      %2008 = vmatmul.mubr.bf16.gmra.mrb[0].mxu0 %v1009
      %v2009 = vpop.f32.mrb[0].mxu0
      %v2010 = vadd.f32 0.0, %v2009
      %v2011 = vpop.f32.mrb[0].mxu0
      %v2012 = vadd.f32 0.0, %v2011
      %v2013 = vpop.f32.mrb[0].mxu0
      %v2014 = vadd.f32 0.0, %v2013
      %v2015 = vpop.f32.mrb[0].mxu0
      %v2016 = vadd.f32 0.0, %v2015
      %2017 = vdwg.mxu0
      %2018 = vmatprep.subr.bf16.mxu0 %v795
      %2019 = vmatpush1.bf16.msra.mxu0 %v794
      %2020 = vmatprep.subr.bf16.mxu0 %v857
      %2021 = vmatpush1.bf16.msra.mxu0 %v856
      %2022 = vmatprep.subr.bf16.mxu0 0
      %2023 = vmatpush1.bf16.msra.mxu0 0
      %2024 = vmatprep.subr.bf16.mxu0 0
      %2025 = vmatpush1.bf16.msra.mxu0 0
      %2026 = vmatprep.subr.bf16.mxu0 0
      %2027 = vmatpush1.bf16.msra.mxu0 0
      %2028 = vmatprep.subr.bf16.mxu0 0
      %2029 = vmatpush1.bf16.msra.mxu0 0
      %2030 = vmatprep.subr.bf16.mxu0 0
      %2031 = vmatpush1.bf16.msra.mxu0 0
      %2032 = vmatprep.subr.bf16.mxu0 0
      %2033 = vmatpush1.bf16.msra.mxu0 0
      %2034 = vmatprep.subr.bf16.mxu0 0
      %2035 = vmatpush1.bf16.msra.mxu0 0
      %2036 = vmatprep.subr.bf16.mxu0 0
      %2037 = vmatpush1.bf16.msra.mxu0 0
      %2038 = vmatprep.subr.bf16.mxu0 0
      %2039 = vmatpush1.bf16.msra.mxu0 0
      %2040 = vmatprep.subr.bf16.mxu0 0
      %2041 = vmatpush1.bf16.msra.mxu0 0
      %2042 = vmatprep.subr.bf16.mxu0 0
      %2043 = vmatpush1.bf16.msra.mxu0 0
      %2044 = vmatprep.subr.bf16.mxu0 0
      %2045 = vmatpush1.bf16.msra.mxu0 0
      %2046 = vmatprep.subr.bf16.mxu0 0
      %2047 = vmatpush1.bf16.msra.mxu0 0
      %2048 = vmatprep.subr.bf16.mxu0 0
      %2049 = vmatpush1.bf16.msra.mxu0 0
      %2050 = vmatprep.mubr.bf16.mxu0 0
      %2051 = vmatmul.mubr.bf16.gmra.mrb[0].mxu0 %v1006
      %v2052 = vpop.f32.mrb[0].mxu0
      %v2053 = vadd.f32 0.0, %v2052
      %v2054 = vpop.f32.mrb[0].mxu0
      %v2055 = vadd.f32 0.0, %v2054
      %v2056 = vpop.f32.mrb[0].mxu0
      %v2057 = vadd.f32 0.0, %v2056
      %v2058 = vpop.f32.mrb[0].mxu0
      %v2059 = vadd.f32 0.0, %v2058
      %2060 = vmatprep.mubr.bf16.mxu0 0
      %2061 = vmatmul.mubr.bf16.gmra.mrb[0].mxu0 %v1009
      %v2062 = vpop.f32.mrb[0].mxu0
      %v2063 = vadd.f32 0.0, %v2062
      %v2064 = vpop.f32.mrb[0].mxu0
      %v2065 = vadd.f32 0.0, %v2064
      %v2066 = vpop.f32.mrb[0].mxu0
      %v2067 = vadd.f32 0.0, %v2066
      %v2068 = vpop.f32.mrb[0].mxu0
      %v2069 = vadd.f32 0.0, %v2068
      %2070 = vdwg.mxu0
      %2071 = vmatprep.subr.bf16.mxu0 %v797
      %2072 = vmatpush1.bf16.msra.mxu0 %v796
      %2073 = vmatprep.subr.bf16.mxu0 %v859
      %2074 = vmatpush1.bf16.msra.mxu0 %v858
      %2075 = vmatprep.subr.bf16.mxu0 0
      %2076 = vmatpush1.bf16.msra.mxu0 0
      %2077 = vmatprep.subr.bf16.mxu0 0
      %2078 = vmatpush1.bf16.msra.mxu0 0
      %2079 = vmatprep.subr.bf16.mxu0 0
      %2080 = vmatpush1.bf16.msra.mxu0 0
      %2081 = vmatprep.subr.bf16.mxu0 0
      %2082 = vmatpush1.bf16.msra.mxu0 0
      %2083 = vmatprep.subr.bf16.mxu0 0
      %2084 = vmatpush1.bf16.msra.mxu0 0
      %2085 = vmatprep.subr.bf16.mxu0 0
      %2086 = vmatpush1.bf16.msra.mxu0 0
      %2087 = vmatprep.subr.bf16.mxu0 0
      %2088 = vmatpush1.bf16.msra.mxu0 0
      %2089 = vmatprep.subr.bf16.mxu0 0
      %2090 = vmatpush1.bf16.msra.mxu0 0
      %2091 = vmatprep.subr.bf16.mxu0 0
      %2092 = vmatpush1.bf16.msra.mxu0 0
      %2093 = vmatprep.subr.bf16.mxu0 0
      %2094 = vmatpush1.bf16.msra.mxu0 0
      %2095 = vmatprep.subr.bf16.mxu0 0
      %2096 = vmatpush1.bf16.msra.mxu0 0
      %2097 = vmatprep.subr.bf16.mxu0 0
      %2098 = vmatpush1.bf16.msra.mxu0 0
      %2099 = vmatprep.subr.bf16.mxu0 0
      %2100 = vmatpush1.bf16.msra.mxu0 0
      %2101 = vmatprep.subr.bf16.mxu0 0
      %2102 = vmatpush1.bf16.msra.mxu0 0
      %2103 = vmatprep.mubr.bf16.mxu0 0
      %2104 = vmatmul.mubr.bf16.gmra.mrb[0].mxu0 %v1006
      %v2105 = vpop.f32.mrb[0].mxu0
      %v2106 = vadd.f32 0.0, %v2105
      %v2107 = vpop.f32.mrb[0].mxu0
      %v2108 = vadd.f32 0.0, %v2107
      %v2109 = vpop.f32.mrb[0].mxu0
      %v2110 = vadd.f32 0.0, %v2109
      %v2111 = vpop.f32.mrb[0].mxu0
      %v2112 = vadd.f32 0.0, %v2111
      %2113 = vmatprep.mubr.bf16.mxu0 0
      %2114 = vmatmul.mubr.bf16.gmra.mrb[0].mxu0 %v1009
      %v2115 = vpop.f32.mrb[0].mxu0
      %v2116 = vadd.f32 0.0, %v2115
      %v2117 = vpop.f32.mrb[0].mxu0
      %v2118 = vadd.f32 0.0, %v2117
      %v2119 = vpop.f32.mrb[0].mxu0
      %v2120 = vadd.f32 0.0, %v2119
      %v2121 = vpop.f32.mrb[0].mxu0
      %v2122 = vadd.f32 0.0, %v2121
      %2123 = vdwg.mxu0
      %2124 = vmatprep.subr.bf16.mxu0 %v799
      %2125 = vmatpush1.bf16.msra.mxu0 %v798
      %2126 = vmatprep.subr.bf16.mxu0 %v861
      %2127 = vmatpush1.bf16.msra.mxu0 %v860
      %2128 = vmatprep.subr.bf16.mxu0 0
      %2129 = vmatpush1.bf16.msra.mxu0 0
      %2130 = vmatprep.subr.bf16.mxu0 0
      %2131 = vmatpush1.bf16.msra.mxu0 0
      %2132 = vmatprep.subr.bf16.mxu0 0
      %2133 = vmatpush1.bf16.msra.mxu0 0
      %2134 = vmatprep.subr.bf16.mxu0 0
      %2135 = vmatpush1.bf16.msra.mxu0 0
      %2136 = vmatprep.subr.bf16.mxu0 0
      %2137 = vmatpush1.bf16.msra.mxu0 0
      %2138 = vmatprep.subr.bf16.mxu0 0
      %2139 = vmatpush1.bf16.msra.mxu0 0
      %2140 = vmatprep.subr.bf16.mxu0 0
      %2141 = vmatpush1.bf16.msra.mxu0 0
      %2142 = vmatprep.subr.bf16.mxu0 0
      %2143 = vmatpush1.bf16.msra.mxu0 0
      %2144 = vmatprep.subr.bf16.mxu0 0
      %2145 = vmatpush1.bf16.msra.mxu0 0
      %2146 = vmatprep.subr.bf16.mxu0 0
      %2147 = vmatpush1.bf16.msra.mxu0 0
      %2148 = vmatprep.subr.bf16.mxu0 0
      %2149 = vmatpush1.bf16.msra.mxu0 0
      %2150 = vmatprep.subr.bf16.mxu0 0
      %2151 = vmatpush1.bf16.msra.mxu0 0
      %2152 = vmatprep.subr.bf16.mxu0 0
      %2153 = vmatpush1.bf16.msra.mxu0 0
      %2154 = vmatprep.subr.bf16.mxu0 0
      %2155 = vmatpush1.bf16.msra.mxu0 0
      %2156 = vmatprep.mubr.bf16.mxu0 0
      %2157 = vmatmul.mubr.bf16.gmra.mrb[0].mxu0 %v1006
      %v2158 = vpop.f32.mrb[0].mxu0
      %v2159 = vadd.f32 0.0, %v2158
      %v2160 = vpop.f32.mrb[0].mxu0
      %v2161 = vadd.f32 0.0, %v2160
      %v2162 = vpop.f32.mrb[0].mxu0
      %v2163 = vadd.f32 0.0, %v2162
      %v2164 = vpop.f32.mrb[0].mxu0
      %v2165 = vadd.f32 0.0, %v2164
      %2166 = vmatprep.mubr.bf16.mxu0 0
      %2167 = vmatmul.mubr.bf16.gmra.mrb[0].mxu0 %v1009
      %v2168 = vpop.f32.mrb[0].mxu0
      %v2169 = vadd.f32 0.0, %v2168
      %v2170 = vpop.f32.mrb[0].mxu0
      %v2171 = vadd.f32 0.0, %v2170
      %v2172 = vpop.f32.mrb[0].mxu0
      %v2173 = vadd.f32 0.0, %v2172
      %v2174 = vpop.f32.mrb[0].mxu0
      %v2175 = vadd.f32 0.0, %v2174
      %2176 = vdwg.mxu0
      %2177 = vmatprep.subr.bf16.mxu0 %v801
      %2178 = vmatpush1.bf16.msra.mxu0 %v800
      %2179 = vmatprep.subr.bf16.mxu0 %v863
      %2180 = vmatpush1.bf16.msra.mxu0 %v862
      %2181 = vmatprep.subr.bf16.mxu0 0
      %2182 = vmatpush1.bf16.msra.mxu0 0
      %2183 = vmatprep.subr.bf16.mxu0 0
      %2184 = vmatpush1.bf16.msra.mxu0 0
      %2185 = vmatprep.subr.bf16.mxu0 0
      %2186 = vmatpush1.bf16.msra.mxu0 0
      %2187 = vmatprep.subr.bf16.mxu0 0
      %2188 = vmatpush1.bf16.msra.mxu0 0
      %2189 = vmatprep.subr.bf16.mxu0 0
      %2190 = vmatpush1.bf16.msra.mxu0 0
      %2191 = vmatprep.subr.bf16.mxu0 0
      %2192 = vmatpush1.bf16.msra.mxu0 0
      %2193 = vmatprep.subr.bf16.mxu0 0
      %2194 = vmatpush1.bf16.msra.mxu0 0
      %2195 = vmatprep.subr.bf16.mxu0 0
      %2196 = vmatpush1.bf16.msra.mxu0 0
      %2197 = vmatprep.subr.bf16.mxu0 0
      %2198 = vmatpush1.bf16.msra.mxu0 0
      %2199 = vmatprep.subr.bf16.mxu0 0
      %2200 = vmatpush1.bf16.msra.mxu0 0
      %2201 = vmatprep.subr.bf16.mxu0 0
      %2202 = vmatpush1.bf16.msra.mxu0 0
      %2203 = vmatprep.subr.bf16.mxu0 0
      %2204 = vmatpush1.bf16.msra.mxu0 0
      %2205 = vmatprep.subr.bf16.mxu0 0
      %2206 = vmatpush1.bf16.msra.mxu0 0
      %2207 = vmatprep.subr.bf16.mxu0 0
      %2208 = vmatpush1.bf16.msra.mxu0 0
      %2209 = vmatprep.mubr.bf16.mxu0 0
      %2210 = vmatmul.mubr.bf16.gmra.mrb[0].mxu0 %v1006
      %v2211 = vpop.f32.mrb[0].mxu0
      %v2212 = vadd.f32 0.0, %v2211
      %v2213 = vpop.f32.mrb[0].mxu0
      %v2214 = vadd.f32 0.0, %v2213
      %v2215 = vpop.f32.mrb[0].mxu0
      %v2216 = vadd.f32 0.0, %v2215
      %v2217 = vpop.f32.mrb[0].mxu0
      %v2218 = vadd.f32 0.0, %v2217
      %2219 = vmatprep.mubr.bf16.mxu0 0
      %2220 = vmatmul.mubr.bf16.gmra.mrb[0].mxu0 %v1009
      %v2221 = vpop.f32.mrb[0].mxu0
      %v2222 = vadd.f32 0.0, %v2221
      %v2223 = vpop.f32.mrb[0].mxu0
      %v2224 = vadd.f32 0.0, %v2223
      %v2225 = vpop.f32.mrb[0].mxu0
      %v2226 = vadd.f32 0.0, %v2225
      %v2227 = vpop.f32.mrb[0].mxu0
      %v2228 = vadd.f32 0.0, %v2227
      %2229 = vdwg.mxu0
      %2230 = vmatprep.subr.bf16.mxu0 %v803
      %2231 = vmatpush1.bf16.msra.mxu0 %v802
      %2232 = vmatprep.subr.bf16.mxu0 %v865
      %2233 = vmatpush1.bf16.msra.mxu0 %v864
      %2234 = vmatprep.subr.bf16.mxu0 0
      %2235 = vmatpush1.bf16.msra.mxu0 0
      %2236 = vmatprep.subr.bf16.mxu0 0
      %2237 = vmatpush1.bf16.msra.mxu0 0
      %2238 = vmatprep.subr.bf16.mxu0 0
      %2239 = vmatpush1.bf16.msra.mxu0 0
      %2240 = vmatprep.subr.bf16.mxu0 0
      %2241 = vmatpush1.bf16.msra.mxu0 0
      %2242 = vmatprep.subr.bf16.mxu0 0
      %2243 = vmatpush1.bf16.msra.mxu0 0
      %2244 = vmatprep.subr.bf16.mxu0 0
      %2245 = vmatpush1.bf16.msra.mxu0 0
      %2246 = vmatprep.subr.bf16.mxu0 0
      %2247 = vmatpush1.bf16.msra.mxu0 0
      %2248 = vmatprep.subr.bf16.mxu0 0
      %2249 = vmatpush1.bf16.msra.mxu0 0
      %2250 = vmatprep.subr.bf16.mxu0 0
      %2251 = vmatpush1.bf16.msra.mxu0 0
      %2252 = vmatprep.subr.bf16.mxu0 0
      %2253 = vmatpush1.bf16.msra.mxu0 0
      %2254 = vmatprep.subr.bf16.mxu0 0
      %2255 = vmatpush1.bf16.msra.mxu0 0
      %2256 = vmatprep.subr.bf16.mxu0 0
      %2257 = vmatpush1.bf16.msra.mxu0 0
      %2258 = vmatprep.subr.bf16.mxu0 0
      %2259 = vmatpush1.bf16.msra.mxu0 0
      %2260 = vmatprep.subr.bf16.mxu0 0
      %2261 = vmatpush1.bf16.msra.mxu0 0
      %2262 = vmatprep.mubr.bf16.mxu0 0
      %2263 = vmatmul.mubr.bf16.gmra.mrb[0].mxu0 %v1006
      %v2264 = vpop.f32.mrb[0].mxu0
      %v2265 = vadd.f32 0.0, %v2264
      %v2266 = vpop.f32.mrb[0].mxu0
      %v2267 = vadd.f32 0.0, %v2266
      %v2268 = vpop.f32.mrb[0].mxu0
      %v2269 = vadd.f32 0.0, %v2268
      %v2270 = vpop.f32.mrb[0].mxu0
      %v2271 = vadd.f32 0.0, %v2270
      %2272 = vmatprep.mubr.bf16.mxu0 0
      %2273 = vmatmul.mubr.bf16.gmra.mrb[0].mxu0 %v1009
      %v2274 = vpop.f32.mrb[0].mxu0
      %v2275 = vadd.f32 0.0, %v2274
      %v2276 = vpop.f32.mrb[0].mxu0
      %v2277 = vadd.f32 0.0, %v2276
      %v2278 = vpop.f32.mrb[0].mxu0
      %v2279 = vadd.f32 0.0, %v2278
      %v2280 = vpop.f32.mrb[0].mxu0
      %v2281 = vadd.f32 0.0, %v2280
      %2282 = vdwg.mxu0
      %2283 = vmatprep.subr.bf16.mxu0 %v805
      %2284 = vmatpush1.bf16.msra.mxu0 %v804
      %2285 = vmatprep.subr.bf16.mxu0 %v867
      %2286 = vmatpush1.bf16.msra.mxu0 %v866
      %2287 = vmatprep.subr.bf16.mxu0 0
      %2288 = vmatpush1.bf16.msra.mxu0 0
      %2289 = vmatprep.subr.bf16.mxu0 0
      %2290 = vmatpush1.bf16.msra.mxu0 0
      %2291 = vmatprep.subr.bf16.mxu0 0
      %2292 = vmatpush1.bf16.msra.mxu0 0
      %2293 = vmatprep.subr.bf16.mxu0 0
      %2294 = vmatpush1.bf16.msra.mxu0 0
      %2295 = vmatprep.subr.bf16.mxu0 0
      %2296 = vmatpush1.bf16.msra.mxu0 0
      %2297 = vmatprep.subr.bf16.mxu0 0
      %2298 = vmatpush1.bf16.msra.mxu0 0
      %2299 = vmatprep.subr.bf16.mxu0 0
      %2300 = vmatpush1.bf16.msra.mxu0 0
      %2301 = vmatprep.subr.bf16.mxu0 0
      %2302 = vmatpush1.bf16.msra.mxu0 0
      %2303 = vmatprep.subr.bf16.mxu0 0
      %2304 = vmatpush1.bf16.msra.mxu0 0
      %2305 = vmatprep.subr.bf16.mxu0 0
      %2306 = vmatpush1.bf16.msra.mxu0 0
      %2307 = vmatprep.subr.bf16.mxu0 0
      %2308 = vmatpush1.bf16.msra.mxu0 0
      %2309 = vmatprep.subr.bf16.mxu0 0
      %2310 = vmatpush1.bf16.msra.mxu0 0
      %2311 = vmatprep.subr.bf16.mxu0 0
      %2312 = vmatpush1.bf16.msra.mxu0 0
      %2313 = vmatprep.subr.bf16.mxu0 0
      %2314 = vmatpush1.bf16.msra.mxu0 0
      %2315 = vmatprep.mubr.bf16.mxu0 0
      %2316 = vmatmul.mubr.bf16.gmra.mrb[0].mxu0 %v1006
      %v2317 = vpop.f32.mrb[0].mxu0
      %v2318 = vadd.f32 0.0, %v2317
      %v2319 = vpop.f32.mrb[0].mxu0
      %v2320 = vadd.f32 0.0, %v2319
      %v2321 = vpop.f32.mrb[0].mxu0
      %v2322 = vadd.f32 0.0, %v2321
      %v2323 = vpop.f32.mrb[0].mxu0
      %v2324 = vadd.f32 0.0, %v2323
      %2325 = vmatprep.mubr.bf16.mxu0 0
      %2326 = vmatmul.mubr.bf16.gmra.mrb[0].mxu0 %v1009
      %v2327 = vpop.f32.mrb[0].mxu0
      %v2328 = vadd.f32 0.0, %v2327
      %v2329 = vpop.f32.mrb[0].mxu0
      %v2330 = vadd.f32 0.0, %v2329
      %v2331 = vpop.f32.mrb[0].mxu0
      %v2332 = vadd.f32 0.0, %v2331
      %v2333 = vpop.f32.mrb[0].mxu0
      %v2334 = vadd.f32 0.0, %v2333
      %2335 = vdwg.mxu0
      %2336 = vmatprep.subr.bf16.mxu0 %v807
      %2337 = vmatpush1.bf16.msra.mxu0 %v806
      %2338 = vmatprep.subr.bf16.mxu0 %v869
      %2339 = vmatpush1.bf16.msra.mxu0 %v868
      %2340 = vmatprep.subr.bf16.mxu0 0
      %2341 = vmatpush1.bf16.msra.mxu0 0
      %2342 = vmatprep.subr.bf16.mxu0 0
      %2343 = vmatpush1.bf16.msra.mxu0 0
      %2344 = vmatprep.subr.bf16.mxu0 0
      %2345 = vmatpush1.bf16.msra.mxu0 0
      %2346 = vmatprep.subr.bf16.mxu0 0
      %2347 = vmatpush1.bf16.msra.mxu0 0
      %2348 = vmatprep.subr.bf16.mxu0 0
      %2349 = vmatpush1.bf16.msra.mxu0 0
      %2350 = vmatprep.subr.bf16.mxu0 0
      %2351 = vmatpush1.bf16.msra.mxu0 0
      %2352 = vmatprep.subr.bf16.mxu0 0
      %2353 = vmatpush1.bf16.msra.mxu0 0
      %2354 = vmatprep.subr.bf16.mxu0 0
      %2355 = vmatpush1.bf16.msra.mxu0 0
      %2356 = vmatprep.subr.bf16.mxu0 0
      %2357 = vmatpush1.bf16.msra.mxu0 0
      %2358 = vmatprep.subr.bf16.mxu0 0
      %2359 = vmatpush1.bf16.msra.mxu0 0
      %2360 = vmatprep.subr.bf16.mxu0 0
      %2361 = vmatpush1.bf16.msra.mxu0 0
      %2362 = vmatprep.subr.bf16.mxu0 0
      %2363 = vmatpush1.bf16.msra.mxu0 0
      %2364 = vmatprep.subr.bf16.mxu0 0
      %2365 = vmatpush1.bf16.msra.mxu0 0
      %2366 = vmatprep.subr.bf16.mxu0 0
      %2367 = vmatpush1.bf16.msra.mxu0 0
      %2368 = vmatprep.mubr.bf16.mxu0 0
      %2369 = vmatmul.mubr.bf16.gmra.mrb[0].mxu0 %v1006
      %v2370 = vpop.f32.mrb[0].mxu0
      %v2371 = vadd.f32 0.0, %v2370
      %v2372 = vpop.f32.mrb[0].mxu0
      %v2373 = vadd.f32 0.0, %v2372
      %v2374 = vpop.f32.mrb[0].mxu0
      %v2375 = vadd.f32 0.0, %v2374
      %v2376 = vpop.f32.mrb[0].mxu0
      %v2377 = vadd.f32 0.0, %v2376
      %2378 = vmatprep.mubr.bf16.mxu0 0
      %2379 = vmatmul.mubr.bf16.gmra.mrb[0].mxu0 %v1009
      %v2380 = vpop.f32.mrb[0].mxu0
      %v2381 = vadd.f32 0.0, %v2380
      %v2382 = vpop.f32.mrb[0].mxu0
      %v2383 = vadd.f32 0.0, %v2382
      %v2384 = vpop.f32.mrb[0].mxu0
      %v2385 = vadd.f32 0.0, %v2384
      %v2386 = vpop.f32.mrb[0].mxu0
      %v2387 = vadd.f32 0.0, %v2386
      %2388 = vdwg.mxu0
      %2389 = vmatprep.subr.bf16.mxu0 %v809
      %2390 = vmatpush1.bf16.msra.mxu0 %v808
      %2391 = vmatprep.subr.bf16.mxu0 %v871
      %2392 = vmatpush1.bf16.msra.mxu0 %v870
      %2393 = vmatprep.subr.bf16.mxu0 0
      %2394 = vmatpush1.bf16.msra.mxu0 0
      %2395 = vmatprep.subr.bf16.mxu0 0
      %2396 = vmatpush1.bf16.msra.mxu0 0
      %2397 = vmatprep.subr.bf16.mxu0 0
      %2398 = vmatpush1.bf16.msra.mxu0 0
      %2399 = vmatprep.subr.bf16.mxu0 0
      %2400 = vmatpush1.bf16.msra.mxu0 0
      %2401 = vmatprep.subr.bf16.mxu0 0
      %2402 = vmatpush1.bf16.msra.mxu0 0
      %2403 = vmatprep.subr.bf16.mxu0 0
      %2404 = vmatpush1.bf16.msra.mxu0 0
      %2405 = vmatprep.subr.bf16.mxu0 0
      %2406 = vmatpush1.bf16.msra.mxu0 0
      %2407 = vmatprep.subr.bf16.mxu0 0
      %2408 = vmatpush1.bf16.msra.mxu0 0
      %2409 = vmatprep.subr.bf16.mxu0 0
      %2410 = vmatpush1.bf16.msra.mxu0 0
      %2411 = vmatprep.subr.bf16.mxu0 0
      %2412 = vmatpush1.bf16.msra.mxu0 0
      %2413 = vmatprep.subr.bf16.mxu0 0
      %2414 = vmatpush1.bf16.msra.mxu0 0
      %2415 = vmatprep.subr.bf16.mxu0 0
      %2416 = vmatpush1.bf16.msra.mxu0 0
      %2417 = vmatprep.subr.bf16.mxu0 0
      %2418 = vmatpush1.bf16.msra.mxu0 0
      %2419 = vmatprep.subr.bf16.mxu0 0
      %2420 = vmatpush1.bf16.msra.mxu0 0
      %2421 = vmatprep.mubr.bf16.mxu0 0
      %2422 = vmatmul.mubr.bf16.gmra.mrb[0].mxu0 %v1006
      %v2423 = vpop.f32.mrb[0].mxu0
      %v2424 = vadd.f32 0.0, %v2423
      %v2425 = vpop.f32.mrb[0].mxu0
      %v2426 = vadd.f32 0.0, %v2425
      %v2427 = vpop.f32.mrb[0].mxu0
      %v2428 = vadd.f32 0.0, %v2427
      %v2429 = vpop.f32.mrb[0].mxu0
      %v2430 = vadd.f32 0.0, %v2429
      %2431 = vmatprep.mubr.bf16.mxu0 0
      %2432 = vmatmul.mubr.bf16.gmra.mrb[0].mxu0 %v1009
      %v2433 = vpop.f32.mrb[0].mxu0
      %v2434 = vadd.f32 0.0, %v2433
      %v2435 = vpop.f32.mrb[0].mxu0
      %v2436 = vadd.f32 0.0, %v2435
      %v2437 = vpop.f32.mrb[0].mxu0
      %v2438 = vadd.f32 0.0, %v2437
      %v2439 = vpop.f32.mrb[0].mxu0
      %v2440 = vadd.f32 0.0, %v2439
      %2441 = vdwg.mxu0
      %2442 = vmatprep.subr.bf16.mxu0 %v811
      %2443 = vmatpush1.bf16.msra.mxu0 %v810
      %2444 = vmatprep.subr.bf16.mxu0 %v873
      %2445 = vmatpush1.bf16.msra.mxu0 %v872
      %2446 = vmatprep.subr.bf16.mxu0 0
      %2447 = vmatpush1.bf16.msra.mxu0 0
      %2448 = vmatprep.subr.bf16.mxu0 0
      %2449 = vmatpush1.bf16.msra.mxu0 0
      %2450 = vmatprep.subr.bf16.mxu0 0
      %2451 = vmatpush1.bf16.msra.mxu0 0
      %2452 = vmatprep.subr.bf16.mxu0 0
      %2453 = vmatpush1.bf16.msra.mxu0 0
      %2454 = vmatprep.subr.bf16.mxu0 0
      %2455 = vmatpush1.bf16.msra.mxu0 0
      %2456 = vmatprep.subr.bf16.mxu0 0
      %2457 = vmatpush1.bf16.msra.mxu0 0
      %2458 = vmatprep.subr.bf16.mxu0 0
      %2459 = vmatpush1.bf16.msra.mxu0 0
      %2460 = vmatprep.subr.bf16.mxu0 0
      %2461 = vmatpush1.bf16.msra.mxu0 0
      %2462 = vmatprep.subr.bf16.mxu0 0
      %2463 = vmatpush1.bf16.msra.mxu0 0
      %2464 = vmatprep.subr.bf16.mxu0 0
      %2465 = vmatpush1.bf16.msra.mxu0 0
      %2466 = vmatprep.subr.bf16.mxu0 0
      %2467 = vmatpush1.bf16.msra.mxu0 0
      %2468 = vmatprep.subr.bf16.mxu0 0
      %2469 = vmatpush1.bf16.msra.mxu0 0
      %2470 = vmatprep.subr.bf16.mxu0 0
      %2471 = vmatpush1.bf16.msra.mxu0 0
      %2472 = vmatprep.subr.bf16.mxu0 0
      %2473 = vmatpush1.bf16.msra.mxu0 0
      %2474 = vmatprep.mubr.bf16.mxu0 0
      %2475 = vmatmul.mubr.bf16.gmra.mrb[0].mxu0 %v1006
      %v2476 = vpop.f32.mrb[0].mxu0
      %v2477 = vadd.f32 0.0, %v2476
      %v2478 = vpop.f32.mrb[0].mxu0
      %v2479 = vadd.f32 0.0, %v2478
      %v2480 = vpop.f32.mrb[0].mxu0
      %v2481 = vadd.f32 0.0, %v2480
      %v2482 = vpop.f32.mrb[0].mxu0
      %v2483 = vadd.f32 0.0, %v2482
      %2484 = vmatprep.mubr.bf16.mxu0 0
      %2485 = vmatmul.mubr.bf16.gmra.mrb[0].mxu0 %v1009
      %v2486 = vpop.f32.mrb[0].mxu0
      %v2487 = vadd.f32 0.0, %v2486
      %v2488 = vpop.f32.mrb[0].mxu0
      %v2489 = vadd.f32 0.0, %v2488
      %v2490 = vpop.f32.mrb[0].mxu0
      %v2491 = vadd.f32 0.0, %v2490
      %v2492 = vpop.f32.mrb[0].mxu0
      %v2493 = vadd.f32 0.0, %v2492
      %2494 = vdwg.mxu0
      %2495 = vmatprep.subr.bf16.mxu0 %v813
      %2496 = vmatpush1.bf16.msra.mxu0 %v812
      %2497 = vmatprep.subr.bf16.mxu0 %v875
      %2498 = vmatpush1.bf16.msra.mxu0 %v874
      %2499 = vmatprep.subr.bf16.mxu0 0
      %2500 = vmatpush1.bf16.msra.mxu0 0
      %2501 = vmatprep.subr.bf16.mxu0 0
      %2502 = vmatpush1.bf16.msra.mxu0 0
      %2503 = vmatprep.subr.bf16.mxu0 0
      %2504 = vmatpush1.bf16.msra.mxu0 0
      %2505 = vmatprep.subr.bf16.mxu0 0
      %2506 = vmatpush1.bf16.msra.mxu0 0
      %2507 = vmatprep.subr.bf16.mxu0 0
      %2508 = vmatpush1.bf16.msra.mxu0 0
      %2509 = vmatprep.subr.bf16.mxu0 0
      %2510 = vmatpush1.bf16.msra.mxu0 0
      %2511 = vmatprep.subr.bf16.mxu0 0
      %2512 = vmatpush1.bf16.msra.mxu0 0
      %2513 = vmatprep.subr.bf16.mxu0 0
      %2514 = vmatpush1.bf16.msra.mxu0 0
      %2515 = vmatprep.subr.bf16.mxu0 0
      %2516 = vmatpush1.bf16.msra.mxu0 0
      %2517 = vmatprep.subr.bf16.mxu0 0
      %2518 = vmatpush1.bf16.msra.mxu0 0
      %2519 = vmatprep.subr.bf16.mxu0 0
      %2520 = vmatpush1.bf16.msra.mxu0 0
      %2521 = vmatprep.subr.bf16.mxu0 0
      %2522 = vmatpush1.bf16.msra.mxu0 0
      %2523 = vmatprep.subr.bf16.mxu0 0
      %2524 = vmatpush1.bf16.msra.mxu0 0
      %2525 = vmatprep.subr.bf16.mxu0 0
      %2526 = vmatpush1.bf16.msra.mxu0 0
      %2527 = vmatprep.mubr.bf16.mxu0 0
      %2528 = vmatmul.mubr.bf16.gmra.mrb[0].mxu0 %v1006
      %v2529 = vpop.f32.mrb[0].mxu0
      %v2530 = vadd.f32 0.0, %v2529
      %v2531 = vpop.f32.mrb[0].mxu0
      %v2532 = vadd.f32 0.0, %v2531
      %v2533 = vpop.f32.mrb[0].mxu0
      %v2534 = vadd.f32 0.0, %v2533
      %v2535 = vpop.f32.mrb[0].mxu0
      %v2536 = vadd.f32 0.0, %v2535
      %2537 = vmatprep.mubr.bf16.mxu0 0
      %2538 = vmatmul.mubr.bf16.gmra.mrb[0].mxu0 %v1009
      %v2539 = vpop.f32.mrb[0].mxu0
      %v2540 = vadd.f32 0.0, %v2539
      %v2541 = vpop.f32.mrb[0].mxu0
      %v2542 = vadd.f32 0.0, %v2541
      %v2543 = vpop.f32.mrb[0].mxu0
      %v2544 = vadd.f32 0.0, %v2543
      %v2545 = vpop.f32.mrb[0].mxu0
      %v2546 = vadd.f32 0.0, %v2545
      %2547 = vdwg.mxu0
      %2548 = vmatprep.subr.bf16.mxu0 %v815
      %2549 = vmatpush1.bf16.msra.mxu0 %v814
      %2550 = vmatprep.subr.bf16.mxu0 %v877
      %2551 = vmatpush1.bf16.msra.mxu0 %v876
      %2552 = vmatprep.subr.bf16.mxu0 0
      %2553 = vmatpush1.bf16.msra.mxu0 0
      %2554 = vmatprep.subr.bf16.mxu0 0
      %2555 = vmatpush1.bf16.msra.mxu0 0
      %2556 = vmatprep.subr.bf16.mxu0 0
      %2557 = vmatpush1.bf16.msra.mxu0 0
      %2558 = vmatprep.subr.bf16.mxu0 0
      %2559 = vmatpush1.bf16.msra.mxu0 0
      %2560 = vmatprep.subr.bf16.mxu0 0
      %2561 = vmatpush1.bf16.msra.mxu0 0
      %2562 = vmatprep.subr.bf16.mxu0 0
      %2563 = vmatpush1.bf16.msra.mxu0 0
      %2564 = vmatprep.subr.bf16.mxu0 0
      %2565 = vmatpush1.bf16.msra.mxu0 0
      %2566 = vmatprep.subr.bf16.mxu0 0
      %2567 = vmatpush1.bf16.msra.mxu0 0
      %2568 = vmatprep.subr.bf16.mxu0 0
      %2569 = vmatpush1.bf16.msra.mxu0 0
      %2570 = vmatprep.subr.bf16.mxu0 0
      %2571 = vmatpush1.bf16.msra.mxu0 0
      %2572 = vmatprep.subr.bf16.mxu0 0
      %2573 = vmatpush1.bf16.msra.mxu0 0
      %2574 = vmatprep.subr.bf16.mxu0 0
      %2575 = vmatpush1.bf16.msra.mxu0 0
      %2576 = vmatprep.subr.bf16.mxu0 0
      %2577 = vmatpush1.bf16.msra.mxu0 0
      %2578 = vmatprep.subr.bf16.mxu0 0
      %2579 = vmatpush1.bf16.msra.mxu0 0
      %2580 = vmatprep.mubr.bf16.mxu0 0
      %2581 = vmatmul.mubr.bf16.gmra.mrb[0].mxu0 %v1006
      %v2582 = vpop.f32.mrb[0].mxu0
      %v2583 = vadd.f32 0.0, %v2582
      %v2584 = vpop.f32.mrb[0].mxu0
      %v2585 = vadd.f32 0.0, %v2584
      %v2586 = vpop.f32.mrb[0].mxu0
      %v2587 = vadd.f32 0.0, %v2586
      %v2588 = vpop.f32.mrb[0].mxu0
      %v2589 = vadd.f32 0.0, %v2588
      %2590 = vmatprep.mubr.bf16.mxu0 0
      %2591 = vmatmul.mubr.bf16.gmra.mrb[0].mxu0 %v1009
      %v2592 = vpop.f32.mrb[0].mxu0
      %v2593 = vadd.f32 0.0, %v2592
      %v2594 = vpop.f32.mrb[0].mxu0
      %v2595 = vadd.f32 0.0, %v2594
      %v2596 = vpop.f32.mrb[0].mxu0
      %v2597 = vadd.f32 0.0, %v2596
      %v2598 = vpop.f32.mrb[0].mxu0
      %v2599 = vadd.f32 0.0, %v2598
      %2600 = vdwg.mxu0
      %2601 = vmatprep.subr.bf16.mxu0 %v817
      %2602 = vmatpush1.bf16.msra.mxu0 %v816
      %2603 = vmatprep.subr.bf16.mxu0 %v879
      %2604 = vmatpush1.bf16.msra.mxu0 %v878
      %2605 = vmatprep.subr.bf16.mxu0 0
      %2606 = vmatpush1.bf16.msra.mxu0 0
      %2607 = vmatprep.subr.bf16.mxu0 0
      %2608 = vmatpush1.bf16.msra.mxu0 0
      %2609 = vmatprep.subr.bf16.mxu0 0
      %2610 = vmatpush1.bf16.msra.mxu0 0
      %2611 = vmatprep.subr.bf16.mxu0 0
      %2612 = vmatpush1.bf16.msra.mxu0 0
      %2613 = vmatprep.subr.bf16.mxu0 0
      %2614 = vmatpush1.bf16.msra.mxu0 0
      %2615 = vmatprep.subr.bf16.mxu0 0
      %2616 = vmatpush1.bf16.msra.mxu0 0
      %2617 = vmatprep.subr.bf16.mxu0 0
      %2618 = vmatpush1.bf16.msra.mxu0 0
      %2619 = vmatprep.subr.bf16.mxu0 0
      %2620 = vmatpush1.bf16.msra.mxu0 0
      %2621 = vmatprep.subr.bf16.mxu0 0
      %2622 = vmatpush1.bf16.msra.mxu0 0
      %2623 = vmatprep.subr.bf16.mxu0 0
      %2624 = vmatpush1.bf16.msra.mxu0 0
      %2625 = vmatprep.subr.bf16.mxu0 0
      %2626 = vmatpush1.bf16.msra.mxu0 0
      %2627 = vmatprep.subr.bf16.mxu0 0
      %2628 = vmatpush1.bf16.msra.mxu0 0
      %2629 = vmatprep.subr.bf16.mxu0 0
      %2630 = vmatpush1.bf16.msra.mxu0 0
      %2631 = vmatprep.subr.bf16.mxu0 0
      %2632 = vmatpush1.bf16.msra.mxu0 0
      %2633 = vmatprep.mubr.bf16.mxu0 0
      %2634 = vmatmul.mubr.bf16.gmra.mrb[0].mxu0 %v1006
      %v2635 = vpop.f32.mrb[0].mxu0
      %v2636 = vadd.f32 0.0, %v2635
      %v2637 = vpop.f32.mrb[0].mxu0
      %v2638 = vadd.f32 0.0, %v2637
      %v2639 = vpop.f32.mrb[0].mxu0
      %v2640 = vadd.f32 0.0, %v2639
      %v2641 = vpop.f32.mrb[0].mxu0
      %v2642 = vadd.f32 0.0, %v2641
      %2643 = vmatprep.mubr.bf16.mxu0 0
      %2644 = vmatmul.mubr.bf16.gmra.mrb[0].mxu0 %v1009
      %v2645 = vpop.f32.mrb[0].mxu0
      %v2646 = vadd.f32 0.0, %v2645
      %v2647 = vpop.f32.mrb[0].mxu0
      %v2648 = vadd.f32 0.0, %v2647
      %v2649 = vpop.f32.mrb[0].mxu0
      %v2650 = vadd.f32 0.0, %v2649
      %v2651 = vpop.f32.mrb[0].mxu0
      %v2652 = vadd.f32 0.0, %v2651
      %2653 = vdwg.mxu0
      %v2654 = vpack.c.bf16 %v1050, %v1046
      %v2655 = vpack.c.bf16 %v1052, %v1048
      %v2656 = vpack.c.bf16 %v1103, %v1099
      %v2657 = vpack.c.bf16 %v1105, %v1101
      %v2658 = vpack.c.bf16 %v1156, %v1152
      %v2659 = vpack.c.bf16 %v1158, %v1154
      %v2660 = vpack.c.bf16 %v1209, %v1205
      %v2661 = vpack.c.bf16 %v1211, %v1207
      %v2662 = vpack.c.bf16 %v1262, %v1258
      %v2663 = vpack.c.bf16 %v1264, %v1260
      %v2664 = vpack.c.bf16 %v1315, %v1311
      %v2665 = vpack.c.bf16 %v1317, %v1313
      %v2666 = vpack.c.bf16 %v1368, %v1364
      %v2667 = vpack.c.bf16 %v1370, %v1366
      %v2668 = vpack.c.bf16 %v1421, %v1417
      %v2669 = vpack.c.bf16 %v1423, %v1419
      %v2670 = vpack.c.bf16 %v1474, %v1470
      %v2671 = vpack.c.bf16 %v1476, %v1472
      %v2672 = vpack.c.bf16 %v1527, %v1523
      %v2673 = vpack.c.bf16 %v1529, %v1525
      %v2674 = vpack.c.bf16 %v1580, %v1576
      %v2675 = vpack.c.bf16 %v1582, %v1578
      %v2676 = vpack.c.bf16 %v1633, %v1629
      %v2677 = vpack.c.bf16 %v1635, %v1631
      %v2678 = vpack.c.bf16 %v1686, %v1682
      %v2679 = vpack.c.bf16 %v1688, %v1684
      %v2680 = vpack.c.bf16 %v1739, %v1735
      %v2681 = vpack.c.bf16 %v1741, %v1737
      %v2682 = vpack.c.bf16 %v1792, %v1788
      %v2683 = vpack.c.bf16 %v1794, %v1790
      %v2684 = vpack.c.bf16 %v1845, %v1841
      %v2685 = vpack.c.bf16 %v1847, %v1843
      %v2686 = vpack.c.bf16 %v1898, %v1894
      %v2687 = vpack.c.bf16 %v1900, %v1896
      %v2688 = vpack.c.bf16 %v1951, %v1947
      %v2689 = vpack.c.bf16 %v1953, %v1949
      %v2690 = vpack.c.bf16 %v2004, %v2000
      %v2691 = vpack.c.bf16 %v2006, %v2002
      %v2692 = vpack.c.bf16 %v2057, %v2053
      %v2693 = vpack.c.bf16 %v2059, %v2055
      %v2694 = vpack.c.bf16 %v2110, %v2106
      %v2695 = vpack.c.bf16 %v2112, %v2108
      %v2696 = vpack.c.bf16 %v2163, %v2159
      %v2697 = vpack.c.bf16 %v2165, %v2161
      %v2698 = vpack.c.bf16 %v2216, %v2212
      %v2699 = vpack.c.bf16 %v2218, %v2214
      %v2700 = vpack.c.bf16 %v2269, %v2265
      %v2701 = vpack.c.bf16 %v2271, %v2267
      %v2702 = vpack.c.bf16 %v2322, %v2318
      %v2703 = vpack.c.bf16 %v2324, %v2320
      %v2704 = vpack.c.bf16 %v2375, %v2371
      %v2705 = vpack.c.bf16 %v2377, %v2373
      %v2706 = vpack.c.bf16 %v2428, %v2424
      %v2707 = vpack.c.bf16 %v2430, %v2426
      %v2708 = vpack.c.bf16 %v2481, %v2477
      %v2709 = vpack.c.bf16 %v2483, %v2479
      %v2710 = vpack.c.bf16 %v2534, %v2530
      %v2711 = vpack.c.bf16 %v2536, %v2532
      %v2712 = vpack.c.bf16 %v2587, %v2583
      %v2713 = vpack.c.bf16 %v2589, %v2585
      %v2714 = vpack.c.bf16 %v2640, %v2636
      %v2715 = vpack.c.bf16 %v2642, %v2638
      %v2716 = vpack.c.bf16 %v1060, %v1056
      %v2717 = vpack.c.bf16 %v1062, %v1058
      %v2718 = vpack.c.bf16 %v1113, %v1109
      %v2719 = vpack.c.bf16 %v1115, %v1111
      %v2720 = vpack.c.bf16 %v1166, %v1162
      %v2721 = vpack.c.bf16 %v1168, %v1164
      %v2722 = vpack.c.bf16 %v1219, %v1215
      %v2723 = vpack.c.bf16 %v1221, %v1217
      %v2724 = vpack.c.bf16 %v1272, %v1268
      %v2725 = vpack.c.bf16 %v1274, %v1270
      %v2726 = vpack.c.bf16 %v1325, %v1321
      %v2727 = vpack.c.bf16 %v1327, %v1323
      %v2728 = vpack.c.bf16 %v1378, %v1374
      %v2729 = vpack.c.bf16 %v1380, %v1376
      %v2730 = vpack.c.bf16 %v1431, %v1427
      %v2731 = vpack.c.bf16 %v1433, %v1429
      %v2732 = vpack.c.bf16 %v1484, %v1480
      %v2733 = vpack.c.bf16 %v1486, %v1482
      %v2734 = vpack.c.bf16 %v1537, %v1533
      %v2735 = vpack.c.bf16 %v1539, %v1535
      %v2736 = vpack.c.bf16 %v1590, %v1586
      %v2737 = vpack.c.bf16 %v1592, %v1588
      %v2738 = vpack.c.bf16 %v1643, %v1639
      %v2739 = vpack.c.bf16 %v1645, %v1641
      %v2740 = vpack.c.bf16 %v1696, %v1692
      %v2741 = vpack.c.bf16 %v1698, %v1694
      %v2742 = vpack.c.bf16 %v1749, %v1745
      %v2743 = vpack.c.bf16 %v1751, %v1747
      %v2744 = vpack.c.bf16 %v1802, %v1798
      %v2745 = vpack.c.bf16 %v1804, %v1800
      %v2746 = vpack.c.bf16 %v1855, %v1851
      %v2747 = vpack.c.bf16 %v1857, %v1853
      %v2748 = vpack.c.bf16 %v1908, %v1904
      %v2749 = vpack.c.bf16 %v1910, %v1906
      %v2750 = vpack.c.bf16 %v1961, %v1957
      %v2751 = vpack.c.bf16 %v1963, %v1959
      %v2752 = vpack.c.bf16 %v2014, %v2010
      %v2753 = vpack.c.bf16 %v2016, %v2012
      %v2754 = vpack.c.bf16 %v2067, %v2063
      %v2755 = vpack.c.bf16 %v2069, %v2065
      %v2756 = vpack.c.bf16 %v2120, %v2116
      %v2757 = vpack.c.bf16 %v2122, %v2118
      %v2758 = vpack.c.bf16 %v2173, %v2169
      %v2759 = vpack.c.bf16 %v2175, %v2171
      %v2760 = vpack.c.bf16 %v2226, %v2222
      %v2761 = vpack.c.bf16 %v2228, %v2224
      %v2762 = vpack.c.bf16 %v2279, %v2275
      %v2763 = vpack.c.bf16 %v2281, %v2277
      %v2764 = vpack.c.bf16 %v2332, %v2328
      %v2765 = vpack.c.bf16 %v2334, %v2330
      %v2766 = vpack.c.bf16 %v2385, %v2381
      %v2767 = vpack.c.bf16 %v2387, %v2383
      %v2768 = vpack.c.bf16 %v2438, %v2434
      %v2769 = vpack.c.bf16 %v2440, %v2436
      %v2770 = vpack.c.bf16 %v2491, %v2487
      %v2771 = vpack.c.bf16 %v2493, %v2489
      %v2772 = vpack.c.bf16 %v2544, %v2540
      %v2773 = vpack.c.bf16 %v2546, %v2542
      %v2774 = vpack.c.bf16 %v2597, %v2593
      %v2775 = vpack.c.bf16 %v2599, %v2595
      %v2776 = vpack.c.bf16 %v2650, %v2646
      %v2777 = vpack.c.bf16 %v2652, %v2648
      %2778 = vst [vmem:[#allocation2] sm:$0xff] %v2654
      %2779 = vst [vmem:[#allocation2 + $0x8] sm:$0xff] %v2655
      %2780 = vst [vmem:[#allocation2 + $0x10] sm:$0xff] %v2656
      %2781 = vst [vmem:[#allocation2 + $0x18] sm:$0xff] %v2657
      %2782 = vst [vmem:[#allocation2 + $0x20] sm:$0xff] %v2658
      %2783 = vst [vmem:[#allocation2 + $0x28] sm:$0xff] %v2659
      %2784 = vst [vmem:[#allocation2 + $0x30] sm:$0xff] %v2660
      %2785 = vst [vmem:[#allocation2 + $0x38] sm:$0xff] %v2661
      %2786 = vst [vmem:[#allocation2 + $0x40] sm:$0xff] %v2662
      %2787 = vst [vmem:[#allocation2 + $0x48] sm:$0xff] %v2663
      %2788 = vst [vmem:[#allocation2 + $0x50] sm:$0xff] %v2664
      %2789 = vst [vmem:[#allocation2 + $0x58] sm:$0xff] %v2665
      %2790 = vst [vmem:[#allocation2 + $0x60] sm:$0xff] %v2666
      %2791 = vst [vmem:[#allocation2 + $0x68] sm:$0xff] %v2667
      %2792 = vst [vmem:[#allocation2 + $0x70] sm:$0xff] %v2668
      %2793 = vst [vmem:[#allocation2 + $0x78] sm:$0xff] %v2669
      %2794 = vst [vmem:[#allocation2 + $0x80] sm:$0xff] %v2670
      %2795 = vst [vmem:[#allocation2 + $0x88] sm:$0xff] %v2671
      %2796 = vst [vmem:[#allocation2 + $0x90] sm:$0xff] %v2672
      %2797 = vst [vmem:[#allocation2 + $0x98] sm:$0xff] %v2673
      %2798 = vst [vmem:[#allocation2 + $0xa0] sm:$0xff] %v2674
      %2799 = vst [vmem:[#allocation2 + $0xa8] sm:$0xff] %v2675
      %2800 = vst [vmem:[#allocation2 + $0xb0] sm:$0xff] %v2676
      %2801 = vst [vmem:[#allocation2 + $0xb8] sm:$0xff] %v2677
      %2802 = vst [vmem:[#allocation2 + $0xc0] sm:$0xff] %v2678
      %2803 = vst [vmem:[#allocation2 + $0xc8] sm:$0xff] %v2679
      %2804 = vst [vmem:[#allocation2 + $0xd0] sm:$0xff] %v2680
      %2805 = vst [vmem:[#allocation2 + $0xd8] sm:$0xff] %v2681
      %2806 = vst [vmem:[#allocation2 + $0xe0] sm:$0xff] %v2682
      %2807 = vst [vmem:[#allocation2 + $0xe8] sm:$0xff] %v2683
      %2808 = vst [vmem:[#allocation2 + $0xf0] sm:$0xff] %v2684
      %2809 = vst [vmem:[#allocation2 + $0xf8] sm:$0xff] %v2685
      %2810 = vst [vmem:[#allocation2 + $0x100] sm:$0xff] %v2686
      %2811 = vst [vmem:[#allocation2 + $0x108] sm:$0xff] %v2687
      %2812 = vst [vmem:[#allocation2 + $0x110] sm:$0xff] %v2688
      %2813 = vst [vmem:[#allocation2 + $0x118] sm:$0xff] %v2689
      %2814 = vst [vmem:[#allocation2 + $0x120] sm:$0xff] %v2690
      %2815 = vst [vmem:[#allocation2 + $0x128] sm:$0xff] %v2691
      %2816 = vst [vmem:[#allocation2 + $0x130] sm:$0xff] %v2692
      %2817 = vst [vmem:[#allocation2 + $0x138] sm:$0xff] %v2693
      %2818 = vst [vmem:[#allocation2 + $0x140] sm:$0xff] %v2694
      %2819 = vst [vmem:[#allocation2 + $0x148] sm:$0xff] %v2695
      %2820 = vst [vmem:[#allocation2 + $0x150] sm:$0xff] %v2696
      %2821 = vst [vmem:[#allocation2 + $0x158] sm:$0xff] %v2697
      %2822 = vst [vmem:[#allocation2 + $0x160] sm:$0xff] %v2698
      %2823 = vst [vmem:[#allocation2 + $0x168] sm:$0xff] %v2699
      %2824 = vst [vmem:[#allocation2 + $0x170] sm:$0xff] %v2700
      %2825 = vst [vmem:[#allocation2 + $0x178] sm:$0xff] %v2701
      %2826 = vst [vmem:[#allocation2 + $0x180] sm:$0xff] %v2702
      %2827 = vst [vmem:[#allocation2 + $0x188] sm:$0xff] %v2703
      %2828 = vst [vmem:[#allocation2 + $0x190] sm:$0xff] %v2704
      %2829 = vst [vmem:[#allocation2 + $0x198] sm:$0xff] %v2705
      %2830 = vst [vmem:[#allocation2 + $0x1a0] sm:$0xff] %v2706
      %2831 = vst [vmem:[#allocation2 + $0x1a8] sm:$0xff] %v2707
      %2832 = vst [vmem:[#allocation2 + $0x1b0] sm:$0xff] %v2708
      %2833 = vst [vmem:[#allocation2 + $0x1b8] sm:$0xff] %v2709
      %2834 = vst [vmem:[#allocation2 + $0x1c0] sm:$0xff] %v2710
      %2835 = vst [vmem:[#allocation2 + $0x1c8] sm:$0xff] %v2711
      %2836 = vst [vmem:[#allocation2 + $0x1d0] sm:$0xff] %v2712
      %2837 = vst [vmem:[#allocation2 + $0x1d8] sm:$0xff] %v2713
      %2838 = vst [vmem:[#allocation2 + $0x1e0] sm:$0xff] %v2714
      %2839 = vst [vmem:[#allocation2 + $0x1e8] sm:$0xff] %v2715
      %2840 = vst [vmem:[#allocation2 + $0x1f0] sm:$0xff] %v2716
      %2841 = vst [vmem:[#allocation2 + $0x1f8] sm:$0xff] %v2717
      %2842 = vst [vmem:[#allocation2 + $0x200] sm:$0xff] %v2718
      %2843 = vst [vmem:[#allocation2 + $0x208] sm:$0xff] %v2719
      %2844 = vst [vmem:[#allocation2 + $0x210] sm:$0xff] %v2720
      %2845 = vst [vmem:[#allocation2 + $0x218] sm:$0xff] %v2721
      %2846 = vst [vmem:[#allocation2 + $0x220] sm:$0xff] %v2722
      %2847 = vst [vmem:[#allocation2 + $0x228] sm:$0xff] %v2723
      %2848 = vst [vmem:[#allocation2 + $0x230] sm:$0xff] %v2724
      %2849 = vst [vmem:[#allocation2 + $0x238] sm:$0xff] %v2725
      %2850 = vst [vmem:[#allocation2 + $0x240] sm:$0xff] %v2726
      %2851 = vst [vmem:[#allocation2 + $0x248] sm:$0xff] %v2727
      %2852 = vst [vmem:[#allocation2 + $0x250] sm:$0xff] %v2728
      %2853 = vst [vmem:[#allocation2 + $0x258] sm:$0xff] %v2729
      %2854 = vst [vmem:[#allocation2 + $0x260] sm:$0xff] %v2730
      %2855 = vst [vmem:[#allocation2 + $0x268] sm:$0xff] %v2731
      %2856 = vst [vmem:[#allocation2 + $0x270] sm:$0xff] %v2732
      %2857 = vst [vmem:[#allocation2 + $0x278] sm:$0xff] %v2733
      %2858 = vst [vmem:[#allocation2 + $0x280] sm:$0xff] %v2734
      %2859 = vst [vmem:[#allocation2 + $0x288] sm:$0xff] %v2735
      %2860 = vst [vmem:[#allocation2 + $0x290] sm:$0xff] %v2736
      %2861 = vst [vmem:[#allocation2 + $0x298] sm:$0xff] %v2737
      %2862 = vst [vmem:[#allocation2 + $0x2a0] sm:$0xff] %v2738
      %2863 = vst [vmem:[#allocation2 + $0x2a8] sm:$0xff] %v2739
      %2864 = vst [vmem:[#allocation2 + $0x2b0] sm:$0xff] %v2740
      %2865 = vst [vmem:[#allocation2 + $0x2b8] sm:$0xff] %v2741
      %2866 = vst [vmem:[#allocation2 + $0x2c0] sm:$0xff] %v2742
      %2867 = vst [vmem:[#allocation2 + $0x2c8] sm:$0xff] %v2743
      %2868 = vst [vmem:[#allocation2 + $0x2d0] sm:$0xff] %v2744
      %2869 = vst [vmem:[#allocation2 + $0x2d8] sm:$0xff] %v2745
      %2870 = vst [vmem:[#allocation2 + $0x2e0] sm:$0xff] %v2746
      %2871 = vst [vmem:[#allocation2 + $0x2e8] sm:$0xff] %v2747
      %2872 = vst [vmem:[#allocation2 + $0x2f0] sm:$0xff] %v2748
      %2873 = vst [vmem:[#allocation2 + $0x2f8] sm:$0xff] %v2749
      %2874 = vst [vmem:[#allocation2 + $0x300] sm:$0xff] %v2750
      %2875 = vst [vmem:[#allocation2 + $0x308] sm:$0xff] %v2751
      %2876 = vst [vmem:[#allocation2 + $0x310] sm:$0xff] %v2752
      %2877 = vst [vmem:[#allocation2 + $0x318] sm:$0xff] %v2753
      %2878 = vst [vmem:[#allocation2 + $0x320] sm:$0xff] %v2754
      %2879 = vst [vmem:[#allocation2 + $0x328] sm:$0xff] %v2755
      %2880 = vst [vmem:[#allocation2 + $0x330] sm:$0xff] %v2756
      %2881 = vst [vmem:[#allocation2 + $0x338] sm:$0xff] %v2757
      %2882 = vst [vmem:[#allocation2 + $0x340] sm:$0xff] %v2758
      %2883 = vst [vmem:[#allocation2 + $0x348] sm:$0xff] %v2759
      %2884 = vst [vmem:[#allocation2 + $0x350] sm:$0xff] %v2760
      %2885 = vst [vmem:[#allocation2 + $0x358] sm:$0xff] %v2761
      %2886 = vst [vmem:[#allocation2 + $0x360] sm:$0xff] %v2762
      %2887 = vst [vmem:[#allocation2 + $0x368] sm:$0xff] %v2763
      %2888 = vst [vmem:[#allocation2 + $0x370] sm:$0xff] %v2764
      %2889 = vst [vmem:[#allocation2 + $0x378] sm:$0xff] %v2765
      %2890 = vst [vmem:[#allocation2 + $0x380] sm:$0xff] %v2766
      %2891 = vst [vmem:[#allocation2 + $0x388] sm:$0xff] %v2767
      %2892 = vst [vmem:[#allocation2 + $0x390] sm:$0xff] %v2768
      %2893 = vst [vmem:[#allocation2 + $0x398] sm:$0xff] %v2769
      %2894 = vst [vmem:[#allocation2 + $0x3a0] sm:$0xff] %v2770
      %2895 = vst [vmem:[#allocation2 + $0x3a8] sm:$0xff] %v2771
      %2896 = vst [vmem:[#allocation2 + $0x3b0] sm:$0xff] %v2772
      %2897 = vst [vmem:[#allocation2 + $0x3b8] sm:$0xff] %v2773
      %2898 = vst [vmem:[#allocation2 + $0x3c0] sm:$0xff] %v2774
      %2899 = vst [vmem:[#allocation2 + $0x3c8] sm:$0xff] %v2775
      %2900 = vst [vmem:[#allocation2 + $0x3d0] sm:$0xff] %v2776
      %2901 = vst [vmem:[#allocation2 + $0x3d8] sm:$0xff] %v2777
      %v2902 = vld [vmem:[#allocation2] sm:$0xff]
      %v2903 = vld [vmem:[#allocation2 + $0x8] sm:$0xff]
      %v2904 = vld [vmem:[#allocation2 + $0x1f0] sm:$0xff]
      %v2905 = vld [vmem:[#allocation2 + $0x1f8] sm:$0xff]
      %2906 = vst [vmem:[#allocation3] sm:$0xff] %v2902
      %2907 = vst [vmem:[#allocation3 + $0x8] sm:$0xff] %v2903
      %2908 = vst [vmem:[#allocation3 + $0x10] sm:$0xff] %v2904
      %2909 = vst [vmem:[#allocation3 + $0x18] sm:$0xff] %v2905
      %v2910 = vld [vmem:[#allocation2 + $0x10] sm:$0xff]
      %v2911 = vld [vmem:[#allocation2 + $0x18] sm:$0xff]
      %v2912 = vld [vmem:[#allocation2 + $0x200] sm:$0xff]
      %v2913 = vld [vmem:[#allocation2 + $0x208] sm:$0xff]
      %2914 = vst [vmem:[#allocation3 + $0x20] sm:$0xff] %v2910
      %2915 = vst [vmem:[#allocation3 + $0x28] sm:$0xff] %v2911
      %2916 = vst [vmem:[#allocation3 + $0x30] sm:$0xff] %v2912
      %2917 = vst [vmem:[#allocation3 + $0x38] sm:$0xff] %v2913
      %v2918 = vld [vmem:[#allocation2 + $0x20] sm:$0xff]
      %v2919 = vld [vmem:[#allocation2 + $0x28] sm:$0xff]
      %v2920 = vld [vmem:[#allocation2 + $0x210] sm:$0xff]
      %v2921 = vld [vmem:[#allocation2 + $0x218] sm:$0xff]
      %2922 = vst [vmem:[#allocation3 + $0x40] sm:$0xff] %v2918
      %2923 = vst [vmem:[#allocation3 + $0x48] sm:$0xff] %v2919
      %2924 = vst [vmem:[#allocation3 + $0x50] sm:$0xff] %v2920
      %2925 = vst [vmem:[#allocation3 + $0x58] sm:$0xff] %v2921
      %v2926 = vld [vmem:[#allocation2 + $0x30] sm:$0xff]
      %v2927 = vld [vmem:[#allocation2 + $0x38] sm:$0xff]
      %v2928 = vld [vmem:[#allocation2 + $0x220] sm:$0xff]
      %v2929 = vld [vmem:[#allocation2 + $0x228] sm:$0xff]
      %2930 = vst [vmem:[#allocation3 + $0x60] sm:$0xff] %v2926
      %2931 = vst [vmem:[#allocation3 + $0x68] sm:$0xff] %v2927
      %2932 = vst [vmem:[#allocation3 + $0x70] sm:$0xff] %v2928
      %2933 = vst [vmem:[#allocation3 + $0x78] sm:$0xff] %v2929
      %v2934 = vld [vmem:[#allocation2 + $0x40] sm:$0xff]
      %v2935 = vld [vmem:[#allocation2 + $0x48] sm:$0xff]
      %v2936 = vld [vmem:[#allocation2 + $0x230] sm:$0xff]
      %v2937 = vld [vmem:[#allocation2 + $0x238] sm:$0xff]
      %2938 = vst [vmem:[#allocation3 + $0x80] sm:$0xff] %v2934
      %2939 = vst [vmem:[#allocation3 + $0x88] sm:$0xff] %v2935
      %2940 = vst [vmem:[#allocation3 + $0x90] sm:$0xff] %v2936
      %2941 = vst [vmem:[#allocation3 + $0x98] sm:$0xff] %v2937
      %v2942 = vld [vmem:[#allocation2 + $0x50] sm:$0xff]
      %v2943 = vld [vmem:[#allocation2 + $0x58] sm:$0xff]
      %v2944 = vld [vmem:[#allocation2 + $0x240] sm:$0xff]
      %v2945 = vld [vmem:[#allocation2 + $0x248] sm:$0xff]
      %2946 = vst [vmem:[#allocation3 + $0xa0] sm:$0xff] %v2942
      %2947 = vst [vmem:[#allocation3 + $0xa8] sm:$0xff] %v2943
      %2948 = vst [vmem:[#allocation3 + $0xb0] sm:$0xff] %v2944
      %2949 = vst [vmem:[#allocation3 + $0xb8] sm:$0xff] %v2945
      %v2950 = vld [vmem:[#allocation2 + $0x60] sm:$0xff]
      %v2951 = vld [vmem:[#allocation2 + $0x68] sm:$0xff]
      %v2952 = vld [vmem:[#allocation2 + $0x250] sm:$0xff]
      %v2953 = vld [vmem:[#allocation2 + $0x258] sm:$0xff]
      %2954 = vst [vmem:[#allocation3 + $0xc0] sm:$0xff] %v2950
      %2955 = vst [vmem:[#allocation3 + $0xc8] sm:$0xff] %v2951
      %2956 = vst [vmem:[#allocation3 + $0xd0] sm:$0xff] %v2952
      %2957 = vst [vmem:[#allocation3 + $0xd8] sm:$0xff] %v2953
      %v2958 = vld [vmem:[#allocation2 + $0x70] sm:$0xff]
      %v2959 = vld [vmem:[#allocation2 + $0x78] sm:$0xff]
      %v2960 = vld [vmem:[#allocation2 + $0x260] sm:$0xff]
      %v2961 = vld [vmem:[#allocation2 + $0x268] sm:$0xff]
      %2962 = vst [vmem:[#allocation3 + $0xe0] sm:$0xff] %v2958
      %2963 = vst [vmem:[#allocation3 + $0xe8] sm:$0xff] %v2959
      %2964 = vst [vmem:[#allocation3 + $0xf0] sm:$0xff] %v2960
      %2965 = vst [vmem:[#allocation3 + $0xf8] sm:$0xff] %v2961
      %v2966 = vld [vmem:[#allocation2 + $0x80] sm:$0xff]
      %v2967 = vld [vmem:[#allocation2 + $0x88] sm:$0xff]
      %v2968 = vld [vmem:[#allocation2 + $0x270] sm:$0xff]
      %v2969 = vld [vmem:[#allocation2 + $0x278] sm:$0xff]
      %2970 = vst [vmem:[#allocation3 + $0x100] sm:$0xff] %v2966
      %2971 = vst [vmem:[#allocation3 + $0x108] sm:$0xff] %v2967
      %2972 = vst [vmem:[#allocation3 + $0x110] sm:$0xff] %v2968
      %2973 = vst [vmem:[#allocation3 + $0x118] sm:$0xff] %v2969
      %v2974 = vld [vmem:[#allocation2 + $0x90] sm:$0xff]
      %v2975 = vld [vmem:[#allocation2 + $0x98] sm:$0xff]
      %v2976 = vld [vmem:[#allocation2 + $0x280] sm:$0xff]
      %v2977 = vld [vmem:[#allocation2 + $0x288] sm:$0xff]
      %2978 = vst [vmem:[#allocation3 + $0x120] sm:$0xff] %v2974
      %2979 = vst [vmem:[#allocation3 + $0x128] sm:$0xff] %v2975
      %2980 = vst [vmem:[#allocation3 + $0x130] sm:$0xff] %v2976
      %2981 = vst [vmem:[#allocation3 + $0x138] sm:$0xff] %v2977
      %v2982 = vld [vmem:[#allocation2 + $0xa0] sm:$0xff]
      %v2983 = vld [vmem:[#allocation2 + $0xa8] sm:$0xff]
      %v2984 = vld [vmem:[#allocation2 + $0x290] sm:$0xff]
      %v2985 = vld [vmem:[#allocation2 + $0x298] sm:$0xff]
      %2986 = vst [vmem:[#allocation3 + $0x140] sm:$0xff] %v2982
      %2987 = vst [vmem:[#allocation3 + $0x148] sm:$0xff] %v2983
      %2988 = vst [vmem:[#allocation3 + $0x150] sm:$0xff] %v2984
      %2989 = vst [vmem:[#allocation3 + $0x158] sm:$0xff] %v2985
      %v2990 = vld [vmem:[#allocation2 + $0xb0] sm:$0xff]
      %v2991 = vld [vmem:[#allocation2 + $0xb8] sm:$0xff]
      %v2992 = vld [vmem:[#allocation2 + $0x2a0] sm:$0xff]
      %v2993 = vld [vmem:[#allocation2 + $0x2a8] sm:$0xff]
      %2994 = vst [vmem:[#allocation3 + $0x160] sm:$0xff] %v2990
      %2995 = vst [vmem:[#allocation3 + $0x168] sm:$0xff] %v2991
      %2996 = vst [vmem:[#allocation3 + $0x170] sm:$0xff] %v2992
      %2997 = vst [vmem:[#allocation3 + $0x178] sm:$0xff] %v2993
      %v2998 = vld [vmem:[#allocation2 + $0xc0] sm:$0xff]
      %v2999 = vld [vmem:[#allocation2 + $0xc8] sm:$0xff]
      %v3000 = vld [vmem:[#allocation2 + $0x2b0] sm:$0xff]
      %v3001 = vld [vmem:[#allocation2 + $0x2b8] sm:$0xff]
      %3002 = vst [vmem:[#allocation3 + $0x180] sm:$0xff] %v2998
      %3003 = vst [vmem:[#allocation3 + $0x188] sm:$0xff] %v2999
      %3004 = vst [vmem:[#allocation3 + $0x190] sm:$0xff] %v3000
      %3005 = vst [vmem:[#allocation3 + $0x198] sm:$0xff] %v3001
      %v3006 = vld [vmem:[#allocation2 + $0xd0] sm:$0xff]
      %v3007 = vld [vmem:[#allocation2 + $0xd8] sm:$0xff]
      %v3008 = vld [vmem:[#allocation2 + $0x2c0] sm:$0xff]
      %v3009 = vld [vmem:[#allocation2 + $0x2c8] sm:$0xff]
      %3010 = vst [vmem:[#allocation3 + $0x1a0] sm:$0xff] %v3006
      %3011 = vst [vmem:[#allocation3 + $0x1a8] sm:$0xff] %v3007
      %3012 = vst [vmem:[#allocation3 + $0x1b0] sm:$0xff] %v3008
      %3013 = vst [vmem:[#allocation3 + $0x1b8] sm:$0xff] %v3009
      %v3014 = vld [vmem:[#allocation2 + $0xe0] sm:$0xff]
      %v3015 = vld [vmem:[#allocation2 + $0xe8] sm:$0xff]
      %v3016 = vld [vmem:[#allocation2 + $0x2d0] sm:$0xff]
      %v3017 = vld [vmem:[#allocation2 + $0x2d8] sm:$0xff]
      %3018 = vst [vmem:[#allocation3 + $0x1c0] sm:$0xff] %v3014
      %3019 = vst [vmem:[#allocation3 + $0x1c8] sm:$0xff] %v3015
      %3020 = vst [vmem:[#allocation3 + $0x1d0] sm:$0xff] %v3016
      %3021 = vst [vmem:[#allocation3 + $0x1d8] sm:$0xff] %v3017
      %v3022 = vld [vmem:[#allocation2 + $0xf0] sm:$0xff]
      %v3023 = vld [vmem:[#allocation2 + $0xf8] sm:$0xff]
      %v3024 = vld [vmem:[#allocation2 + $0x2e0] sm:$0xff]
      %v3025 = vld [vmem:[#allocation2 + $0x2e8] sm:$0xff]
      %3026 = vst [vmem:[#allocation3 + $0x1e0] sm:$0xff] %v3022
      %3027 = vst [vmem:[#allocation3 + $0x1e8] sm:$0xff] %v3023
      %3028 = vst [vmem:[#allocation3 + $0x1f0] sm:$0xff] %v3024
      %3029 = vst [vmem:[#allocation3 + $0x1f8] sm:$0xff] %v3025
      %v3030 = vld [vmem:[#allocation2 + $0x100] sm:$0xff]
      %v3031 = vld [vmem:[#allocation2 + $0x108] sm:$0xff]
      %v3032 = vld [vmem:[#allocation2 + $0x2f0] sm:$0xff]
      %v3033 = vld [vmem:[#allocation2 + $0x2f8] sm:$0xff]
      %3034 = vst [vmem:[#allocation3 + $0x200] sm:$0xff] %v3030
      %3035 = vst [vmem:[#allocation3 + $0x208] sm:$0xff] %v3031
      %3036 = vst [vmem:[#allocation3 + $0x210] sm:$0xff] %v3032
      %3037 = vst [vmem:[#allocation3 + $0x218] sm:$0xff] %v3033
      %v3038 = vld [vmem:[#allocation2 + $0x110] sm:$0xff]
      %v3039 = vld [vmem:[#allocation2 + $0x118] sm:$0xff]
      %v3040 = vld [vmem:[#allocation2 + $0x300] sm:$0xff]
      %v3041 = vld [vmem:[#allocation2 + $0x308] sm:$0xff]
      %3042 = vst [vmem:[#allocation3 + $0x220] sm:$0xff] %v3038
      %3043 = vst [vmem:[#allocation3 + $0x228] sm:$0xff] %v3039
      %3044 = vst [vmem:[#allocation3 + $0x230] sm:$0xff] %v3040
      %3045 = vst [vmem:[#allocation3 + $0x238] sm:$0xff] %v3041
      %v3046 = vld [vmem:[#allocation2 + $0x120] sm:$0xff]
      %v3047 = vld [vmem:[#allocation2 + $0x128] sm:$0xff]
      %v3048 = vld [vmem:[#allocation2 + $0x310] sm:$0xff]
      %v3049 = vld [vmem:[#allocation2 + $0x318] sm:$0xff]
      %3050 = vst [vmem:[#allocation3 + $0x240] sm:$0xff] %v3046
      %3051 = vst [vmem:[#allocation3 + $0x248] sm:$0xff] %v3047
      %3052 = vst [vmem:[#allocation3 + $0x250] sm:$0xff] %v3048
      %3053 = vst [vmem:[#allocation3 + $0x258] sm:$0xff] %v3049
      %v3054 = vld [vmem:[#allocation2 + $0x130] sm:$0xff]
      %v3055 = vld [vmem:[#allocation2 + $0x138] sm:$0xff]
      %v3056 = vld [vmem:[#allocation2 + $0x320] sm:$0xff]
      %v3057 = vld [vmem:[#allocation2 + $0x328] sm:$0xff]
      %3058 = vst [vmem:[#allocation3 + $0x260] sm:$0xff] %v3054
      %3059 = vst [vmem:[#allocation3 + $0x268] sm:$0xff] %v3055
      %3060 = vst [vmem:[#allocation3 + $0x270] sm:$0xff] %v3056
      %3061 = vst [vmem:[#allocation3 + $0x278] sm:$0xff] %v3057
      %v3062 = vld [vmem:[#allocation2 + $0x140] sm:$0xff]
      %v3063 = vld [vmem:[#allocation2 + $0x148] sm:$0xff]
      %v3064 = vld [vmem:[#allocation2 + $0x330] sm:$0xff]
      %v3065 = vld [vmem:[#allocation2 + $0x338] sm:$0xff]
      %3066 = vst [vmem:[#allocation3 + $0x280] sm:$0xff] %v3062
      %3067 = vst [vmem:[#allocation3 + $0x288] sm:$0xff] %v3063
      %3068 = vst [vmem:[#allocation3 + $0x290] sm:$0xff] %v3064
      %3069 = vst [vmem:[#allocation3 + $0x298] sm:$0xff] %v3065
      %v3070 = vld [vmem:[#allocation2 + $0x150] sm:$0xff]
      %v3071 = vld [vmem:[#allocation2 + $0x158] sm:$0xff]
      %v3072 = vld [vmem:[#allocation2 + $0x340] sm:$0xff]
      %v3073 = vld [vmem:[#allocation2 + $0x348] sm:$0xff]
      %3074 = vst [vmem:[#allocation3 + $0x2a0] sm:$0xff] %v3070
      %3075 = vst [vmem:[#allocation3 + $0x2a8] sm:$0xff] %v3071
      %3076 = vst [vmem:[#allocation3 + $0x2b0] sm:$0xff] %v3072
      %3077 = vst [vmem:[#allocation3 + $0x2b8] sm:$0xff] %v3073
      %v3078 = vld [vmem:[#allocation2 + $0x160] sm:$0xff]
      %v3079 = vld [vmem:[#allocation2 + $0x168] sm:$0xff]
      %v3080 = vld [vmem:[#allocation2 + $0x350] sm:$0xff]
      %v3081 = vld [vmem:[#allocation2 + $0x358] sm:$0xff]
      %3082 = vst [vmem:[#allocation3 + $0x2c0] sm:$0xff] %v3078
      %3083 = vst [vmem:[#allocation3 + $0x2c8] sm:$0xff] %v3079
      %3084 = vst [vmem:[#allocation3 + $0x2d0] sm:$0xff] %v3080
      %3085 = vst [vmem:[#allocation3 + $0x2d8] sm:$0xff] %v3081
      %v3086 = vld [vmem:[#allocation2 + $0x170] sm:$0xff]
      %v3087 = vld [vmem:[#allocation2 + $0x178] sm:$0xff]
      %v3088 = vld [vmem:[#allocation2 + $0x360] sm:$0xff]
      %v3089 = vld [vmem:[#allocation2 + $0x368] sm:$0xff]
      %3090 = vst [vmem:[#allocation3 + $0x2e0] sm:$0xff] %v3086
      %3091 = vst [vmem:[#allocation3 + $0x2e8] sm:$0xff] %v3087
      %3092 = vst [vmem:[#allocation3 + $0x2f0] sm:$0xff] %v3088
      %3093 = vst [vmem:[#allocation3 + $0x2f8] sm:$0xff] %v3089
      %v3094 = vld [vmem:[#allocation2 + $0x180] sm:$0xff]
      %v3095 = vld [vmem:[#allocation2 + $0x188] sm:$0xff]
      %v3096 = vld [vmem:[#allocation2 + $0x370] sm:$0xff]
      %v3097 = vld [vmem:[#allocation2 + $0x378] sm:$0xff]
      %3098 = vst [vmem:[#allocation3 + $0x300] sm:$0xff] %v3094
      %3099 = vst [vmem:[#allocation3 + $0x308] sm:$0xff] %v3095
      %3100 = vst [vmem:[#allocation3 + $0x310] sm:$0xff] %v3096
      %3101 = vst [vmem:[#allocation3 + $0x318] sm:$0xff] %v3097
      %v3102 = vld [vmem:[#allocation2 + $0x190] sm:$0xff]
      %v3103 = vld [vmem:[#allocation2 + $0x198] sm:$0xff]
      %v3104 = vld [vmem:[#allocation2 + $0x380] sm:$0xff]
      %v3105 = vld [vmem:[#allocation2 + $0x388] sm:$0xff]
      %3106 = vst [vmem:[#allocation3 + $0x320] sm:$0xff] %v3102
      %3107 = vst [vmem:[#allocation3 + $0x328] sm:$0xff] %v3103
      %3108 = vst [vmem:[#allocation3 + $0x330] sm:$0xff] %v3104
      %3109 = vst [vmem:[#allocation3 + $0x338] sm:$0xff] %v3105
      %v3110 = vld [vmem:[#allocation2 + $0x1a0] sm:$0xff]
      %v3111 = vld [vmem:[#allocation2 + $0x1a8] sm:$0xff]
      %v3112 = vld [vmem:[#allocation2 + $0x390] sm:$0xff]
      %v3113 = vld [vmem:[#allocation2 + $0x398] sm:$0xff]
      %3114 = vst [vmem:[#allocation3 + $0x340] sm:$0xff] %v3110
      %3115 = vst [vmem:[#allocation3 + $0x348] sm:$0xff] %v3111
      %3116 = vst [vmem:[#allocation3 + $0x350] sm:$0xff] %v3112
      %3117 = vst [vmem:[#allocation3 + $0x358] sm:$0xff] %v3113
      %v3118 = vld [vmem:[#allocation2 + $0x1b0] sm:$0xff]
      %v3119 = vld [vmem:[#allocation2 + $0x1b8] sm:$0xff]
      %v3120 = vld [vmem:[#allocation2 + $0x3a0] sm:$0xff]
      %v3121 = vld [vmem:[#allocation2 + $0x3a8] sm:$0xff]
      %3122 = vst [vmem:[#allocation3 + $0x360] sm:$0xff] %v3118
      %3123 = vst [vmem:[#allocation3 + $0x368] sm:$0xff] %v3119
      %3124 = vst [vmem:[#allocation3 + $0x370] sm:$0xff] %v3120
      %3125 = vst [vmem:[#allocation3 + $0x378] sm:$0xff] %v3121
      %v3126 = vld [vmem:[#allocation2 + $0x1c0] sm:$0xff]
      %v3127 = vld [vmem:[#allocation2 + $0x1c8] sm:$0xff]
      %v3128 = vld [vmem:[#allocation2 + $0x3b0] sm:$0xff]
      %v3129 = vld [vmem:[#allocation2 + $0x3b8] sm:$0xff]
      %3130 = vst [vmem:[#allocation3 + $0x380] sm:$0xff] %v3126
      %3131 = vst [vmem:[#allocation3 + $0x388] sm:$0xff] %v3127
      %3132 = vst [vmem:[#allocation3 + $0x390] sm:$0xff] %v3128
      %3133 = vst [vmem:[#allocation3 + $0x398] sm:$0xff] %v3129
      %v3134 = vld [vmem:[#allocation2 + $0x1d0] sm:$0xff]
      %v3135 = vld [vmem:[#allocation2 + $0x1d8] sm:$0xff]
      %v3136 = vld [vmem:[#allocation2 + $0x3c0] sm:$0xff]
      %v3137 = vld [vmem:[#allocation2 + $0x3c8] sm:$0xff]
      %3138 = vst [vmem:[#allocation3 + $0x3a0] sm:$0xff] %v3134
      %3139 = vst [vmem:[#allocation3 + $0x3a8] sm:$0xff] %v3135
      %3140 = vst [vmem:[#allocation3 + $0x3b0] sm:$0xff] %v3136
      %3141 = vst [vmem:[#allocation3 + $0x3b8] sm:$0xff] %v3137
      %v3142 = vld [vmem:[#allocation2 + $0x1e0] sm:$0xff]
      %v3143 = vld [vmem:[#allocation2 + $0x1e8] sm:$0xff]
      %v3144 = vld [vmem:[#allocation2 + $0x3d0] sm:$0xff]
      %v3145 = vld [vmem:[#allocation2 + $0x3d8] sm:$0xff]
      %3146 = vst [vmem:[#allocation3 + $0x3c0] sm:$0xff] %v3142
      %3147 = vst [vmem:[#allocation3 + $0x3c8] sm:$0xff] %v3143
      %3148 = vst [vmem:[#allocation3 + $0x3d0] sm:$0xff] %v3144
      %3149 = vst [vmem:[#allocation3 + $0x3d8] sm:$0xff] %v3145
      %v3150 = vld [vmem:[%s2] sm:$0xff]
      %v3151 = vld [vmem:[%s2 + $0x8] sm:$0xff]
      %v3152 = vld [vmem:[%s2 + $0x10] sm:$0xff]
      %v3153 = vld [vmem:[%s2 + $0x18] sm:$0xff]
      %v3154 = vld [vmem:[%s2 + $0x20] sm:$0xff]
      %v3155 = vld [vmem:[%s2 + $0x28] sm:$0xff]
      %v3156 = vld [vmem:[%s2 + $0x30] sm:$0xff]
      %v3157 = vld [vmem:[%s2 + $0x38] sm:$0xff]
      %v3158 = vld [vmem:[%s2 + $0x40] sm:$0xff]
      %v3159 = vld [vmem:[%s2 + $0x48] sm:$0xff]
      %v3160 = vld [vmem:[%s2 + $0x50] sm:$0xff]
      %v3161 = vld [vmem:[%s2 + $0x58] sm:$0xff]
      %v3162 = vld [vmem:[%s2 + $0x60] sm:$0xff]
      %v3163 = vld [vmem:[%s2 + $0x68] sm:$0xff]
      %v3164 = vld [vmem:[%s2 + $0x70] sm:$0xff]
      %v3165 = vld [vmem:[%s2 + $0x78] sm:$0xff]
      %v3166 = vld [vmem:[%s2 + $0x80] sm:$0xff]
      %v3167 = vld [vmem:[%s2 + $0x88] sm:$0xff]
      %v3168 = vld [vmem:[%s2 + $0x90] sm:$0xff]
      %v3169 = vld [vmem:[%s2 + $0x98] sm:$0xff]
      %v3170 = vld [vmem:[%s2 + $0xa0] sm:$0xff]
      %v3171 = vld [vmem:[%s2 + $0xa8] sm:$0xff]
      %v3172 = vld [vmem:[%s2 + $0xb0] sm:$0xff]
      %v3173 = vld [vmem:[%s2 + $0xb8] sm:$0xff]
      %v3174 = vld [vmem:[%s2 + $0xc0] sm:$0xff]
      %v3175 = vld [vmem:[%s2 + $0xc8] sm:$0xff]
      %v3176 = vld [vmem:[%s2 + $0xd0] sm:$0xff]
      %v3177 = vld [vmem:[%s2 + $0xd8] sm:$0xff]
      %v3178 = vld [vmem:[%s2 + $0xe0] sm:$0xff]
      %v3179 = vld [vmem:[%s2 + $0xe8] sm:$0xff]
      %v3180 = vld [vmem:[%s2 + $0xf0] sm:$0xff]
      %v3181 = vld [vmem:[%s2 + $0xf8] sm:$0xff]
      %v3182 = vld [vmem:[%s2 + $0x100] sm:$0xff]
      %v3183 = vld [vmem:[%s2 + $0x108] sm:$0xff]
      %v3184 = vld [vmem:[%s2 + $0x110] sm:$0xff]
      %v3185 = vld [vmem:[%s2 + $0x118] sm:$0xff]
      %v3186 = vld [vmem:[%s2 + $0x120] sm:$0xff]
      %v3187 = vld [vmem:[%s2 + $0x128] sm:$0xff]
      %v3188 = vld [vmem:[%s2 + $0x130] sm:$0xff]
      %v3189 = vld [vmem:[%s2 + $0x138] sm:$0xff]
      %v3190 = vld [vmem:[%s2 + $0x140] sm:$0xff]
      %v3191 = vld [vmem:[%s2 + $0x148] sm:$0xff]
      %v3192 = vld [vmem:[%s2 + $0x150] sm:$0xff]
      %v3193 = vld [vmem:[%s2 + $0x158] sm:$0xff]
      %v3194 = vld [vmem:[%s2 + $0x160] sm:$0xff]
      %v3195 = vld [vmem:[%s2 + $0x168] sm:$0xff]
      %v3196 = vld [vmem:[%s2 + $0x170] sm:$0xff]
      %v3197 = vld [vmem:[%s2 + $0x178] sm:$0xff]
      %v3198 = vld [vmem:[%s2 + $0x180] sm:$0xff]
      %v3199 = vld [vmem:[%s2 + $0x188] sm:$0xff]
      %v3200 = vld [vmem:[%s2 + $0x190] sm:$0xff]
      %v3201 = vld [vmem:[%s2 + $0x198] sm:$0xff]
      %v3202 = vld [vmem:[%s2 + $0x1a0] sm:$0xff]
      %v3203 = vld [vmem:[%s2 + $0x1a8] sm:$0xff]
      %v3204 = vld [vmem:[%s2 + $0x1b0] sm:$0xff]
      %v3205 = vld [vmem:[%s2 + $0x1b8] sm:$0xff]
      %v3206 = vld [vmem:[%s2 + $0x1c0] sm:$0xff]
      %v3207 = vld [vmem:[%s2 + $0x1c8] sm:$0xff]
      %v3208 = vld [vmem:[%s2 + $0x1d0] sm:$0xff]
      %v3209 = vld [vmem:[%s2 + $0x1d8] sm:$0xff]
      %v3210 = vld [vmem:[%s2 + $0x1e0] sm:$0xff]
      %v3211 = vld [vmem:[%s2 + $0x1e8] sm:$0xff]
      %v3212 = vld [vmem:[%s2 + $0x1f0] sm:$0xff]
      %v3213 = vld [vmem:[%s2 + $0x1f8] sm:$0xff]
      %v3214 = vld [vmem:[%s2 + $0x200] sm:$0xff]
      %v3215 = vld [vmem:[%s2 + $0x208] sm:$0xff]
      %v3216 = vld [vmem:[%s2 + $0x210] sm:$0xff]
      %v3217 = vld [vmem:[%s2 + $0x218] sm:$0xff]
      %v3218 = vld [vmem:[#allocation3] sm:$0xff]
      %v3219 = vld [vmem:[#allocation3 + $0x8] sm:$0xff]
      %v3220 = vld [vmem:[#allocation3 + $0x10] sm:$0xff]
      %v3221 = vld [vmem:[#allocation3 + $0x18] sm:$0xff]
      %v3222 = vld [vmem:[#allocation3 + $0x20] sm:$0xff]
      %v3223 = vld [vmem:[#allocation3 + $0x28] sm:$0xff]
      %v3224 = vld [vmem:[#allocation3 + $0x30] sm:$0xff]
      %v3225 = vld [vmem:[#allocation3 + $0x38] sm:$0xff]
      %v3226 = vld [vmem:[#allocation3 + $0x40] sm:$0xff]
      %v3227 = vld [vmem:[#allocation3 + $0x48] sm:$0xff]
      %v3228 = vld [vmem:[#allocation3 + $0x50] sm:$0xff]
      %v3229 = vld [vmem:[#allocation3 + $0x58] sm:$0xff]
      %v3230 = vld [vmem:[#allocation3 + $0x60] sm:$0xff]
      %v3231 = vld [vmem:[#allocation3 + $0x68] sm:$0xff]
      %v3232 = vld [vmem:[#allocation3 + $0x70] sm:$0xff]
      %v3233 = vld [vmem:[#allocation3 + $0x78] sm:$0xff]
      %v3234 = vld [vmem:[#allocation3 + $0x80] sm:$0xff]
      %v3235 = vld [vmem:[#allocation3 + $0x88] sm:$0xff]
      %v3236 = vld [vmem:[#allocation3 + $0x90] sm:$0xff]
      %v3237 = vld [vmem:[#allocation3 + $0x98] sm:$0xff]
      %v3238 = vld [vmem:[#allocation3 + $0xa0] sm:$0xff]
      %v3239 = vld [vmem:[#allocation3 + $0xa8] sm:$0xff]
      %v3240 = vld [vmem:[#allocation3 + $0xb0] sm:$0xff]
      %v3241 = vld [vmem:[#allocation3 + $0xb8] sm:$0xff]
      %v3242 = vld [vmem:[#allocation3 + $0xc0] sm:$0xff]
      %v3243 = vld [vmem:[#allocation3 + $0xc8] sm:$0xff]
      %v3244 = vld [vmem:[#allocation3 + $0xd0] sm:$0xff]
      %v3245 = vld [vmem:[#allocation3 + $0xd8] sm:$0xff]
      %v3246 = vld [vmem:[#allocation3 + $0xe0] sm:$0xff]
      %v3247 = vld [vmem:[#allocation3 + $0xe8] sm:$0xff]
      %v3248 = vld [vmem:[#allocation3 + $0xf0] sm:$0xff]
      %v3249 = vld [vmem:[#allocation3 + $0xf8] sm:$0xff]
      %v3250 = vld [vmem:[#allocation3 + $0x100] sm:$0xff]
      %v3251 = vld [vmem:[#allocation3 + $0x108] sm:$0xff]
      %v3252 = vld [vmem:[#allocation3 + $0x110] sm:$0xff]
      %v3253 = vld [vmem:[#allocation3 + $0x118] sm:$0xff]
      %v3254 = vld [vmem:[#allocation3 + $0x120] sm:$0xff]
      %v3255 = vld [vmem:[#allocation3 + $0x128] sm:$0xff]
      %v3256 = vld [vmem:[#allocation3 + $0x130] sm:$0xff]
      %v3257 = vld [vmem:[#allocation3 + $0x138] sm:$0xff]
      %v3258 = vld [vmem:[#allocation3 + $0x140] sm:$0xff]
      %v3259 = vld [vmem:[#allocation3 + $0x148] sm:$0xff]
      %v3260 = vld [vmem:[#allocation3 + $0x150] sm:$0xff]
      %v3261 = vld [vmem:[#allocation3 + $0x158] sm:$0xff]
      %v3262 = vld [vmem:[#allocation3 + $0x160] sm:$0xff]
      %v3263 = vld [vmem:[#allocation3 + $0x168] sm:$0xff]
      %v3264 = vld [vmem:[#allocation3 + $0x170] sm:$0xff]
      %v3265 = vld [vmem:[#allocation3 + $0x178] sm:$0xff]
      %v3266 = vld [vmem:[#allocation3 + $0x180] sm:$0xff]
      %v3267 = vld [vmem:[#allocation3 + $0x188] sm:$0xff]
      %v3268 = vld [vmem:[#allocation3 + $0x190] sm:$0xff]
      %v3269 = vld [vmem:[#allocation3 + $0x198] sm:$0xff]
      %v3270 = vld [vmem:[#allocation3 + $0x1a0] sm:$0xff]
      %v3271 = vld [vmem:[#allocation3 + $0x1a8] sm:$0xff]
      %v3272 = vld [vmem:[#allocation3 + $0x1b0] sm:$0xff]
      %v3273 = vld [vmem:[#allocation3 + $0x1b8] sm:$0xff]
      %v3274 = vld [vmem:[#allocation3 + $0x1c0] sm:$0xff]
      %v3275 = vld [vmem:[#allocation3 + $0x1c8] sm:$0xff]
      %v3276 = vld [vmem:[#allocation3 + $0x1d0] sm:$0xff]
      %v3277 = vld [vmem:[#allocation3 + $0x1d8] sm:$0xff]
      %v3278 = vld [vmem:[#allocation3 + $0x1e0] sm:$0xff]
      %v3279 = vld [vmem:[#allocation3 + $0x1e8] sm:$0xff]
      %v3280 = vld [vmem:[#allocation3 + $0x1f0] sm:$0xff]
      %v3281 = vld [vmem:[#allocation3 + $0x1f8] sm:$0xff]
      %v3282 = vld [vmem:[#allocation3 + $0x200] sm:$0xff]
      %v3283 = vld [vmem:[#allocation3 + $0x208] sm:$0xff]
      %v3284 = vld [vmem:[#allocation3 + $0x210] sm:$0xff]
      %v3285 = vld [vmem:[#allocation3 + $0x218] sm:$0xff]
      %v3286 = vld [vmem:[#allocation3 + $0x220] sm:$0xff]
      %v3287 = vld [vmem:[#allocation3 + $0x228] sm:$0xff]
      %v3288 = vld [vmem:[#allocation3 + $0x230] sm:$0xff]
      %v3289 = vld [vmem:[#allocation3 + $0x238] sm:$0xff]
      %v3290 = vld [vmem:[#allocation3 + $0x240] sm:$0xff]
      %v3291 = vld [vmem:[#allocation3 + $0x248] sm:$0xff]
      %v3292 = vld [vmem:[#allocation3 + $0x250] sm:$0xff]
      %v3293 = vld [vmem:[#allocation3 + $0x258] sm:$0xff]
      %v3294 = vld [vmem:[#allocation3 + $0x260] sm:$0xff]
      %v3295 = vld [vmem:[#allocation3 + $0x268] sm:$0xff]
      %v3296 = vld [vmem:[#allocation3 + $0x270] sm:$0xff]
      %v3297 = vld [vmem:[#allocation3 + $0x278] sm:$0xff]
      %v3298 = vld [vmem:[#allocation3 + $0x280] sm:$0xff]
      %v3299 = vld [vmem:[#allocation3 + $0x288] sm:$0xff]
      %v3300 = vld [vmem:[#allocation3 + $0x290] sm:$0xff]
      %v3301 = vld [vmem:[#allocation3 + $0x298] sm:$0xff]
      %v3302 = vld [vmem:[#allocation3 + $0x2a0] sm:$0xff]
      %v3303 = vld [vmem:[#allocation3 + $0x2a8] sm:$0xff]
      %v3304 = vld [vmem:[#allocation3 + $0x2b0] sm:$0xff]
      %v3305 = vld [vmem:[#allocation3 + $0x2b8] sm:$0xff]
      %v3306 = vld [vmem:[#allocation3 + $0x2c0] sm:$0xff]
      %v3307 = vld [vmem:[#allocation3 + $0x2c8] sm:$0xff]
      %v3308 = vld [vmem:[#allocation3 + $0x2d0] sm:$0xff]
      %v3309 = vld [vmem:[#allocation3 + $0x2d8] sm:$0xff]
      %v3310 = vld [vmem:[#allocation3 + $0x2e0] sm:$0xff]
      %v3311 = vld [vmem:[#allocation3 + $0x2e8] sm:$0xff]
      %v3312 = vld [vmem:[#allocation3 + $0x2f0] sm:$0xff]
      %v3313 = vld [vmem:[#allocation3 + $0x2f8] sm:$0xff]
      %v3314 = vld [vmem:[#allocation3 + $0x300] sm:$0xff]
      %v3315 = vld [vmem:[#allocation3 + $0x308] sm:$0xff]
      %v3316 = vld [vmem:[#allocation3 + $0x310] sm:$0xff]
      %v3317 = vld [vmem:[#allocation3 + $0x318] sm:$0xff]
      %v3318 = vld [vmem:[#allocation3 + $0x320] sm:$0xff]
      %v3319 = vld [vmem:[#allocation3 + $0x328] sm:$0xff]
      %v3320 = vld [vmem:[#allocation3 + $0x330] sm:$0xff]
      %v3321 = vld [vmem:[#allocation3 + $0x338] sm:$0xff]
      %v3322 = vld [vmem:[#allocation3 + $0x340] sm:$0xff]
      %v3323 = vld [vmem:[#allocation3 + $0x348] sm:$0xff]
      %v3324 = vld [vmem:[#allocation3 + $0x350] sm:$0xff]
      %v3325 = vld [vmem:[#allocation3 + $0x358] sm:$0xff]
      %v3326 = vld [vmem:[#allocation3 + $0x360] sm:$0xff]
      %v3327 = vld [vmem:[#allocation3 + $0x368] sm:$0xff]
      %v3328 = vld [vmem:[#allocation3 + $0x370] sm:$0xff]
      %v3329 = vld [vmem:[#allocation3 + $0x378] sm:$0xff]
      %v3330 = vld [vmem:[#allocation3 + $0x380] sm:$0xff]
      %v3331 = vld [vmem:[#allocation3 + $0x388] sm:$0xff]
      %v3332 = vld [vmem:[#allocation3 + $0x390] sm:$0xff]
      %v3333 = vld [vmem:[#allocation3 + $0x398] sm:$0xff]
      %v3334 = vld [vmem:[#allocation3 + $0x3a0] sm:$0xff]
      %v3335 = vld [vmem:[#allocation3 + $0x3a8] sm:$0xff]
      %v3336 = vld [vmem:[#allocation3 + $0x3b0] sm:$0xff]
      %v3337 = vld [vmem:[#allocation3 + $0x3b8] sm:$0xff]
      %v3338 = vld [vmem:[#allocation3 + $0x3c0] sm:$0xff]
      %v3339 = vld [vmem:[#allocation3 + $0x3c8] sm:$0xff]
      %v3340 = vld [vmem:[#allocation3 + $0x3d0] sm:$0xff]
      %v3341 = vld [vmem:[#allocation3 + $0x3d8] sm:$0xff]
      %v3410 = vunpack.c.l.b16 %v3150
      %v3411 = vunpack.c.h.b16 %v3150
      %v3412 = vunpack.c.l.b16 %v3151
      %v3413 = vunpack.c.h.b16 %v3151
      %v3414 = vunpack.c.l.b16 %v3152
      %v3415 = vunpack.c.h.b16 %v3152
      %v3416 = vunpack.c.l.b16 %v3153
      %v3417 = vunpack.c.h.b16 %v3153
      %v3418 = vunpack.c.l.b16 %v3154
      %v3419 = vunpack.c.h.b16 %v3154
      %v3420 = vunpack.c.l.b16 %v3155
      %v3421 = vunpack.c.h.b16 %v3155
      %v3422 = vunpack.c.l.b16 %v3156
      %v3423 = vunpack.c.h.b16 %v3156
      %v3424 = vunpack.c.l.b16 %v3157
      %v3425 = vunpack.c.h.b16 %v3157
      %v3426 = vunpack.c.l.b16 %v3158
      %v3427 = vunpack.c.h.b16 %v3158
      %v3428 = vunpack.c.l.b16 %v3159
      %v3429 = vunpack.c.h.b16 %v3159
      %v3430 = vunpack.c.l.b16 %v3160
      %v3431 = vunpack.c.h.b16 %v3160
      %v3432 = vunpack.c.l.b16 %v3161
      %v3433 = vunpack.c.h.b16 %v3161
      %v3434 = vunpack.c.l.b16 %v3162
      %v3435 = vunpack.c.h.b16 %v3162
      %v3436 = vunpack.c.l.b16 %v3163
      %v3437 = vunpack.c.h.b16 %v3163
      %v3438 = vunpack.c.l.b16 %v3164
      %v3439 = vunpack.c.h.b16 %v3164
      %v3440 = vunpack.c.l.b16 %v3165
      %v3441 = vunpack.c.h.b16 %v3165
      %v3442 = vunpack.c.l.b16 %v3166
      %v3443 = vunpack.c.h.b16 %v3166
      %v3444 = vunpack.c.l.b16 %v3167
      %v3445 = vunpack.c.h.b16 %v3167
      %v3446 = vunpack.c.l.b16 %v3168
      %v3447 = vunpack.c.h.b16 %v3168
      %v3448 = vunpack.c.l.b16 %v3169
      %v3449 = vunpack.c.h.b16 %v3169
      %v3450 = vunpack.c.l.b16 %v3170
      %v3451 = vunpack.c.h.b16 %v3170
      %v3452 = vunpack.c.l.b16 %v3171
      %v3453 = vunpack.c.h.b16 %v3171
      %v3454 = vunpack.c.l.b16 %v3172
      %v3455 = vunpack.c.h.b16 %v3172
      %v3456 = vunpack.c.l.b16 %v3173
      %v3457 = vunpack.c.h.b16 %v3173
      %v3458 = vunpack.c.l.b16 %v3174
      %v3459 = vunpack.c.h.b16 %v3174
      %v3460 = vunpack.c.l.b16 %v3175
      %v3461 = vunpack.c.h.b16 %v3175
      %v3462 = vunpack.c.l.b16 %v3176
      %v3463 = vunpack.c.h.b16 %v3176
      %v3464 = vunpack.c.l.b16 %v3177
      %v3465 = vunpack.c.h.b16 %v3177
      %v3466 = vunpack.c.l.b16 %v3178
      %v3467 = vunpack.c.h.b16 %v3178
      %v3468 = vunpack.c.l.b16 %v3179
      %v3469 = vunpack.c.h.b16 %v3179
      %v3470 = vunpack.c.l.b16 %v3180
      %v3471 = vunpack.c.h.b16 %v3180
      %v3472 = vunpack.c.l.b16 %v3181
      %v3473 = vunpack.c.h.b16 %v3181
      %v3474 = vunpack.c.l.b16 %v3182
      %v3475 = vunpack.c.h.b16 %v3182
      %v3476 = vunpack.c.l.b16 %v3183
      %v3477 = vunpack.c.h.b16 %v3183
      %v3478 = vunpack.c.l.b16 %v3184
      %v3479 = vunpack.c.h.b16 %v3184
      %v3480 = vunpack.c.l.b16 %v3185
      %v3481 = vunpack.c.h.b16 %v3185
      %v3482 = vunpack.c.l.b16 %v3186
      %v3483 = vunpack.c.h.b16 %v3186
      %v3484 = vunpack.c.l.b16 %v3187
      %v3485 = vunpack.c.h.b16 %v3187
      %v3486 = vunpack.c.l.b16 %v3188
      %v3487 = vunpack.c.h.b16 %v3188
      %v3488 = vunpack.c.l.b16 %v3189
      %v3489 = vunpack.c.h.b16 %v3189
      %v3490 = vunpack.c.l.b16 %v3190
      %v3491 = vunpack.c.h.b16 %v3190
      %v3492 = vunpack.c.l.b16 %v3191
      %v3493 = vunpack.c.h.b16 %v3191
      %v3494 = vunpack.c.l.b16 %v3192
      %v3495 = vunpack.c.h.b16 %v3192
      %v3496 = vunpack.c.l.b16 %v3193
      %v3497 = vunpack.c.h.b16 %v3193
      %v3498 = vunpack.c.l.b16 %v3194
      %v3499 = vunpack.c.h.b16 %v3194
      %v3500 = vunpack.c.l.b16 %v3195
      %v3501 = vunpack.c.h.b16 %v3195
      %v3502 = vunpack.c.l.b16 %v3196
      %v3503 = vunpack.c.h.b16 %v3196
      %v3504 = vunpack.c.l.b16 %v3197
      %v3505 = vunpack.c.h.b16 %v3197
      %v3506 = vunpack.c.l.b16 %v3198
      %v3507 = vunpack.c.h.b16 %v3198
      %v3508 = vunpack.c.l.b16 %v3199
      %v3509 = vunpack.c.h.b16 %v3199
      %v3510 = vunpack.c.l.b16 %v3200
      %v3511 = vunpack.c.h.b16 %v3200
      %v3512 = vunpack.c.l.b16 %v3201
      %v3513 = vunpack.c.h.b16 %v3201
      %v3514 = vunpack.c.l.b16 %v3202
      %v3515 = vunpack.c.h.b16 %v3202
      %v3516 = vunpack.c.l.b16 %v3203
      %v3517 = vunpack.c.h.b16 %v3203
      %v3518 = vunpack.c.l.b16 %v3204
      %v3519 = vunpack.c.h.b16 %v3204
      %v3520 = vunpack.c.l.b16 %v3205
      %v3521 = vunpack.c.h.b16 %v3205
      %v3522 = vunpack.c.l.b16 %v3206
      %v3523 = vunpack.c.h.b16 %v3206
      %v3524 = vunpack.c.l.b16 %v3207
      %v3525 = vunpack.c.h.b16 %v3207
      %v3526 = vunpack.c.l.b16 %v3208
      %v3527 = vunpack.c.h.b16 %v3208
      %v3528 = vunpack.c.l.b16 %v3209
      %v3529 = vunpack.c.h.b16 %v3209
      %v3530 = vunpack.c.l.b16 %v3210
      %v3531 = vunpack.c.h.b16 %v3210
      %v3532 = vunpack.c.l.b16 %v3211
      %v3533 = vunpack.c.h.b16 %v3211
      %v3534 = vunpack.c.l.b16 %v3212
      %v3535 = vunpack.c.h.b16 %v3212
      %v3536 = vunpack.c.l.b16 %v3213
      %v3537 = vunpack.c.h.b16 %v3213
      %v3538 = vunpack.c.l.b16 %v3214
      %v3539 = vunpack.c.h.b16 %v3214
      %v3540 = vunpack.c.l.b16 %v3215
      %v3541 = vunpack.c.h.b16 %v3215
      %v3542 = vunpack.c.l.b16 %v3216
      %v3543 = vunpack.c.h.b16 %v3216
      %v3544 = vunpack.c.l.b16 %v3217
      %v3545 = vunpack.c.h.b16 %v3217
      %v3546 = vpack.c.b16 %v3418, %v3410
      %v3547 = vpack.c.b16 %v3419, %v3411
      %v3548 = vpack.c.b16 %v3420, %v3412
      %v3549 = vpack.c.b16 %v3421, %v3413
      %v3550 = vpack.c.b16 %v3422, %v3414
      %v3551 = vpack.c.b16 %v3423, %v3415
      %v3552 = vpack.c.b16 %v3424, %v3416
      %v3553 = vpack.c.b16 %v3425, %v3417
      %v3554 = vpack.c.b16 %v3434, %v3426
      %v3555 = vpack.c.b16 %v3435, %v3427
      %v3556 = vpack.c.b16 %v3436, %v3428
      %v3557 = vpack.c.b16 %v3437, %v3429
      %v3558 = vpack.c.b16 %v3438, %v3430
      %v3559 = vpack.c.b16 %v3439, %v3431
      %v3560 = vpack.c.b16 %v3440, %v3432
      %v3561 = vpack.c.b16 %v3441, %v3433
      %v3562 = vpack.c.b16 %v3450, %v3442
      %v3563 = vpack.c.b16 %v3451, %v3443
      %v3564 = vpack.c.b16 %v3452, %v3444
      %v3565 = vpack.c.b16 %v3453, %v3445
      %v3566 = vpack.c.b16 %v3454, %v3446
      %v3567 = vpack.c.b16 %v3455, %v3447
      %v3568 = vpack.c.b16 %v3456, %v3448
      %v3569 = vpack.c.b16 %v3457, %v3449
      %v3570 = vpack.c.b16 %v3466, %v3458
      %v3571 = vpack.c.b16 %v3467, %v3459
      %v3572 = vpack.c.b16 %v3468, %v3460
      %v3573 = vpack.c.b16 %v3469, %v3461
      %v3574 = vpack.c.b16 %v3470, %v3462
      %v3575 = vpack.c.b16 %v3471, %v3463
      %v3576 = vpack.c.b16 %v3472, %v3464
      %v3577 = vpack.c.b16 %v3473, %v3465
      %v3578 = vpack.c.b16 %v3482, %v3474
      %v3579 = vpack.c.b16 %v3483, %v3475
      %v3580 = vpack.c.b16 %v3484, %v3476
      %v3581 = vpack.c.b16 %v3485, %v3477
      %v3582 = vpack.c.b16 %v3486, %v3478
      %v3583 = vpack.c.b16 %v3487, %v3479
      %v3584 = vpack.c.b16 %v3488, %v3480
      %v3585 = vpack.c.b16 %v3489, %v3481
      %v3586 = vpack.c.b16 %v3498, %v3490
      %v3587 = vpack.c.b16 %v3499, %v3491
      %v3588 = vpack.c.b16 %v3500, %v3492
      %v3589 = vpack.c.b16 %v3501, %v3493
      %v3590 = vpack.c.b16 %v3502, %v3494
      %v3591 = vpack.c.b16 %v3503, %v3495
      %v3592 = vpack.c.b16 %v3504, %v3496
      %v3593 = vpack.c.b16 %v3505, %v3497
      %v3594 = vpack.c.b16 %v3514, %v3506
      %v3595 = vpack.c.b16 %v3515, %v3507
      %v3596 = vpack.c.b16 %v3516, %v3508
      %v3597 = vpack.c.b16 %v3517, %v3509
      %v3598 = vpack.c.b16 %v3518, %v3510
      %v3599 = vpack.c.b16 %v3519, %v3511
      %v3600 = vpack.c.b16 %v3520, %v3512
      %v3601 = vpack.c.b16 %v3521, %v3513
      %v3602 = vpack.c.b16 %v3530, %v3522
      %v3603 = vpack.c.b16 %v3531, %v3523
      %v3604 = vpack.c.b16 %v3532, %v3524
      %v3605 = vpack.c.b16 %v3533, %v3525
      %v3606 = vpack.c.b16 %v3534, %v3526
      %v3607 = vpack.c.b16 %v3535, %v3527
      %v3608 = vpack.c.b16 %v3536, %v3528
      %v3609 = vpack.c.b16 %v3537, %v3529
      %v3610 = vpack.c.b16 %v3538, %v3538
      %v3611 = vpack.c.b16 %v3539, %v3539
      %v3612 = vpack.c.b16 %v3540, %v3540
      %v3613 = vpack.c.b16 %v3541, %v3541
      %v3614 = vpack.c.b16 %v3542, %v3542
      %v3615 = vpack.c.b16 %v3543, %v3543
      %v3616 = vpack.c.b16 %v3544, %v3544
      %v3617 = vpack.c.b16 %v3545, %v3545
      %vm3681 = vcmask 785408
      %v3683 = vsel %vm3681, %v3553, 0
      %v3686 = vsel %vm3681, %v3561, 0
      %v3689 = vsel %vm3681, %v3569, 0
      %v3692 = vsel %vm3681, %v3577, 0
      %v3695 = vsel %vm3681, %v3585, 0
      %v3698 = vsel %vm3681, %v3593, 0
      %v3701 = vsel %vm3681, %v3601, 0
      %v3704 = vsel %vm3681, %v3609, 0
      %v3707 = vsel %vm3681, %v3617, 0
      %3709 = vmatprep.subr.bf16.mxu0 %v3219
      %3710 = vmatpush1.bf16.msra.mxu0 %v3218
      %3711 = vmatprep.subr.bf16.mxu0 %v3221
      %3712 = vmatpush1.bf16.msra.mxu0 %v3220
      %3713 = vmatprep.subr.bf16.mxu0 %v3223
      %3714 = vmatpush1.bf16.msra.mxu0 %v3222
      %3715 = vmatprep.subr.bf16.mxu0 %v3225
      %3716 = vmatpush1.bf16.msra.mxu0 %v3224
      %3717 = vmatprep.subr.bf16.mxu0 %v3227
      %3718 = vmatpush1.bf16.msra.mxu0 %v3226
      %3719 = vmatprep.subr.bf16.mxu0 %v3229
      %3720 = vmatpush1.bf16.msra.mxu0 %v3228
      %3721 = vmatprep.subr.bf16.mxu0 %v3231
      %3722 = vmatpush1.bf16.msra.mxu0 %v3230
      %3723 = vmatprep.subr.bf16.mxu0 %v3233
      %3724 = vmatpush1.bf16.msra.mxu0 %v3232
      %3725 = vmatprep.subr.bf16.mxu0 %v3235
      %3726 = vmatpush1.bf16.msra.mxu0 %v3234
      %3727 = vmatprep.subr.bf16.mxu0 %v3237
      %3728 = vmatpush1.bf16.msra.mxu0 %v3236
      %3729 = vmatprep.subr.bf16.mxu0 %v3239
      %3730 = vmatpush1.bf16.msra.mxu0 %v3238
      %3731 = vmatprep.subr.bf16.mxu0 %v3241
      %3732 = vmatpush1.bf16.msra.mxu0 %v3240
      %3733 = vmatprep.subr.bf16.mxu0 %v3243
      %3734 = vmatpush1.bf16.msra.mxu0 %v3242
      %3735 = vmatprep.subr.bf16.mxu0 %v3245
      %3736 = vmatpush1.bf16.msra.mxu0 %v3244
      %3737 = vmatprep.subr.bf16.mxu0 %v3247
      %3738 = vmatpush1.bf16.msra.mxu0 %v3246
      %3739 = vmatprep.subr.bf16.mxu0 %v3249
      %3740 = vmatpush1.bf16.msra.mxu0 %v3248
      %3741 = vmatprep.mubr.bf16.mxu0 %v3547
      %3742 = vmatmul.mubr.bf16.gmra.mrb[0].mxu0 %v3546
      %v3743 = vpop.f32.mrb[0].mxu0
      %v3744 = vadd.f32 0.0, %v3743
      %v3745 = vpop.f32.mrb[0].mxu0
      %v3746 = vadd.f32 0.0, %v3745
      %v3747 = vpop.f32.mrb[0].mxu0
      %v3748 = vadd.f32 0.0, %v3747
      %v3749 = vpop.f32.mrb[0].mxu0
      %v3750 = vadd.f32 0.0, %v3749
      %3751 = vmatprep.mubr.bf16.mxu0 %v3555
      %3752 = vmatmul.mubr.bf16.gmra.mrb[0].mxu0 %v3554
      %v3753 = vpop.f32.mrb[0].mxu0
      %v3754 = vadd.f32 0.0, %v3753
      %v3755 = vpop.f32.mrb[0].mxu0
      %v3756 = vadd.f32 0.0, %v3755
      %v3757 = vpop.f32.mrb[0].mxu0
      %v3758 = vadd.f32 0.0, %v3757
      %v3759 = vpop.f32.mrb[0].mxu0
      %v3760 = vadd.f32 0.0, %v3759
      %3761 = vmatprep.mubr.bf16.mxu0 %v3563
      %3762 = vmatmul.mubr.bf16.gmra.mrb[0].mxu0 %v3562
      %v3763 = vpop.f32.mrb[0].mxu0
      %v3764 = vadd.f32 0.0, %v3763
      %v3765 = vpop.f32.mrb[0].mxu0
      %v3766 = vadd.f32 0.0, %v3765
      %v3767 = vpop.f32.mrb[0].mxu0
      %v3768 = vadd.f32 0.0, %v3767
      %v3769 = vpop.f32.mrb[0].mxu0
      %v3770 = vadd.f32 0.0, %v3769
      %3771 = vmatprep.mubr.bf16.mxu0 %v3571
      %3772 = vmatmul.mubr.bf16.gmra.mrb[0].mxu0 %v3570
      %v3773 = vpop.f32.mrb[0].mxu0
      %v3774 = vadd.f32 0.0, %v3773
      %v3775 = vpop.f32.mrb[0].mxu0
      %v3776 = vadd.f32 0.0, %v3775
      %v3777 = vpop.f32.mrb[0].mxu0
      %v3778 = vadd.f32 0.0, %v3777
      %v3779 = vpop.f32.mrb[0].mxu0
      %v3780 = vadd.f32 0.0, %v3779
      %3781 = vmatprep.mubr.bf16.mxu0 %v3579
      %3782 = vmatmul.mubr.bf16.gmra.mrb[0].mxu0 %v3578
      %v3783 = vpop.f32.mrb[0].mxu0
      %v3784 = vadd.f32 0.0, %v3783
      %v3785 = vpop.f32.mrb[0].mxu0
      %v3786 = vadd.f32 0.0, %v3785
      %v3787 = vpop.f32.mrb[0].mxu0
      %v3788 = vadd.f32 0.0, %v3787
      %v3789 = vpop.f32.mrb[0].mxu0
      %v3790 = vadd.f32 0.0, %v3789
      %3791 = vmatprep.mubr.bf16.mxu0 %v3587
      %3792 = vmatmul.mubr.bf16.gmra.mrb[0].mxu0 %v3586
      %v3793 = vpop.f32.mrb[0].mxu0
      %v3794 = vadd.f32 0.0, %v3793
      %v3795 = vpop.f32.mrb[0].mxu0
      %v3796 = vadd.f32 0.0, %v3795
      %v3797 = vpop.f32.mrb[0].mxu0
      %v3798 = vadd.f32 0.0, %v3797
      %v3799 = vpop.f32.mrb[0].mxu0
      %v3800 = vadd.f32 0.0, %v3799
      %3801 = vmatprep.mubr.bf16.mxu0 %v3595
      %3802 = vmatmul.mubr.bf16.gmra.mrb[0].mxu0 %v3594
      %v3803 = vpop.f32.mrb[0].mxu0
      %v3804 = vadd.f32 0.0, %v3803
      %v3805 = vpop.f32.mrb[0].mxu0
      %v3806 = vadd.f32 0.0, %v3805
      %v3807 = vpop.f32.mrb[0].mxu0
      %v3808 = vadd.f32 0.0, %v3807
      %v3809 = vpop.f32.mrb[0].mxu0
      %v3810 = vadd.f32 0.0, %v3809
      %3811 = vmatprep.mubr.bf16.mxu0 %v3603
      %3812 = vmatmul.mubr.bf16.gmra.mrb[0].mxu0 %v3602
      %v3813 = vpop.f32.mrb[0].mxu0
      %v3814 = vadd.f32 0.0, %v3813
      %v3815 = vpop.f32.mrb[0].mxu0
      %v3816 = vadd.f32 0.0, %v3815
      %v3817 = vpop.f32.mrb[0].mxu0
      %v3818 = vadd.f32 0.0, %v3817
      %v3819 = vpop.f32.mrb[0].mxu0
      %v3820 = vadd.f32 0.0, %v3819
      %3821 = vmatprep.mubr.bf16.mxu0 %v3611
      %3822 = vmatmul.mubr.bf16.gmra.mrb[0].mxu0 %v3610
      %v3823 = vpop.f32.mrb[0].mxu0
      %v3824 = vadd.f32 0.0, %v3823
      %v3825 = vpop.f32.mrb[0].mxu0
      %v3826 = vadd.f32 0.0, %v3825
      %v3827 = vpop.f32.mrb[0].mxu0
      %v3828 = vpop.f32.mrb[0].mxu0
      %3829 = vdwg.mxu0
      %3830 = vmatprep.subr.bf16.mxu0 %v3251
      %3831 = vmatpush1.bf16.msra.mxu0 %v3250
      %3832 = vmatprep.subr.bf16.mxu0 %v3253
      %3833 = vmatpush1.bf16.msra.mxu0 %v3252
      %3834 = vmatprep.subr.bf16.mxu0 %v3255
      %3835 = vmatpush1.bf16.msra.mxu0 %v3254
      %3836 = vmatprep.subr.bf16.mxu0 %v3257
      %3837 = vmatpush1.bf16.msra.mxu0 %v3256
      %3838 = vmatprep.subr.bf16.mxu0 %v3259
      %3839 = vmatpush1.bf16.msra.mxu0 %v3258
      %3840 = vmatprep.subr.bf16.mxu0 %v3261
      %3841 = vmatpush1.bf16.msra.mxu0 %v3260
      %3842 = vmatprep.subr.bf16.mxu0 %v3263
      %3843 = vmatpush1.bf16.msra.mxu0 %v3262
      %3844 = vmatprep.subr.bf16.mxu0 %v3265
      %3845 = vmatpush1.bf16.msra.mxu0 %v3264
      %3846 = vmatprep.subr.bf16.mxu0 %v3267
      %3847 = vmatpush1.bf16.msra.mxu0 %v3266
      %3848 = vmatprep.subr.bf16.mxu0 %v3269
      %3849 = vmatpush1.bf16.msra.mxu0 %v3268
      %3850 = vmatprep.subr.bf16.mxu0 %v3271
      %3851 = vmatpush1.bf16.msra.mxu0 %v3270
      %3852 = vmatprep.subr.bf16.mxu0 %v3273
      %3853 = vmatpush1.bf16.msra.mxu0 %v3272
      %3854 = vmatprep.subr.bf16.mxu0 %v3275
      %3855 = vmatpush1.bf16.msra.mxu0 %v3274
      %3856 = vmatprep.subr.bf16.mxu0 %v3277
      %3857 = vmatpush1.bf16.msra.mxu0 %v3276
      %3858 = vmatprep.subr.bf16.mxu0 %v3279
      %3859 = vmatpush1.bf16.msra.mxu0 %v3278
      %3860 = vmatprep.subr.bf16.mxu0 %v3281
      %3861 = vmatpush1.bf16.msra.mxu0 %v3280
      %3862 = vmatprep.mubr.bf16.mxu0 %v3549
      %3863 = vmatmul.mubr.bf16.gmra.mrb[0].mxu0 %v3548
      %v3864 = vpop.f32.mrb[0].mxu0
      %v3865 = vadd.f32 %v3744, %v3864
      %v3866 = vpop.f32.mrb[0].mxu0
      %v3867 = vadd.f32 %v3746, %v3866
      %v3868 = vpop.f32.mrb[0].mxu0
      %v3869 = vadd.f32 %v3748, %v3868
      %v3870 = vpop.f32.mrb[0].mxu0
      %v3871 = vadd.f32 %v3750, %v3870
      %3872 = vmatprep.mubr.bf16.mxu0 %v3557
      %3873 = vmatmul.mubr.bf16.gmra.mrb[0].mxu0 %v3556
      %v3874 = vpop.f32.mrb[0].mxu0
      %v3875 = vadd.f32 %v3754, %v3874
      %v3876 = vpop.f32.mrb[0].mxu0
      %v3877 = vadd.f32 %v3756, %v3876
      %v3878 = vpop.f32.mrb[0].mxu0
      %v3879 = vadd.f32 %v3758, %v3878
      %v3880 = vpop.f32.mrb[0].mxu0
      %v3881 = vadd.f32 %v3760, %v3880
      %3882 = vmatprep.mubr.bf16.mxu0 %v3565
      %3883 = vmatmul.mubr.bf16.gmra.mrb[0].mxu0 %v3564
      %v3884 = vpop.f32.mrb[0].mxu0
      %v3885 = vadd.f32 %v3764, %v3884
      %v3886 = vpop.f32.mrb[0].mxu0
      %v3887 = vadd.f32 %v3766, %v3886
      %v3888 = vpop.f32.mrb[0].mxu0
      %v3889 = vadd.f32 %v3768, %v3888
      %v3890 = vpop.f32.mrb[0].mxu0
      %v3891 = vadd.f32 %v3770, %v3890
      %3892 = vmatprep.mubr.bf16.mxu0 %v3573
      %3893 = vmatmul.mubr.bf16.gmra.mrb[0].mxu0 %v3572
      %v3894 = vpop.f32.mrb[0].mxu0
      %v3895 = vadd.f32 %v3774, %v3894
      %v3896 = vpop.f32.mrb[0].mxu0
      %v3897 = vadd.f32 %v3776, %v3896
      %v3898 = vpop.f32.mrb[0].mxu0
      %v3899 = vadd.f32 %v3778, %v3898
      %v3900 = vpop.f32.mrb[0].mxu0
      %v3901 = vadd.f32 %v3780, %v3900
      %3902 = vmatprep.mubr.bf16.mxu0 %v3581
      %3903 = vmatmul.mubr.bf16.gmra.mrb[0].mxu0 %v3580
      %v3904 = vpop.f32.mrb[0].mxu0
      %v3905 = vadd.f32 %v3784, %v3904
      %v3906 = vpop.f32.mrb[0].mxu0
      %v3907 = vadd.f32 %v3786, %v3906
      %v3908 = vpop.f32.mrb[0].mxu0
      %v3909 = vadd.f32 %v3788, %v3908
      %v3910 = vpop.f32.mrb[0].mxu0
      %v3911 = vadd.f32 %v3790, %v3910
      %3912 = vmatprep.mubr.bf16.mxu0 %v3589
      %3913 = vmatmul.mubr.bf16.gmra.mrb[0].mxu0 %v3588
      %v3914 = vpop.f32.mrb[0].mxu0
      %v3915 = vadd.f32 %v3794, %v3914
      %v3916 = vpop.f32.mrb[0].mxu0
      %v3917 = vadd.f32 %v3796, %v3916
      %v3918 = vpop.f32.mrb[0].mxu0
      %v3919 = vadd.f32 %v3798, %v3918
      %v3920 = vpop.f32.mrb[0].mxu0
      %v3921 = vadd.f32 %v3800, %v3920
      %3922 = vmatprep.mubr.bf16.mxu0 %v3597
      %3923 = vmatmul.mubr.bf16.gmra.mrb[0].mxu0 %v3596
      %v3924 = vpop.f32.mrb[0].mxu0
      %v3925 = vadd.f32 %v3804, %v3924
      %v3926 = vpop.f32.mrb[0].mxu0
      %v3927 = vadd.f32 %v3806, %v3926
      %v3928 = vpop.f32.mrb[0].mxu0
      %v3929 = vadd.f32 %v3808, %v3928
      %v3930 = vpop.f32.mrb[0].mxu0
      %v3931 = vadd.f32 %v3810, %v3930
      %3932 = vmatprep.mubr.bf16.mxu0 %v3605
      %3933 = vmatmul.mubr.bf16.gmra.mrb[0].mxu0 %v3604
      %v3934 = vpop.f32.mrb[0].mxu0
      %v3935 = vadd.f32 %v3814, %v3934
      %v3936 = vpop.f32.mrb[0].mxu0
      %v3937 = vadd.f32 %v3816, %v3936
      %v3938 = vpop.f32.mrb[0].mxu0
      %v3939 = vadd.f32 %v3818, %v3938
      %v3940 = vpop.f32.mrb[0].mxu0
      %v3941 = vadd.f32 %v3820, %v3940
      %3942 = vmatprep.mubr.bf16.mxu0 %v3613
      %3943 = vmatmul.mubr.bf16.gmra.mrb[0].mxu0 %v3612
      %v3944 = vpop.f32.mrb[0].mxu0
      %v3945 = vadd.f32 %v3824, %v3944
      %v3946 = vpop.f32.mrb[0].mxu0
      %v3947 = vadd.f32 %v3826, %v3946
      %v3948 = vpop.f32.mrb[0].mxu0
      %v3949 = vpop.f32.mrb[0].mxu0
      %3950 = vdwg.mxu0
      %3951 = vmatprep.subr.bf16.mxu0 %v3283
      %3952 = vmatpush1.bf16.msra.mxu0 %v3282
      %3953 = vmatprep.subr.bf16.mxu0 %v3285
      %3954 = vmatpush1.bf16.msra.mxu0 %v3284
      %3955 = vmatprep.subr.bf16.mxu0 %v3287
      %3956 = vmatpush1.bf16.msra.mxu0 %v3286
      %3957 = vmatprep.subr.bf16.mxu0 %v3289
      %3958 = vmatpush1.bf16.msra.mxu0 %v3288
      %3959 = vmatprep.subr.bf16.mxu0 %v3291
      %3960 = vmatpush1.bf16.msra.mxu0 %v3290
      %3961 = vmatprep.subr.bf16.mxu0 %v3293
      %3962 = vmatpush1.bf16.msra.mxu0 %v3292
      %3963 = vmatprep.subr.bf16.mxu0 %v3295
      %3964 = vmatpush1.bf16.msra.mxu0 %v3294
      %3965 = vmatprep.subr.bf16.mxu0 %v3297
      %3966 = vmatpush1.bf16.msra.mxu0 %v3296
      %3967 = vmatprep.subr.bf16.mxu0 %v3299
      %3968 = vmatpush1.bf16.msra.mxu0 %v3298
      %3969 = vmatprep.subr.bf16.mxu0 %v3301
      %3970 = vmatpush1.bf16.msra.mxu0 %v3300
      %3971 = vmatprep.subr.bf16.mxu0 %v3303
      %3972 = vmatpush1.bf16.msra.mxu0 %v3302
      %3973 = vmatprep.subr.bf16.mxu0 %v3305
      %3974 = vmatpush1.bf16.msra.mxu0 %v3304
      %3975 = vmatprep.subr.bf16.mxu0 %v3307
      %3976 = vmatpush1.bf16.msra.mxu0 %v3306
      %3977 = vmatprep.subr.bf16.mxu0 %v3309
      %3978 = vmatpush1.bf16.msra.mxu0 %v3308
      %3979 = vmatprep.subr.bf16.mxu0 %v3311
      %3980 = vmatpush1.bf16.msra.mxu0 %v3310
      %3981 = vmatprep.subr.bf16.mxu0 %v3313
      %3982 = vmatpush1.bf16.msra.mxu0 %v3312
      %3983 = vmatprep.mubr.bf16.mxu0 %v3551
      %3984 = vmatmul.mubr.bf16.gmra.mrb[0].mxu0 %v3550
      %v3985 = vpop.f32.mrb[0].mxu0
      %v3986 = vadd.f32 %v3865, %v3985
      %v3987 = vpop.f32.mrb[0].mxu0
      %v3988 = vadd.f32 %v3867, %v3987
      %v3989 = vpop.f32.mrb[0].mxu0
      %v3990 = vadd.f32 %v3869, %v3989
      %v3991 = vpop.f32.mrb[0].mxu0
      %v3992 = vadd.f32 %v3871, %v3991
      %3993 = vmatprep.mubr.bf16.mxu0 %v3559
      %3994 = vmatmul.mubr.bf16.gmra.mrb[0].mxu0 %v3558
      %v3995 = vpop.f32.mrb[0].mxu0
      %v3996 = vadd.f32 %v3875, %v3995
      %v3997 = vpop.f32.mrb[0].mxu0
      %v3998 = vadd.f32 %v3877, %v3997
      %v3999 = vpop.f32.mrb[0].mxu0
      %v4000 = vadd.f32 %v3879, %v3999
      %v4001 = vpop.f32.mrb[0].mxu0
      %v4002 = vadd.f32 %v3881, %v4001
      %4003 = vmatprep.mubr.bf16.mxu0 %v3567
      %4004 = vmatmul.mubr.bf16.gmra.mrb[0].mxu0 %v3566
      %v4005 = vpop.f32.mrb[0].mxu0
      %v4006 = vadd.f32 %v3885, %v4005
      %v4007 = vpop.f32.mrb[0].mxu0
      %v4008 = vadd.f32 %v3887, %v4007
      %v4009 = vpop.f32.mrb[0].mxu0
      %v4010 = vadd.f32 %v3889, %v4009
      %v4011 = vpop.f32.mrb[0].mxu0
      %v4012 = vadd.f32 %v3891, %v4011
      %4013 = vmatprep.mubr.bf16.mxu0 %v3575
      %4014 = vmatmul.mubr.bf16.gmra.mrb[0].mxu0 %v3574
      %v4015 = vpop.f32.mrb[0].mxu0
      %v4016 = vadd.f32 %v3895, %v4015
      %v4017 = vpop.f32.mrb[0].mxu0
      %v4018 = vadd.f32 %v3897, %v4017
      %v4019 = vpop.f32.mrb[0].mxu0
      %v4020 = vadd.f32 %v3899, %v4019
      %v4021 = vpop.f32.mrb[0].mxu0
      %v4022 = vadd.f32 %v3901, %v4021
      %4023 = vmatprep.mubr.bf16.mxu0 %v3583
      %4024 = vmatmul.mubr.bf16.gmra.mrb[0].mxu0 %v3582
      %v4025 = vpop.f32.mrb[0].mxu0
      %v4026 = vadd.f32 %v3905, %v4025
      %v4027 = vpop.f32.mrb[0].mxu0
      %v4028 = vadd.f32 %v3907, %v4027
      %v4029 = vpop.f32.mrb[0].mxu0
      %v4030 = vadd.f32 %v3909, %v4029
      %v4031 = vpop.f32.mrb[0].mxu0
      %v4032 = vadd.f32 %v3911, %v4031
      %4033 = vmatprep.mubr.bf16.mxu0 %v3591
      %4034 = vmatmul.mubr.bf16.gmra.mrb[0].mxu0 %v3590
      %v4035 = vpop.f32.mrb[0].mxu0
      %v4036 = vadd.f32 %v3915, %v4035
      %v4037 = vpop.f32.mrb[0].mxu0
      %v4038 = vadd.f32 %v3917, %v4037
      %v4039 = vpop.f32.mrb[0].mxu0
      %v4040 = vadd.f32 %v3919, %v4039
      %v4041 = vpop.f32.mrb[0].mxu0
      %v4042 = vadd.f32 %v3921, %v4041
      %4043 = vmatprep.mubr.bf16.mxu0 %v3599
      %4044 = vmatmul.mubr.bf16.gmra.mrb[0].mxu0 %v3598
      %v4045 = vpop.f32.mrb[0].mxu0
      %v4046 = vadd.f32 %v3925, %v4045
      %v4047 = vpop.f32.mrb[0].mxu0
      %v4048 = vadd.f32 %v3927, %v4047
      %v4049 = vpop.f32.mrb[0].mxu0
      %v4050 = vadd.f32 %v3929, %v4049
      %v4051 = vpop.f32.mrb[0].mxu0
      %v4052 = vadd.f32 %v3931, %v4051
      %4053 = vmatprep.mubr.bf16.mxu0 %v3607
      %4054 = vmatmul.mubr.bf16.gmra.mrb[0].mxu0 %v3606
      %v4055 = vpop.f32.mrb[0].mxu0
      %v4056 = vadd.f32 %v3935, %v4055
      %v4057 = vpop.f32.mrb[0].mxu0
      %v4058 = vadd.f32 %v3937, %v4057
      %v4059 = vpop.f32.mrb[0].mxu0
      %v4060 = vadd.f32 %v3939, %v4059
      %v4061 = vpop.f32.mrb[0].mxu0
      %v4062 = vadd.f32 %v3941, %v4061
      %4063 = vmatprep.mubr.bf16.mxu0 %v3615
      %4064 = vmatmul.mubr.bf16.gmra.mrb[0].mxu0 %v3614
      %v4065 = vpop.f32.mrb[0].mxu0
      %v4066 = vadd.f32 %v3945, %v4065
      %v4067 = vpop.f32.mrb[0].mxu0
      %v4068 = vadd.f32 %v3947, %v4067
      %v4069 = vpop.f32.mrb[0].mxu0
      %v4070 = vpop.f32.mrb[0].mxu0
      %4071 = vdwg.mxu0
      %4072 = vmatprep.subr.bf16.mxu0 %v3315
      %4073 = vmatpush1.bf16.msra.mxu0 %v3314
      %4074 = vmatprep.subr.bf16.mxu0 %v3317
      %4075 = vmatpush1.bf16.msra.mxu0 %v3316
      %4076 = vmatprep.subr.bf16.mxu0 %v3319
      %4077 = vmatpush1.bf16.msra.mxu0 %v3318
      %4078 = vmatprep.subr.bf16.mxu0 %v3321
      %4079 = vmatpush1.bf16.msra.mxu0 %v3320
      %4080 = vmatprep.subr.bf16.mxu0 %v3323
      %4081 = vmatpush1.bf16.msra.mxu0 %v3322
      %4082 = vmatprep.subr.bf16.mxu0 %v3325
      %4083 = vmatpush1.bf16.msra.mxu0 %v3324
      %4084 = vmatprep.subr.bf16.mxu0 %v3327
      %4085 = vmatpush1.bf16.msra.mxu0 %v3326
      %4086 = vmatprep.subr.bf16.mxu0 %v3329
      %4087 = vmatpush1.bf16.msra.mxu0 %v3328
      %4088 = vmatprep.subr.bf16.mxu0 %v3331
      %4089 = vmatpush1.bf16.msra.mxu0 %v3330
      %4090 = vmatprep.subr.bf16.mxu0 %v3333
      %4091 = vmatpush1.bf16.msra.mxu0 %v3332
      %4092 = vmatprep.subr.bf16.mxu0 %v3335
      %4093 = vmatpush1.bf16.msra.mxu0 %v3334
      %4094 = vmatprep.subr.bf16.mxu0 %v3337
      %4095 = vmatpush1.bf16.msra.mxu0 %v3336
      %4096 = vmatprep.subr.bf16.mxu0 %v3339
      %4097 = vmatpush1.bf16.msra.mxu0 %v3338
      %4098 = vmatprep.subr.bf16.mxu0 %v3341
      %4099 = vmatpush1.bf16.msra.mxu0 %v3340
      %4100 = vmatprep.subr.bf16.mxu0 0
      %4101 = vmatpush1.bf16.msra.mxu0 0
      %4102 = vmatprep.subr.bf16.mxu0 0
      %4103 = vmatpush1.bf16.msra.mxu0 0
      %4104 = vmatprep.mubr.bf16.mxu0 %v3683
      %4105 = vmatmul.mubr.bf16.gmra.mrb[0].mxu0 %v3552
      %v4106 = vpop.f32.mrb[0].mxu0
      %v4107 = vadd.f32 %v3986, %v4106
      %v4108 = vpop.f32.mrb[0].mxu0
      %v4109 = vadd.f32 %v3988, %v4108
      %v4110 = vpop.f32.mrb[0].mxu0
      %v4111 = vadd.f32 %v3990, %v4110
      %v4112 = vpop.f32.mrb[0].mxu0
      %v4113 = vadd.f32 %v3992, %v4112
      %4114 = vmatprep.mubr.bf16.mxu0 %v3686
      %4115 = vmatmul.mubr.bf16.gmra.mrb[0].mxu0 %v3560
      %v4116 = vpop.f32.mrb[0].mxu0
      %v4117 = vadd.f32 %v3996, %v4116
      %v4118 = vpop.f32.mrb[0].mxu0
      %v4119 = vadd.f32 %v3998, %v4118
      %v4120 = vpop.f32.mrb[0].mxu0
      %v4121 = vadd.f32 %v4000, %v4120
      %v4122 = vpop.f32.mrb[0].mxu0
      %v4123 = vadd.f32 %v4002, %v4122
      %4124 = vmatprep.mubr.bf16.mxu0 %v3689
      %4125 = vmatmul.mubr.bf16.gmra.mrb[0].mxu0 %v3568
      %v4126 = vpop.f32.mrb[0].mxu0
      %v4127 = vadd.f32 %v4006, %v4126
      %v4128 = vpop.f32.mrb[0].mxu0
      %v4129 = vadd.f32 %v4008, %v4128
      %v4130 = vpop.f32.mrb[0].mxu0
      %v4131 = vadd.f32 %v4010, %v4130
      %v4132 = vpop.f32.mrb[0].mxu0
      %v4133 = vadd.f32 %v4012, %v4132
      %4134 = vmatprep.mubr.bf16.mxu0 %v3692
      %4135 = vmatmul.mubr.bf16.gmra.mrb[0].mxu0 %v3576
      %v4136 = vpop.f32.mrb[0].mxu0
      %v4137 = vadd.f32 %v4016, %v4136
      %v4138 = vpop.f32.mrb[0].mxu0
      %v4139 = vadd.f32 %v4018, %v4138
      %v4140 = vpop.f32.mrb[0].mxu0
      %v4141 = vadd.f32 %v4020, %v4140
      %v4142 = vpop.f32.mrb[0].mxu0
      %v4143 = vadd.f32 %v4022, %v4142
      %4144 = vmatprep.mubr.bf16.mxu0 %v3695
      %4145 = vmatmul.mubr.bf16.gmra.mrb[0].mxu0 %v3584
      %v4146 = vpop.f32.mrb[0].mxu0
      %v4147 = vadd.f32 %v4026, %v4146
      %v4148 = vpop.f32.mrb[0].mxu0
      %v4149 = vadd.f32 %v4028, %v4148
      %v4150 = vpop.f32.mrb[0].mxu0
      %v4151 = vadd.f32 %v4030, %v4150
      %v4152 = vpop.f32.mrb[0].mxu0
      %v4153 = vadd.f32 %v4032, %v4152
      %4154 = vmatprep.mubr.bf16.mxu0 %v3698
      %4155 = vmatmul.mubr.bf16.gmra.mrb[0].mxu0 %v3592
      %v4156 = vpop.f32.mrb[0].mxu0
      %v4157 = vadd.f32 %v4036, %v4156
      %v4158 = vpop.f32.mrb[0].mxu0
      %v4159 = vadd.f32 %v4038, %v4158
      %v4160 = vpop.f32.mrb[0].mxu0
      %v4161 = vadd.f32 %v4040, %v4160
      %v4162 = vpop.f32.mrb[0].mxu0
      %v4163 = vadd.f32 %v4042, %v4162
      %4164 = vmatprep.mubr.bf16.mxu0 %v3701
      %4165 = vmatmul.mubr.bf16.gmra.mrb[0].mxu0 %v3600
      %v4166 = vpop.f32.mrb[0].mxu0
      %v4167 = vadd.f32 %v4046, %v4166
      %v4168 = vpop.f32.mrb[0].mxu0
      %v4169 = vadd.f32 %v4048, %v4168
      %v4170 = vpop.f32.mrb[0].mxu0
      %v4171 = vadd.f32 %v4050, %v4170
      %v4172 = vpop.f32.mrb[0].mxu0
      %v4173 = vadd.f32 %v4052, %v4172
      %4174 = vmatprep.mubr.bf16.mxu0 %v3704
      %4175 = vmatmul.mubr.bf16.gmra.mrb[0].mxu0 %v3608
      %v4176 = vpop.f32.mrb[0].mxu0
      %v4177 = vadd.f32 %v4056, %v4176
      %v4178 = vpop.f32.mrb[0].mxu0
      %v4179 = vadd.f32 %v4058, %v4178
      %v4180 = vpop.f32.mrb[0].mxu0
      %v4181 = vadd.f32 %v4060, %v4180
      %v4182 = vpop.f32.mrb[0].mxu0
      %v4183 = vadd.f32 %v4062, %v4182
      %4184 = vmatprep.mubr.bf16.mxu0 %v3707
      %4185 = vmatmul.mubr.bf16.gmra.mrb[0].mxu0 %v3616
      %v4186 = vpop.f32.mrb[0].mxu0
      %v4187 = vadd.f32 %v4066, %v4186
      %v4188 = vpop.f32.mrb[0].mxu0
      %v4189 = vadd.f32 %v4068, %v4188
      %v4190 = vpop.f32.mrb[0].mxu0
      %v4191 = vpop.f32.mrb[0].mxu0
      %4192 = vdwg.mxu0
      %vm4193 = vcmp.gt.f32.partialorder %v4107, 0.0
      %vm4194 = vcmp.gt.f32.partialorder %v4109, 0.0
      %vm4195 = vcmp.gt.f32.partialorder %v4111, 0.0
      %vm4196 = vcmp.gt.f32.partialorder %v4113, 0.0
      %vm4197 = vcmp.gt.f32.partialorder %v4117, 0.0
      %vm4198 = vcmp.gt.f32.partialorder %v4119, 0.0
      %vm4199 = vcmp.gt.f32.partialorder %v4121, 0.0
      %vm4200 = vcmp.gt.f32.partialorder %v4123, 0.0
      %vm4201 = vcmp.gt.f32.partialorder %v4127, 0.0
      %vm4202 = vcmp.gt.f32.partialorder %v4129, 0.0
      %vm4203 = vcmp.gt.f32.partialorder %v4131, 0.0
      %vm4204 = vcmp.gt.f32.partialorder %v4133, 0.0
      %vm4205 = vcmp.gt.f32.partialorder %v4137, 0.0
      %vm4206 = vcmp.gt.f32.partialorder %v4139, 0.0
      %vm4207 = vcmp.gt.f32.partialorder %v4141, 0.0
      %vm4208 = vcmp.gt.f32.partialorder %v4143, 0.0
      %vm4209 = vcmp.gt.f32.partialorder %v4147, 0.0
      %vm4210 = vcmp.gt.f32.partialorder %v4149, 0.0
      %vm4211 = vcmp.gt.f32.partialorder %v4151, 0.0
      %vm4212 = vcmp.gt.f32.partialorder %v4153, 0.0
      %vm4213 = vcmp.gt.f32.partialorder %v4157, 0.0
      %vm4214 = vcmp.gt.f32.partialorder %v4159, 0.0
      %vm4215 = vcmp.gt.f32.partialorder %v4161, 0.0
      %vm4216 = vcmp.gt.f32.partialorder %v4163, 0.0
      %vm4217 = vcmp.gt.f32.partialorder %v4167, 0.0
      %vm4218 = vcmp.gt.f32.partialorder %v4169, 0.0
      %vm4219 = vcmp.gt.f32.partialorder %v4171, 0.0
      %vm4220 = vcmp.gt.f32.partialorder %v4173, 0.0
      %vm4221 = vcmp.gt.f32.partialorder %v4177, 0.0
      %vm4222 = vcmp.gt.f32.partialorder %v4179, 0.0
      %vm4223 = vcmp.gt.f32.partialorder %v4181, 0.0
      %vm4224 = vcmp.gt.f32.partialorder %v4183, 0.0
      %vm4225 = vcmp.gt.f32.partialorder %v4187, 0.0
      %vm4226 = vcmp.gt.f32.partialorder %v4189, 0.0
      %v4227 = vmul.f32 %v4107, -0.010884604
      %v4228 = vmul.f32 %v4109, -0.010884604
      %v4229 = vmul.f32 %v4111, -0.010884604
      %v4230 = vmul.f32 %v4113, -0.010884604
      %v4231 = vmul.f32 %v4117, -0.010884604
      %v4232 = vmul.f32 %v4119, -0.010884604
      %v4233 = vmul.f32 %v4121, -0.010884604
      %v4234 = vmul.f32 %v4123, -0.010884604
      %v4235 = vmul.f32 %v4127, -0.010884604
      %v4236 = vmul.f32 %v4129, -0.010884604
      %v4237 = vmul.f32 %v4131, -0.010884604
      %v4238 = vmul.f32 %v4133, -0.010884604
      %v4239 = vmul.f32 %v4137, -0.010884604
      %v4240 = vmul.f32 %v4139, -0.010884604
      %v4241 = vmul.f32 %v4141, -0.010884604
      %v4242 = vmul.f32 %v4143, -0.010884604
      %v4243 = vmul.f32 %v4147, -0.010884604
      %v4244 = vmul.f32 %v4149, -0.010884604
      %v4245 = vmul.f32 %v4151, -0.010884604
      %v4246 = vmul.f32 %v4153, -0.010884604
      %v4247 = vmul.f32 %v4157, -0.010884604
      %v4248 = vmul.f32 %v4159, -0.010884604
      %v4249 = vmul.f32 %v4161, -0.010884604
      %v4250 = vmul.f32 %v4163, -0.010884604
      %v4251 = vmul.f32 %v4167, -0.010884604
      %v4252 = vmul.f32 %v4169, -0.010884604
      %v4253 = vmul.f32 %v4171, -0.010884604
      %v4254 = vmul.f32 %v4173, -0.010884604
      %v4255 = vmul.f32 %v4177, -0.010884604
      %v4256 = vmul.f32 %v4179, -0.010884604
      %v4257 = vmul.f32 %v4181, -0.010884604
      %v4258 = vmul.f32 %v4183, -0.010884604
      %v4259 = vmul.f32 %v4187, -0.010884604
      %v4260 = vmul.f32 %v4189, -0.010884604
      %v4261 = vsel %vm4193, %v4107, %v4227
      %v4262 = vsel %vm4194, %v4109, %v4228
      %v4263 = vsel %vm4195, %v4111, %v4229
      %v4264 = vsel %vm4196, %v4113, %v4230
      %v4265 = vsel %vm4197, %v4117, %v4231
      %v4266 = vsel %vm4198, %v4119, %v4232
      %v4267 = vsel %vm4199, %v4121, %v4233
      %v4268 = vsel %vm4200, %v4123, %v4234
      %v4269 = vsel %vm4201, %v4127, %v4235
      %v4270 = vsel %vm4202, %v4129, %v4236
      %v4271 = vsel %vm4203, %v4131, %v4237
      %v4272 = vsel %vm4204, %v4133, %v4238
      %v4273 = vsel %vm4205, %v4137, %v4239
      %v4274 = vsel %vm4206, %v4139, %v4240
      %v4275 = vsel %vm4207, %v4141, %v4241
      %v4276 = vsel %vm4208, %v4143, %v4242
      %v4277 = vsel %vm4209, %v4147, %v4243
      %v4278 = vsel %vm4210, %v4149, %v4244
      %v4279 = vsel %vm4211, %v4151, %v4245
      %v4280 = vsel %vm4212, %v4153, %v4246
      %v4281 = vsel %vm4213, %v4157, %v4247
      %v4282 = vsel %vm4214, %v4159, %v4248
      %v4283 = vsel %vm4215, %v4161, %v4249
      %v4284 = vsel %vm4216, %v4163, %v4250
      %v4285 = vsel %vm4217, %v4167, %v4251
      %v4286 = vsel %vm4218, %v4169, %v4252
      %v4287 = vsel %vm4219, %v4171, %v4253
      %v4288 = vsel %vm4220, %v4173, %v4254
      %v4289 = vsel %vm4221, %v4177, %v4255
      %v4290 = vsel %vm4222, %v4179, %v4256
      %v4291 = vsel %vm4223, %v4181, %v4257
      %v4292 = vsel %vm4224, %v4183, %v4258
      %v4293 = vsel %vm4225, %v4187, %v4259
      %v4294 = vsel %vm4226, %v4189, %v4260
      %v4295 = vld [vmem:[%s3] sm:$0xff]
      %v4296 = vld [vmem:[%s3 + $0x8] sm:$0xff]
      %v4297 = vld [vmem:[%s3 + $0x10] sm:$0xff]
      %v4298 = vld [vmem:[%s3 + $0x18] sm:$0xff]
      %v4299 = vld [vmem:[%s3 + $0x20] sm:$0xff]
      %v4300 = vld [vmem:[%s3 + $0x28] sm:$0xff]
      %v4301 = vpack.c.bf16 %v4263, %v4261
      %v4302 = vpack.c.bf16 %v4264, %v4262
      %v4303 = vpack.c.bf16 %v4267, %v4265
      %v4304 = vpack.c.bf16 %v4268, %v4266
      %v4305 = vpack.c.bf16 %v4271, %v4269
      %v4306 = vpack.c.bf16 %v4272, %v4270
      %v4307 = vpack.c.bf16 %v4275, %v4273
      %v4308 = vpack.c.bf16 %v4276, %v4274
      %v4309 = vpack.c.bf16 %v4279, %v4277
      %v4310 = vpack.c.bf16 %v4280, %v4278
      %v4311 = vpack.c.bf16 %v4283, %v4281
      %v4312 = vpack.c.bf16 %v4284, %v4282
      %v4313 = vpack.c.bf16 %v4287, %v4285
      %v4314 = vpack.c.bf16 %v4288, %v4286
      %v4315 = vpack.c.bf16 %v4291, %v4289
      %v4316 = vpack.c.bf16 %v4292, %v4290
      %v4317 = vpack.c.bf16 %v4293, %v4293
      %v4318 = vpack.c.bf16 %v4294, %v4294
      %v4325 = vunpack.c.l.b16 %v4295
      %v4326 = vunpack.c.h.b16 %v4295
      %v4327 = vunpack.c.l.b16 %v4296
      %v4328 = vunpack.c.h.b16 %v4296
      %v4329 = vunpack.c.l.b16 %v4297
      %v4330 = vunpack.c.h.b16 %v4297
      %v4331 = vunpack.c.l.b16 %v4298
      %v4332 = vunpack.c.h.b16 %v4298
      %v4333 = vunpack.c.l.b16 %v4299
      %v4334 = vunpack.c.h.b16 %v4299
      %v4335 = vunpack.c.l.b16 %v4300
      %v4336 = vunpack.c.h.b16 %v4300
      %v4337 = vpack.c.b16 %v4327, %v4325
      %v4338 = vpack.c.b16 %v4328, %v4326
      %v4339 = vpack.c.b16 %v4331, %v4329
      %v4340 = vpack.c.b16 %v4332, %v4330
      %v4341 = vpack.c.b16 %v4335, %v4333
      %v4342 = vpack.c.b16 %v4336, %v4334
      %vm4346 = vcmask 64512
      %v4348 = vsel %vm4346, %v4338, 0
      %v4351 = vsel %vm4346, %v4340, 0
      %v4354 = vsel %vm4346, %v4342, 0
      %vm4356 = vcmask 1043456
      %v4358 = vsel %vm4356, %v4317, 0
      %v4361 = vsel %vm4356, %v4318, 0
      %4363 = vmatprep.subr.bf16.mxu0 %v4302
      %4364 = vmatpush1.bf16.msra.mxu0 %v4301
      %4365 = vmatprep.subr.bf16.mxu0 %v4304
      %4366 = vmatpush1.bf16.msra.mxu0 %v4303
      %4367 = vmatprep.subr.bf16.mxu0 %v4306
      %4368 = vmatpush1.bf16.msra.mxu0 %v4305
      %4369 = vmatprep.subr.bf16.mxu0 %v4308
      %4370 = vmatpush1.bf16.msra.mxu0 %v4307
      %4371 = vmatprep.subr.bf16.mxu0 %v4310
      %4372 = vmatpush1.bf16.msra.mxu0 %v4309
      %4373 = vmatprep.subr.bf16.mxu0 %v4312
      %4374 = vmatpush1.bf16.msra.mxu0 %v4311
      %4375 = vmatprep.subr.bf16.mxu0 %v4314
      %4376 = vmatpush1.bf16.msra.mxu0 %v4313
      %4377 = vmatprep.subr.bf16.mxu0 %v4316
      %4378 = vmatpush1.bf16.msra.mxu0 %v4315
      %4379 = vmatprep.subr.bf16.mxu0 %v4361
      %4380 = vmatpush1.bf16.msra.mxu0 %v4358
      %4381 = vmatprep.subr.bf16.mxu0 0
      %4382 = vmatpush1.bf16.msra.mxu0 0
      %4383 = vmatprep.subr.bf16.mxu0 0
      %4384 = vmatpush1.bf16.msra.mxu0 0
      %4385 = vmatprep.subr.bf16.mxu0 0
      %4386 = vmatpush1.bf16.msra.mxu0 0
      %4387 = vmatprep.subr.bf16.mxu0 0
      %4388 = vmatpush1.bf16.msra.mxu0 0
      %4389 = vmatprep.subr.bf16.mxu0 0
      %4390 = vmatpush1.bf16.msra.mxu0 0
      %4391 = vmatprep.subr.bf16.mxu0 0
      %4392 = vmatpush1.bf16.msra.mxu0 0
      %4393 = vmatprep.subr.bf16.mxu0 0
      %4394 = vmatpush1.bf16.msra.mxu0 0
      %4395 = vmatprep.mubr.bf16.mxu0 %v4348
      %4396 = vmatmul.mubr.bf16.gmra.mrb[0].mxu0 %v4337
      %v4397 = vpop.f32.mrb[0].mxu0
      %v4398 = vadd.f32 0.0, %v4397
      %v4399 = vpop.f32.mrb[0].mxu0
      %v4400 = vadd.f32 0.0, %v4399
      %v4401 = vpop.f32.mrb[0].mxu0
      %v4402 = vadd.f32 0.0, %v4401
      %v4403 = vpop.f32.mrb[0].mxu0
      %v4404 = vadd.f32 0.0, %v4403
      %4405 = vmatprep.mubr.bf16.mxu0 %v4351
      %4406 = vmatmul.mubr.bf16.gmra.mrb[0].mxu0 %v4339
      %v4407 = vpop.f32.mrb[0].mxu0
      %v4408 = vadd.f32 0.0, %v4407
      %v4409 = vpop.f32.mrb[0].mxu0
      %v4410 = vadd.f32 0.0, %v4409
      %v4411 = vpop.f32.mrb[0].mxu0
      %v4412 = vadd.f32 0.0, %v4411
      %v4413 = vpop.f32.mrb[0].mxu0
      %v4414 = vadd.f32 0.0, %v4413
      %4415 = vmatprep.mubr.bf16.mxu0 %v4354
      %4416 = vmatmul.mubr.bf16.gmra.mrb[0].mxu0 %v4341
      %v4417 = vpop.f32.mrb[0].mxu0
      %v4418 = vadd.f32 0.0, %v4417
      %v4419 = vpop.f32.mrb[0].mxu0
      %v4420 = vadd.f32 0.0, %v4419
      %v4421 = vpop.f32.mrb[0].mxu0
      %v4422 = vadd.f32 0.0, %v4421
      %v4423 = vpop.f32.mrb[0].mxu0
      %v4424 = vadd.f32 0.0, %v4423
      %4425 = vdwg.mxu0
      %v4426 = vpack.c.bf16 %v4402, %v4398
      %v4427 = vpack.c.bf16 %v4404, %v4400
      %v4428 = vpack.c.bf16 %v4412, %v4408
      %v4429 = vpack.c.bf16 %v4414, %v4410
      %v4430 = vpack.c.bf16 %v4422, %v4418
      %v4431 = vpack.c.bf16 %v4424, %v4420
      %v4432 = vld [vmem:[%s4] sm:$0xf]
      %v4433 = vld [vmem:[%s4 + $0x4] sm:$0xf]
      %v4434 = vld [vmem:[%s4 + $0x8] sm:$0xf]
      %v4435 = vld [vmem:[%s4 + $0xc] sm:$0xf]
      %v4436 = vld [vmem:[%s4 + $0x10] sm:$0xf]
      %v4437 = vld [vmem:[%s4 + $0x14] sm:$0xf]
      %v4438 = vld [vmem:[%s4 + $0x18] sm:$0xf]
      %v4439 = vld [vmem:[%s4 + $0x1c] sm:$0xf]
      %v4440 = vld [vmem:[%s4 + $0x20] sm:$0xf]
      %v4441 = vld [vmem:[%s4 + $0x24] sm:$0xf]
      %v4442 = vld [vmem:[%s4 + $0x28] sm:$0xf]
      %v4443 = vld [vmem:[%s4 + $0x2c] sm:$0xf]
      %v4444 = vld [vmem:[%s4 + $0x30] sm:$0xf]
      %v4445 = vld [vmem:[%s4 + $0x34] sm:$0xf]
      %v4446 = vld [vmem:[%s4 + $0x38] sm:$0xf]
      %v4447 = vld [vmem:[%s4 + $0x3c] sm:$0xf]
      %v4448 = vld [vmem:[%s4 + $0x40] sm:$0xf]
      %v4449 = vld [vmem:[%s4 + $0x44] sm:$0xf]
      %v4450 = vld [vmem:[%s4 + $0x48] sm:$0xf]
      %v4451 = vld [vmem:[%s4 + $0x4c] sm:$0xf]
      %v4452 = vld [vmem:[%s4 + $0x50] sm:$0xf]
      %v4453 = vld [vmem:[%s4 + $0x54] sm:$0xf]
      %v4454 = vld [vmem:[%s4 + $0x58] sm:$0xf]
      %v4455 = vld [vmem:[%s4 + $0x5c] sm:$0xf]
      %v4456 = vld [vmem:[%s4 + $0x60] sm:$0xf]
      %v4457 = vld [vmem:[%s4 + $0x64] sm:$0xf]
      %v4458 = vld [vmem:[%s4 + $0x68] sm:$0xf]
      %v4459 = vld [vmem:[%s4 + $0x6c] sm:$0xf]
      %v4460 = vld [vmem:[%s4 + $0x70] sm:$0xf]
      %v4461 = vld [vmem:[%s4 + $0x74] sm:$0xf]
      %v4462 = vld [vmem:[%s4 + $0x78] sm:$0xf]
      %v4463 = vld [vmem:[%s4 + $0x7c] sm:$0xf]
      %v4496 = vunpack.c.l.b16 %v4432
      %v4497 = vunpack.c.l.b16 %v4433
      %v4498 = vunpack.c.l.b16 %v4434
      %v4499 = vunpack.c.l.b16 %v4435
      %v4500 = vunpack.c.l.b16 %v4436
      %v4501 = vunpack.c.l.b16 %v4437
      %v4502 = vunpack.c.l.b16 %v4438
      %v4503 = vunpack.c.l.b16 %v4439
      %v4504 = vunpack.c.l.b16 %v4440
      %v4505 = vunpack.c.l.b16 %v4441
      %v4506 = vunpack.c.l.b16 %v4442
      %v4507 = vunpack.c.l.b16 %v4443
      %v4508 = vunpack.c.l.b16 %v4444
      %v4509 = vunpack.c.l.b16 %v4445
      %v4510 = vunpack.c.l.b16 %v4446
      %v4511 = vunpack.c.l.b16 %v4447
      %v4512 = vunpack.c.l.b16 %v4448
      %v4513 = vunpack.c.l.b16 %v4449
      %v4514 = vunpack.c.l.b16 %v4450
      %v4515 = vunpack.c.l.b16 %v4451
      %v4516 = vunpack.c.l.b16 %v4452
      %v4517 = vunpack.c.l.b16 %v4453
      %v4518 = vunpack.c.l.b16 %v4454
      %v4519 = vunpack.c.l.b16 %v4455
      %v4520 = vunpack.c.l.b16 %v4456
      %v4521 = vunpack.c.l.b16 %v4457
      %v4522 = vunpack.c.l.b16 %v4458
      %v4523 = vunpack.c.l.b16 %v4459
      %v4524 = vunpack.c.l.b16 %v4460
      %v4525 = vunpack.c.l.b16 %v4461
      %v4526 = vunpack.c.l.b16 %v4462
      %v4527 = vunpack.c.l.b16 %v4463
      %v4528 = vpack.c.b16 %v4497, %v4496
      %v4529 = vpack.c.b16 %v4499, %v4498
      %v4530 = vpack.c.b16 %v4501, %v4500
      %v4531 = vpack.c.b16 %v4503, %v4502
      %v4532 = vpack.c.b16 %v4505, %v4504
      %v4533 = vpack.c.b16 %v4507, %v4506
      %v4534 = vpack.c.b16 %v4509, %v4508
      %v4535 = vpack.c.b16 %v4511, %v4510
      %v4536 = vpack.c.b16 %v4513, %v4512
      %v4537 = vpack.c.b16 %v4515, %v4514
      %v4538 = vpack.c.b16 %v4517, %v4516
      %v4539 = vpack.c.b16 %v4519, %v4518
      %v4540 = vpack.c.b16 %v4521, %v4520
      %v4541 = vpack.c.b16 %v4523, %v4522
      %v4542 = vpack.c.b16 %v4525, %v4524
      %v4543 = vpack.c.b16 %v4527, %v4526
      %4560 = vmatprep.subr.bf16.mxu0 0
      %4561 = vmatpush1.bf16.msra.mxu0 %v4528
      %4562 = vmatprep.subr.bf16.mxu0 0
      %4563 = vmatpush1.bf16.msra.mxu0 %v4529
      %4564 = vmatprep.subr.bf16.mxu0 0
      %4565 = vmatpush1.bf16.msra.mxu0 %v4530
      %4566 = vmatprep.subr.bf16.mxu0 0
      %4567 = vmatpush1.bf16.msra.mxu0 %v4531
      %4568 = vmatprep.subr.bf16.mxu0 0
      %4569 = vmatpush1.bf16.msra.mxu0 %v4532
      %4570 = vmatprep.subr.bf16.mxu0 0
      %4571 = vmatpush1.bf16.msra.mxu0 %v4533
      %4572 = vmatprep.subr.bf16.mxu0 0
      %4573 = vmatpush1.bf16.msra.mxu0 %v4534
      %4574 = vmatprep.subr.bf16.mxu0 0
      %4575 = vmatpush1.bf16.msra.mxu0 %v4535
      %4576 = vmatprep.subr.bf16.mxu0 0
      %4577 = vmatpush1.bf16.msra.mxu0 %v4536
      %4578 = vmatprep.subr.bf16.mxu0 0
      %4579 = vmatpush1.bf16.msra.mxu0 %v4537
      %4580 = vmatprep.subr.bf16.mxu0 0
      %4581 = vmatpush1.bf16.msra.mxu0 %v4538
      %4582 = vmatprep.subr.bf16.mxu0 0
      %4583 = vmatpush1.bf16.msra.mxu0 %v4539
      %4584 = vmatprep.subr.bf16.mxu0 0
      %4585 = vmatpush1.bf16.msra.mxu0 %v4540
      %4586 = vmatprep.subr.bf16.mxu0 0
      %4587 = vmatpush1.bf16.msra.mxu0 %v4541
      %4588 = vmatprep.subr.bf16.mxu0 0
      %4589 = vmatpush1.bf16.msra.mxu0 %v4542
      %4590 = vmatprep.subr.bf16.mxu0 0
      %4591 = vmatpush1.bf16.msra.mxu0 %v4543
      %4592 = vmatprep.mubr.bf16.mxu0 %v4427
      %4593 = vmatmul.mubr.bf16.gmra.mrb[0].mxu0 %v4426
      %v4594 = vpop.f32.mrb[0].mxu0
      %v4595 = vadd.f32 0.0, %v4594
      %v4596 = vpop.f32.mrb[0].mxu0
      %v4597 = vpop.f32.mrb[0].mxu0
      %v4598 = vadd.f32 0.0, %v4597
      %v4599 = vpop.f32.mrb[0].mxu0
      %4600 = vmatprep.mubr.bf16.mxu0 %v4429
      %4601 = vmatmul.mubr.bf16.gmra.mrb[0].mxu0 %v4428
      %v4602 = vpop.f32.mrb[0].mxu0
      %v4603 = vadd.f32 0.0, %v4602
      %v4604 = vpop.f32.mrb[0].mxu0
      %v4605 = vpop.f32.mrb[0].mxu0
      %v4606 = vadd.f32 0.0, %v4605
      %v4607 = vpop.f32.mrb[0].mxu0
      %4608 = vmatprep.mubr.bf16.mxu0 %v4431
      %4609 = vmatmul.mubr.bf16.gmra.mrb[0].mxu0 %v4430
      %v4610 = vpop.f32.mrb[0].mxu0
      %v4611 = vadd.f32 0.0, %v4610
      %v4612 = vpop.f32.mrb[0].mxu0
      %v4613 = vpop.f32.mrb[0].mxu0
      %v4614 = vadd.f32 0.0, %v4613
      %v4615 = vpop.f32.mrb[0].mxu0
      %4616 = vdwg.mxu0
      %vm4617 = vcmask 392192
      %4618 = vst.msk [vmem:[%s244] sm:$0xff] %vm4617, %v4595
      %4619 = vst.msk [vmem:[%s244 + $0x8] sm:$0xff] %vm4617, %v4598
      %4620 = vst.msk [vmem:[%s244 + $0x10] sm:$0xff] %vm4617, %v4603
      %4621 = vst.msk [vmem:[%s244 + $0x18] sm:$0xff] %vm4617, %v4606
      %4622 = vst.msk [vmem:[%s244 + $0x20] sm:$0xff] %vm4617, %v4611
      %4623 = vst.msk [vmem:[%s244 + $0x28] sm:$0xff] %vm4617, %v4614
      %p4624 = scmp.lt.s32.totalorder %s16, 1
      %s4625 = scalar_select %p4624, %s16, 1
      %s4626 = smul.addr %s4625, 6
      %s4627 = smul.addr %s4626, 8
      %s4628 = scalar_lea.vmem %s5, %s4627
      // Predicated region
      $region41: #{model_forward.1} parent=39 // pred_check
        %p4629 = pneg %p149
      $region42: #{model_forward.1} parent=39 // pred_check_branch
        %4631 = sbr.rel (%p4629) target = $region44
      $region43: #{model_forward.1} parent=39 // pred_region
        _
      $region44: #{model_forward.1} parent=39 // pred_fallthru
        _
    $region40: #{model_forward.1} parent=5 // pred_fallthru
      _
    %p4632 = scmp.le.s32.totalorder 2, %s11
    // Predicated region
    $region45: #{model_forward.1} parent=5 // pred_check
      %p4633 = pneg %p4632
    $region46: #{model_forward.1} parent=5 // pred_check_branch
      %4635 = sbr.rel (%p4633) target = $region48
    $region47: #{model_forward.1} parent=5 // pred_region
      %s4636 = ssub.s32 %s11, 2
      // Predicated region
      $region49: #{model_forward.1} parent=47 // pred_check
        %p4637 = pneg %p155
      $region50: #{model_forward.1} parent=47 // pred_check_branch
        %4639 = sbr.rel (%p4637) target = $region52
      $region51: #{model_forward.1} parent=47 // pred_region
        %p4640 = scmp.lt.s32.totalorder %s17, 1
        %s4641 = scalar_select %p4640, %s17, 1
        %s4642 = smul.addr %s4641, 6
        %s4643 = smul.addr %s4642, 8
        %s4644 = scalar_lea.vmem %s5, %s4643
      $region52: #{model_forward.1} parent=47 // pred_fallthru
        _
    $region48: #{model_forward.1} parent=5 // pred_fallthru
      _
  $region6: #{model_forward.1} parent=0 // loop_footer
    %s15 = sadd.s32 1, %s11
  $region7: #{model_forward.1} parent=0 // loop_footer_branch
    %10 = sbr.rel target = $region3
  $region8: #{model_forward.1} parent=0 // loop_exit
    _

</llo_original>
